<compile_context>
chip_gen: v7x
topology: tpu7x:2x2x1
jax: 0.10.0
libtpu: 0.0.40
codegen_flags: <defaults>
</compile_context>

<pallas_src>
import functools
import math

import jax
import jax.numpy as jnp
import numpy as np
from jax import lax
from jax.experimental import pallas as pl
from jax.experimental.pallas import tpu as pltpu

LN_EPS = 1e-4
MASK_VALUE = -1e4
VMEM_LIMIT = 32 * 1024 * 1024


# ---------------- fused rel-pos multi-head attention + conv_o + LayerNorm1 kernel ----------------

def _attn_ln_kernel(x_ref, kmask_ref, rowm_ref, wqkv_ref, bqkv_ref, wo_ref, bo_ref,
                    ek_ref, ev_ref, g1_ref, b1_ref, o_ref, acc_ref,
                    *, num_heads, k_channels, w_eff):
    h = pl.program_id(1)
    T = x_ref.shape[1]
    d = k_channels
    n_rel = 2 * w_eff + 1
    scale = 1.0 / math.sqrt(d)

    @pl.when(h == 0)
    def _():
        acc_ref[...] = jnp.zeros(acc_ref.shape, acc_ref.dtype)

    row_m = rowm_ref[0]                                   # [T, 1] 0/1 float (query-row mask)
    xm = x_ref[0] * row_m                                 # masked input (matches x * x_mask)

    # fused per-head QKV projection (bf16 MXU, f32 accumulate)
    qkv = jnp.dot(xm.astype(jnp.bfloat16), wqkv_ref[0],
                  preferred_element_type=jnp.float32) + bqkv_ref[0]      # [T, 3d] f32
    q = (qkv[:, :d] * scale).astype(jnp.bfloat16)
    k = qkv[:, d:2 * d].astype(jnp.bfloat16)
    v = qkv[:, 2 * d:].astype(jnp.bfloat16)

    # scores and relative-key logits from a single MXU matmul: q @ [K ; Ek]^T
    kk = jnp.concatenate([k, ek_ref[...]], axis=0)                       # [T+n_rel, d] bf16
    logits = lax.dot_general(q, kk, (((1,), (1,)), ((), ())),
                             preferred_element_type=jnp.float32)         # [T, T+n_rel] f32
    scores = logits[:, :T]
    qe = logits[:, T:]                                                   # [T, n_rel]

    # scatter the banded relative logits onto diagonals (diff hoisted, one pass per offset).
    # TODO(synk): replace with a strided pltpu.roll skew (O(1) layout op) once validated.
    row_i = lax.broadcasted_iota(jnp.int32, (T, T), 0)
    col_j = lax.broadcasted_iota(jnp.int32, (T, T), 1)
    diff = col_j - row_i
    for c in range(n_rel):
        scores = scores + jnp.where(diff == (c - w_eff), qe[:, c:c + 1], 0.0)

    # key mask + softmax (all f32; exact reciprocal)
    kmask = kmask_ref[0]                                                 # [1, T]
    scores = jnp.where(kmask == 0.0, MASK_VALUE, scores)
    s_max = jnp.max(scores, axis=-1, keepdims=True)
    e = jnp.exp(scores - s_max)
    p = e * pl.reciprocal(jnp.sum(e, axis=-1, keepdims=True))

    # gather attention diagonals -> [T, n_rel] relative weights
    p_rel = jnp.concatenate(
        [jnp.sum(jnp.where(diff == (c - w_eff), p, 0.0), axis=-1, keepdims=True)
         for c in range(n_rel)], axis=-1)

    # p @ V and the relative-value term in one MXU matmul: [P | Prel] @ [V ; Ev]
    pp = jnp.concatenate([p.astype(jnp.bfloat16), p_rel.astype(jnp.bfloat16)], axis=-1)
    vv = jnp.concatenate([v, ev_ref[...]], axis=0)                       # [T+n_rel, d] bf16
    out_h = jnp.dot(pp, vv, preferred_element_type=jnp.float32)          # [T, d] f32

    # accumulate this head's slice of the output projection (conv_o)
    acc_ref[...] += jnp.dot(out_h.astype(jnp.bfloat16), wo_ref[0],
                            preferred_element_type=jnp.float32)

    # last head: finish conv_o bias, fuse residual + LayerNorm1 + x*mask epilogue
    @pl.when(h == num_heads - 1)
    def _():
        y = acc_ref[...] + bo_ref[...]
        s = xm + y                                                       # residual (C == hidden)
        mean = jnp.mean(s, axis=-1, keepdims=True)
        var = jnp.mean((s - mean) ** 2, axis=-1, keepdims=True)
        o = (s - mean) * lax.rsqrt(var + LN_EPS) * g1_ref[...] + b1_ref[...]
        o_ref[0] = (o * row_m).astype(o_ref.dtype)


def attn_ln_block(x, kmask, rowm, wqkv_h, bqkv_h, wo_h, bo, ek, ev, g1, b1,
                  *, num_heads, k_channels, w_eff):
    """x: [B,T,C] f32, kmask: [B,1,T], rowm: [B,T,1], wqkv_h: [H,C,3d] bf16, wo_h: [H,d,hidden] bf16."""
    B, T, C = x.shape
    hidden = wo_h.shape[-1]
    d = k_channels
    n_rel = 2 * w_eff + 1
    kernel = functools.partial(_attn_ln_kernel, num_heads=num_heads,
                               k_channels=d, w_eff=w_eff)
    return pl.pallas_call(
        kernel,
        out_shape=jax.ShapeDtypeStruct((B, T, hidden), x.dtype),
        grid=(B, num_heads),
        in_specs=[
            pl.BlockSpec((1, T, C), lambda b, h: (b, 0, 0)),       # x (re-used across heads)
            pl.BlockSpec((1, 1, T), lambda b, h: (b, 0, 0)),       # key mask
            pl.BlockSpec((1, T, 1), lambda b, h: (b, 0, 0)),       # row mask
            pl.BlockSpec((1, C, 3 * d), lambda b, h: (h, 0, 0)),   # per-head QKV weights
            pl.BlockSpec((1, 1, 3 * d), lambda b, h: (h, 0, 0)),   # per-head QKV bias
            pl.BlockSpec((1, d, hidden), lambda b, h: (h, 0, 0)),  # per-head conv_o weights
            pl.BlockSpec((1, hidden), lambda b, h: (0, 0)),        # conv_o bias
            pl.BlockSpec((n_rel, d), lambda b, h: (0, 0)),         # Ek
            pl.BlockSpec((n_rel, d), lambda b, h: (0, 0)),         # Ev
            pl.BlockSpec((1, hidden), lambda b, h: (0, 0)),        # LN1 gamma
            pl.BlockSpec((1, hidden), lambda b, h: (0, 0)),        # LN1 beta
        ],
        out_specs=pl.BlockSpec((1, T, hidden), lambda b, h: (b, 0, 0)),
        scratch_shapes=[pltpu.VMEM((T, hidden), jnp.float32)],
        compiler_params=pltpu.CompilerParams(
            dimension_semantics=("parallel", "arbitrary"),
            vmem_limit_bytes=VMEM_LIMIT),
    )(x, kmask, rowm, wqkv_h, bqkv_h, wo_h, bo, ek, ev, g1, b1)


# -------------- fused FFN (conv1+ReLU+mask+conv2+mask) + optional proj + LayerNorm2 --------------

def _ffn_ln_kernel(x_ref, rowm_ref, w1_ref, b1_ref, w2_ref, b2_ref,
                   g2_ref, bln_ref, *rest, kernel_size, has_proj):
    if has_proj:
        wp_ref, bp_ref, o_ref = rest
    else:
        (o_ref,) = rest
    T = x_ref.shape[1]
    K = kernel_size
    pad_l = (K - 1) // 2
    row_m = rowm_ref[0]                                  # [T, 1]
    x = x_ref[0] * row_m                                 # x * x_mask before conv_1

    def taps(a_bf16):
        """In-VMEM 'same'-padded im2col: concat of K time-shifted copies along channels."""
        if K == 1:
            return a_bf16
        C = a_bf16.shape[-1]
        cols = []
        for kk in range(K):
            off = kk - pad_l
            if off == 0:
                cols.append(a_bf16)
            elif off > 0:
                cols.append(jnp.concatenate(
                    [a_bf16[off:, :], jnp.zeros((off, C), jnp.bfloat16)], axis=0))
            else:
                cols.append(jnp.concatenate(
                    [jnp.zeros((-off, C), jnp.bfloat16), a_bf16[:T + off, :]], axis=0))
        return jnp.concatenate(cols, axis=-1)

    xk = taps(x.astype(jnp.bfloat16))                                        # [T, K*C]
    h1 = jnp.dot(xk, w1_ref[...], preferred_element_type=jnp.float32) + b1_ref[...]
    h1 = jnp.maximum(h1, 0.0) * row_m                    # ReLU, then x * x_mask before conv_2
    h1k = taps(h1.astype(jnp.bfloat16))                                      # [T, K*F]
    y = jnp.dot(h1k, w2_ref[...], preferred_element_type=jnp.float32) + b2_ref[...]
    y = y * row_m                                        # FFN output mask

    if has_proj:                                         # final-layer 1x1 proj on the residual path
        xr = jnp.dot(x.astype(jnp.bfloat16), wp_ref[...],
                     preferred_element_type=jnp.float32) + bp_ref[...]
    else:
        xr = x

    s = xr + y                                           # residual + LayerNorm2 (f32 stats) + mask
    mean = jnp.mean(s, axis=-1, keepdims=True)
    var = jnp.mean((s - mean) ** 2, axis=-1, keepdims=True)
    o = (s - mean) * lax.rsqrt(var + LN_EPS) * g2_ref[...] + bln_ref[...]
    o_ref[0] = (o * row_m).astype(o_ref.dtype)


def ffn_ln_block(x, rowm, w1, b1, w2, b2, g2, bln, wp=None, bp=None, *, kernel_size):
    """x: [B,T,C] f32 (already masked), w1: [K*C,F] bf16, w2: [K*F,Co] bf16, wp: [C,Co] bf16."""
    B, T, C = x.shape
    F = w1.shape[1]
    Co = w2.shape[1]
    has_proj = wp is not None
    kernel = functools.partial(_ffn_ln_kernel, kernel_size=kernel_size, has_proj=has_proj)
    in_specs = [
        pl.BlockSpec((1, T, C), lambda b: (b, 0, 0)),
        pl.BlockSpec((1, T, 1), lambda b: (b, 0, 0)),
        pl.BlockSpec((kernel_size * C, F), lambda b: (0, 0)),
        pl.BlockSpec((1, F), lambda b: (0, 0)),
        pl.BlockSpec((kernel_size * F, Co), lambda b: (0, 0)),
        pl.BlockSpec((1, Co), lambda b: (0, 0)),
        pl.BlockSpec((1, Co), lambda b: (0, 0)),
        pl.BlockSpec((1, Co), lambda b: (0, 0)),
    ]
    args = [x, rowm, w1, b1.reshape(1, F), w2, b2.reshape(1, Co),
            g2.reshape(1, Co), bln.reshape(1, Co)]
    if has_proj:
        in_specs += [pl.BlockSpec((C, Co), lambda b: (0, 0)),
                     pl.BlockSpec((1, Co), lambda b: (0, 0))]
        args += [wp, bp.reshape(1, Co)]
    return pl.pallas_call(
        kernel,
        out_shape=jax.ShapeDtypeStruct((B, T, Co), x.dtype),
        grid=(B,),
        in_specs=in_specs,
        out_specs=pl.BlockSpec((1, T, Co), lambda b: (b, 0, 0)),
        compiler_params=pltpu.CompilerParams(
            dimension_semantics=("parallel",),
            vmem_limit_bytes=VMEM_LIMIT),
    )(*args)


# --------------------------------- Pallas forward pass ---------------------------------

def rel_pos_transformer_forward(x_bct, x_mask_b1t, params, cfg):
    """x: [B, C_in, T], x_mask: [B, 1, T]  ->  [B, C_out, T]  (PyTorch convention)."""
    B, _, T = x_bct.shape
    H, L, K = cfg["num_heads"], cfg["num_layers"], cfg["kernel_size"]
    win = cfg["rel_attn_window_size"]
    assert win is not None
    assert cfg["in_channels"] == cfg["hidden_channels"]   # required by the residual in the module
    w_eff = min(win, T - 1)                               # only +-w_eff offsets carry nonzero emb.

    x = jnp.transpose(x_bct, (0, 2, 1)).astype(jnp.float32)           # [B, T, C]
    rowm = jnp.transpose(x_mask_b1t, (0, 2, 1)).astype(jnp.float32)   # [B, T, 1]
    kmask = x_mask_b1t.astype(jnp.float32)                            # [B, 1, T]

    for i in range(L):
        lp = params["layers"][i]
        C = x.shape[-1]
        d = C // H
        hidden = lp["wo"].shape[1]

        def per_head(w):                                  # [C, H*d] -> [H, C, d]
            return jnp.transpose(w.reshape(C, H, d), (1, 0, 2))

        wqkv_h = jnp.concatenate([per_head(lp["wq"]), per_head(lp["wk"]),
                                  per_head(lp["wv"])], axis=-1).astype(jnp.bfloat16)
        bqkv_h = jnp.concatenate([lp["bq"].reshape(H, 1, d), lp["bk"].reshape(H, 1, d),
                                  lp["bv"].reshape(H, 1, d)], axis=-1)
        wo_h = lp["wo"].reshape(H, d, hidden).astype(jnp.bfloat16)
        ek = lp["emb_rel_k"][0, win - w_eff: win + w_eff + 1, :].astype(jnp.bfloat16)
        ev = lp["emb_rel_v"][0, win - w_eff: win + w_eff + 1, :].astype(jnp.bfloat16)

        # attention + conv_o + residual + LayerNorm1 + mask (one kernel)
        x = attn_ln_block(x, kmask, rowm, wqkv_h, bqkv_h, wo_h,
                          lp["bo"].reshape(1, hidden), ek, ev,
                          lp["g1"].reshape(1, hidden), lp["b1"].reshape(1, hidden),
                          num_heads=H, k_channels=d, w_eff=w_eff)

        # FFN (+ optional final proj) + residual + LayerNorm2 + mask (one kernel)
        ffn = lp["w_ffn1"].shape[2]
        ffn_out = lp["w_ffn2"].shape[2]
        w1 = lp["w_ffn1"].reshape(K * hidden, ffn).astype(jnp.bfloat16)
        w2 = lp["w_ffn2"].reshape(K * ffn, ffn_out).astype(jnp.bfloat16)
        if i + 1 == L and "proj" in params:
            wp = params["proj"]["w"].astype(jnp.bfloat16)
            bp = params["proj"]["b"]
        else:
            wp = bp = None
        x = ffn_ln_block(x, rowm, w1, lp["b_ffn1"], w2, lp["b_ffn2"],
                         lp["g2"], lp["b2"], wp, bp, kernel_size=K)

    return jnp.transpose(x, (0, 2, 1))                                # [B, C_out, T]


# ------------------------------- pure-JAX reference (torch math, f32) -------------------------------

_HI = lax.Precision.HIGHEST


def _layer_norm_ref(x, g, b, eps=LN_EPS):
    mean = jnp.mean(x, axis=-1, keepdims=True)
    var = jnp.mean((x - mean) ** 2, axis=-1, keepdims=True)
    return (x - mean) * lax.rsqrt(var + eps) * g + b


def _conv1x1_ref(x, w, b, relu=False):
    y = jnp.einsum("btc,cd->btd", x, w, precision=_HI) + b
    return jnp.maximum(y, 0.0) if relu else y


def _conv1d_ref(x, w_kio, b, K, relu=False):
    pad_l, pad_r = (K - 1) // 2, K // 2
    xp = jnp.pad(x, ((0, 0), (pad_l, pad_r), (0, 0)))
    T = x.shape[1]
    y = sum(jnp.einsum("btc,cd->btd", xp[:, kk:kk + T], w_kio[kk], precision=_HI)
            for kk in range(K)) + b
    return jnp.maximum(y, 0.0) if relu else y


def _get_relative_embeddings(emb, length, window):
    pad_length = max(length - (window + 1), 0)
    slice_start = max(window + 1 - length, 0)
    slice_end = slice_start + 2 * length - 1
    if pad_length > 0:
        emb = jnp.pad(emb, ((0, 0), (pad_length, pad_length), (0, 0)))
    return emb[:, slice_start:slice_end]


def _abs_position_embeddings(emb, length, window):
    used = _get_relative_embeddings(emb, length, window)[0]       # [2T-1, d]
    i = jnp.arange(length)
    rel_idx = (length - 1) + i[None, :] - i[:, None]
    return used[rel_idx]                                          # [T, T, d]


def _attention_ref(q4, k4, v4, mask_btt, ek_abs, evt_abs, k_channels):
    scale = 1.0 / math.sqrt(k_channels)
    scores = jnp.einsum("bhtd,bhsd->bhts", q4, k4, precision=_HI) * scale
    scores = scores + jnp.einsum("bhtd,tsd->bhts", q4, ek_abs, precision=_HI) * scale
    scores = jnp.where(mask_btt[:, None] == 0.0, MASK_VALUE, scores)
    p = jax.nn.softmax(scores, axis=-1)
    out = jnp.einsum("bhts,bhsd->bhtd", p, v4, precision=_HI)
    out = out + jnp.einsum("bhts,tds->bhtd", p, evt_abs, precision=_HI)
    return out


def rel_pos_transformer_ref(x_bct, x_mask_b1t, params, cfg):
    B, _, T = x_bct.shape
    H, L = cfg["num_heads"], cfg["num_layers"]
    K, win = cfg["kernel_size"], cfg["rel_attn_window_size"]
    x = jnp.transpose(x_bct, (0, 2, 1))
    mask = jnp.transpose(x_mask_b1t, (0, 2, 1))
    attn_mask = x_mask_b1t[:, 0, :, None] * x_mask_b1t[:, 0, None, :]
    for i in range(L):
        lp = params["layers"][i]
        C = x.shape[-1]
        d = C // H
        xm = x * mask
        q = _conv1x1_ref(xm, lp["wq"], lp["bq"])
        k = _conv1x1_ref(xm, lp["wk"], lp["bk"])
        v = _conv1x1_ref(xm, lp["wv"], lp["bv"])
        q4 = q.reshape(B, T, H, d).transpose(0, 2, 1, 3)
        k4 = k.reshape(B, T, H, d).transpose(0, 2, 1, 3)
        v4 = v.reshape(B, T, H, d).transpose(0, 2, 1, 3)
        ek_abs = _abs_position_embeddings(lp["emb_rel_k"], T, win)
        evt_abs = jnp.transpose(_abs_position_embeddings(lp["emb_rel_v"], T, win), (0, 2, 1))
        o4 = _attention_ref(q4, k4, v4, attn_mask, ek_abs, evt_abs, d)
        o = o4.transpose(0, 2, 1, 3).reshape(B, T, C)
        y = _conv1x1_ref(o, lp["wo"], lp["bo"])
        x = _layer_norm_ref(xm + y, lp["g1"], lp["b1"])
        h1 = _conv1d_ref(x * mask, lp["w_ffn1"], lp["b_ffn1"], K, True)
        h2 = _conv1d_ref(h1 * mask, lp["w_ffn2"], lp["b_ffn2"], K, False)
        y = h2 * mask
        if i + 1 == L and "proj" in params:
            x = _conv1x1_ref(x, params["proj"]["w"], params["proj"]["b"])
        x = _layer_norm_ref(x + y, lp["g2"], lp["b2"])
    x = x * mask
    return jnp.transpose(x, (0, 2, 1))


# ------------------------------------ parameter init ------------------------------------

def init_params(key, cfg):
    H, L, K = cfg["num_heads"], cfg["num_layers"], cfg["kernel_size"]
    win = cfg["rel_attn_window_size"]
    in_ch, hid = cfg["in_channels"], cfg["hidden_channels"]
    ffn, out_ch = cfg["hidden_channels_ffn"], cfg["out_channels"]
    keys = iter(jax.random.split(key, L * 16 + 4))

    def rnd(shape, scale):
        return jax.random.normal(next(keys), shape, jnp.float32) * scale

    layers = []
    for i in range(L):
        C = in_ch if i == 0 else hid
        d = C // H
        ffn_out = hid if i + 1 != L else out_ch
        layers.append(dict(
            wq=rnd((C, C), C ** -0.5), bq=rnd((C,), 0.02),
            wk=rnd((C, C), C ** -0.5), bk=rnd((C,), 0.02),
            wv=rnd((C, C), C ** -0.5), bv=rnd((C,), 0.02),
            wo=rnd((C, hid), C ** -0.5), bo=rnd((hid,), 0.02),
            emb_rel_k=rnd((1, 2 * win + 1, d), d ** -0.5),   # heads_share=True
            emb_rel_v=rnd((1, 2 * win + 1, d), d ** -0.5),
            g1=jnp.ones((hid,), jnp.float32), b1=jnp.zeros((hid,), jnp.float32),
            w_ffn1=rnd((K, hid, ffn), (hid * K) ** -0.5), b_ffn1=rnd((ffn,), 0.02),
            w_ffn2=rnd((K, ffn, ffn_out), (ffn * K) ** -0.5), b_ffn2=rnd((ffn_out,), 0.02),
            g2=jnp.ones((ffn_out,), jnp.float32), b2=jnp.zeros((ffn_out,), jnp.float32),
        ))
    params = {"layers": layers}
    if hid != out_ch:
        params["proj"] = dict(w=rnd((hid, out_ch), hid ** -0.5),
                              b=jnp.zeros((out_ch,), jnp.float32))
    return params


# ------------------------------------------ main ------------------------------------------

if __name__ == "__main__":
    cfg = dict(in_channels=8, out_channels=16, hidden_channels=8,
               hidden_channels_ffn=16, num_heads=2, num_layers=2,
               kernel_size=3, rel_attn_window_size=4)
    B, T = 2, 16

    root = jax.random.PRNGKey(0)
    k_param, k_x = jax.random.split(root)
    params = init_params(k_param, cfg)

    x = jax.random.normal(k_x, (B, cfg["in_channels"], T), jnp.float32)            # [B, C, T]
    lengths = jnp.array([16, 11])
    x_mask = (jnp.arange(T)[None, :] < lengths[:, None]).astype(jnp.float32)[:, None, :]  # [B,1,T]

    fwd = jax.jit(lambda xx, mm, pp: rel_pos_transformer_forward(xx, mm, pp, cfg))
    out = jax.block_until_ready(fwd(x, x_mask, params))

    ref = rel_pos_transformer_ref(x, x_mask, params, cfg)
    # tolerance accounts for the deliberate bf16 MXU inputs in the kernels vs the f32 reference
    np.testing.assert_allclose(np.asarray(out), np.asarray(ref), rtol=5e-2, atol=5e-2)
    assert out.shape == (B, cfg["out_channels"], T)
    print("KERNEL_OK")
</pallas_src>

<mosaic_0001>
module attributes {stable_mosaic.version = 11 : i64} {
  func.func @_attn_ln_kernel(%arg0: i32, %arg1: i32, %arg2: memref<1x16x8xf32, #tpu.memory_space<vmem>>, %arg3: memref<1x1x16xf32, #tpu.memory_space<vmem>>, %arg4: memref<1x16x1xf32, #tpu.memory_space<vmem>>, %arg5: memref<1x8x12xbf16, #tpu.memory_space<vmem>>, %arg6: memref<1x1x12xf32, #tpu.memory_space<vmem>>, %arg7: memref<1x4x8xbf16, #tpu.memory_space<vmem>>, %arg8: memref<1x8xf32, #tpu.memory_space<vmem>>, %arg9: memref<9x4xbf16, #tpu.memory_space<vmem>>, %arg10: memref<9x4xbf16, #tpu.memory_space<vmem>>, %arg11: memref<1x8xf32, #tpu.memory_space<vmem>>, %arg12: memref<1x8xf32, #tpu.memory_space<vmem>>, %arg13: memref<1x16x8xf32, #tpu.memory_space<vmem>>, %arg14: memref<16x8xf32, #tpu.memory_space<vmem>>) attributes {dimension_semantics = [#tpu.dimension_semantics<parallel>, #tpu.dimension_semantics<arbitrary>], iteration_bounds = array<i64: 2, 2>, scalar_prefetch = 0 : i64, scratch_operands = 1 : i64, tpu.core_type = #tpu.core_type<tc>, window_params = [{transform_indices = @transform_0, window_bounds = array<i64: 1, 16, 8>}, {transform_indices = @transform_1, window_bounds = array<i64: 1, 1, 16>}, {transform_indices = @transform_2, window_bounds = array<i64: 1, 16, 1>}, {transform_indices = @transform_3, window_bounds = array<i64: 1, 8, 12>}, {transform_indices = @transform_4, window_bounds = array<i64: 1, 1, 12>}, {transform_indices = @transform_5, window_bounds = array<i64: 1, 4, 8>}, {pipeline_mode = #tpu.pipeline_mode<synchronous>, transform_indices = @transform_6, window_bounds = array<i64: 1, 8>}, {pipeline_mode = #tpu.pipeline_mode<synchronous>, transform_indices = @transform_7, window_bounds = array<i64: 9, 4>}, {pipeline_mode = #tpu.pipeline_mode<synchronous>, transform_indices = @transform_8, window_bounds = array<i64: 9, 4>}, {pipeline_mode = #tpu.pipeline_mode<synchronous>, transform_indices = @transform_9, window_bounds = array<i64: 1, 8>}, {pipeline_mode = #tpu.pipeline_mode<synchronous>, transform_indices = @transform_10, window_bounds = array<i64: 1, 8>}, {transform_indices = @transform_11, window_bounds = array<i64: 1, 16, 8>}]} {
    %c0_i32 = arith.constant 0 : i32
    %0 = arith.cmpi eq, %arg1, %c0_i32 : i32
    %1 = arith.extui %0 : i1 to i32
    %c0_i32_0 = arith.constant 0 : i32
    %2 = arith.cmpi ne, %1, %c0_i32_0 : i32
    scf.if %2 {
      %cst_73 = arith.constant 0.000000e+00 : f32
      %194 = vector.broadcast %cst_73 : f32 to vector<16x8xf32>
      %c0_74 = arith.constant 0 : index
      %c0_75 = arith.constant 0 : index
      %195 = vector.load %arg14[%c0_74, %c0_75] : memref<16x8xf32, #tpu.memory_space<vmem>>, vector<16x8xf32>
      tpu.vector_store %arg14[%c0_74, %c0_75], %194 {strides = array<i32>} : memref<16x8xf32, #tpu.memory_space<vmem>>, vector<16x8xf32>,
    } else {
    }
    %c0 = arith.constant 0 : index
    %c0_1 = arith.constant 0 : index
    %c0_2 = arith.constant 0 : index
    %3 = vector.load %arg4[%c0, %c0_1, %c0_2] : memref<1x16x1xf32, #tpu.memory_space<vmem>>, vector<1x16x1xf32>
    %4 = vector.shape_cast %3 : vector<1x16x1xf32> to vector<16x1xf32>
    %c0_3 = arith.constant 0 : index
    %c0_4 = arith.constant 0 : index
    %c0_5 = arith.constant 0 : index
    %5 = vector.load %arg2[%c0_3, %c0_4, %c0_5] : memref<1x16x8xf32, #tpu.memory_space<vmem>>, vector<1x16x8xf32>
    %6 = vector.shape_cast %5 : vector<1x16x8xf32> to vector<16x8xf32>
    %7 = vector.broadcast %4 : vector<16x1xf32> to vector<16x8xf32>
    %8 = arith.mulf %6, %7 : vector<16x8xf32>
    %9 = arith.truncf %8 : vector<16x8xf32> to vector<16x8xbf16>
    %c0_6 = arith.constant 0 : index
    %c0_7 = arith.constant 0 : index
    %c0_8 = arith.constant 0 : index
    %10 = vector.load %arg5[%c0_6, %c0_7, %c0_8] : memref<1x8x12xbf16, #tpu.memory_space<vmem>>, vector<1x8x12xbf16>
    %11 = vector.shape_cast %10 : vector<1x8x12xbf16> to vector<8x12xbf16>
    %cst = arith.constant dense<0.000000e+00> : vector<16x12xf32>
    %12 = tpu.matmul %9, %11, %cst {dimension_numbers = #tpu.dot_dimension_numbers<[1], [0], [0], [1], [0, 0, 1, 1], [], []>} : vector<16x8xbf16>, vector<8x12xbf16>, vector<16x12xf32> -> vector<16x12xf32>
    %c0_9 = arith.constant 0 : index
    %c0_10 = arith.constant 0 : index
    %c0_11 = arith.constant 0 : index
    %13 = vector.load %arg6[%c0_9, %c0_10, %c0_11] : memref<1x1x12xf32, #tpu.memory_space<vmem>>, vector<1x1x12xf32>
    %14 = vector.shape_cast %13 : vector<1x1x12xf32> to vector<1x12xf32>
    %15 = vector.broadcast %14 : vector<1x12xf32> to vector<16x12xf32>
    %16 = arith.addf %12, %15 : vector<16x12xf32>
    %17 = vector.extract_strided_slice %16 {offsets = [0, 0], sizes = [16, 4], strides = [1, 1]} : vector<16x12xf32> to vector<16x4xf32>
    %cst_12 = arith.constant 5.000000e-01 : f32
    %18 = vector.broadcast %cst_12 : f32 to vector<16x4xf32>
    %19 = arith.mulf %17, %18 : vector<16x4xf32>
    %20 = arith.truncf %19 : vector<16x4xf32> to vector<16x4xbf16>
    %21 = vector.extract_strided_slice %16 {offsets = [0, 4], sizes = [16, 4], strides = [1, 1]} : vector<16x12xf32> to vector<16x4xf32>
    %22 = arith.truncf %21 : vector<16x4xf32> to vector<16x4xbf16>
    %23 = vector.extract_strided_slice %16 {offsets = [0, 8], sizes = [16, 4], strides = [1, 1]} : vector<16x12xf32> to vector<16x4xf32>
    %24 = arith.truncf %23 : vector<16x4xf32> to vector<16x4xbf16>
    %c0_13 = arith.constant 0 : index
    %c0_14 = arith.constant 0 : index
    %25 = vector.load %arg9[%c0_13, %c0_14] : memref<9x4xbf16, #tpu.memory_space<vmem>>, vector<9x4xbf16>
    %26 = tpu.concatenate %22, %25 in 0 : vector<16x4xbf16>, vector<9x4xbf16> -> vector<25x4xbf16>
    %cst_15 = arith.constant dense<0.000000e+00> : vector<16x25xf32>
    %27 = tpu.matmul %20, %26, %cst_15 {dimension_numbers = #tpu.dot_dimension_numbers<[1], [1], [0], [0], [0, 0, 1, 0], [], []>} : vector<16x4xbf16>, vector<25x4xbf16>, vector<16x25xf32> -> vector<16x25xf32>
    %28 = vector.extract_strided_slice %27 {offsets = [0, 0], sizes = [16, 16], strides = [1, 1]} : vector<16x25xf32> to vector<16x16xf32>
    %29 = vector.extract_strided_slice %27 {offsets = [0, 16], sizes = [16, 9], strides = [1, 1]} : vector<16x25xf32> to vector<16x9xf32>
    %30 = tpu.iota {dimensions = array<i32: 0>} : vector<16x16xi32>
    %31 = tpu.iota {dimensions = array<i32: 1>} : vector<16x16xi32>
    %32 = arith.subi %31, %30 : vector<16x16xi32>
    %c-4_i32 = arith.constant -4 : i32
    %33 = vector.broadcast %c-4_i32 : i32 to vector<16x16xi32>
    %34 = arith.cmpi eq, %32, %33 : vector<16x16xi32>
    %35 = vector.extract_strided_slice %29 {offsets = [0, 0], sizes = [16, 1], strides = [1, 1]} : vector<16x9xf32> to vector<16x1xf32>
    %cst_16 = arith.constant 0.000000e+00 : f32
    %36 = vector.shape_cast %35 : vector<16x1xf32> to vector<16x1xf32>
    %37 = vector.broadcast %36 : vector<16x1xf32> to vector<16x16xf32>
    %38 = vector.broadcast %cst_16 : f32 to vector<16x16xf32>
    %39 = arith.select %34, %37, %38 : vector<16x16xi1>, vector<16x16xf32>
    %40 = arith.addf %28, %39 : vector<16x16xf32>
    %c-3_i32 = arith.constant -3 : i32
    %41 = vector.broadcast %c-3_i32 : i32 to vector<16x16xi32>
    %42 = arith.cmpi eq, %32, %41 : vector<16x16xi32>
    %43 = vector.extract_strided_slice %29 {offsets = [0, 1], sizes = [16, 1], strides = [1, 1]} : vector<16x9xf32> to vector<16x1xf32>
    %cst_17 = arith.constant 0.000000e+00 : f32
    %44 = vector.shape_cast %43 : vector<16x1xf32> to vector<16x1xf32>
    %45 = vector.broadcast %44 : vector<16x1xf32> to vector<16x16xf32>
    %46 = vector.broadcast %cst_17 : f32 to vector<16x16xf32>
    %47 = arith.select %42, %45, %46 : vector<16x16xi1>, vector<16x16xf32>
    %48 = arith.addf %40, %47 : vector<16x16xf32>
    %c-2_i32 = arith.constant -2 : i32
    %49 = vector.broadcast %c-2_i32 : i32 to vector<16x16xi32>
    %50 = arith.cmpi eq, %32, %49 : vector<16x16xi32>
    %51 = vector.extract_strided_slice %29 {offsets = [0, 2], sizes = [16, 1], strides = [1, 1]} : vector<16x9xf32> to vector<16x1xf32>
    %cst_18 = arith.constant 0.000000e+00 : f32
    %52 = vector.shape_cast %51 : vector<16x1xf32> to vector<16x1xf32>
    %53 = vector.broadcast %52 : vector<16x1xf32> to vector<16x16xf32>
    %54 = vector.broadcast %cst_18 : f32 to vector<16x16xf32>
    %55 = arith.select %50, %53, %54 : vector<16x16xi1>, vector<16x16xf32>
    %56 = arith.addf %48, %55 : vector<16x16xf32>
    %c-1_i32 = arith.constant -1 : i32
    %57 = vector.broadcast %c-1_i32 : i32 to vector<16x16xi32>
    %58 = arith.cmpi eq, %32, %57 : vector<16x16xi32>
    %59 = vector.extract_strided_slice %29 {offsets = [0, 3], sizes = [16, 1], strides = [1, 1]} : vector<16x9xf32> to vector<16x1xf32>
    %cst_19 = arith.constant 0.000000e+00 : f32
    %60 = vector.shape_cast %59 : vector<16x1xf32> to vector<16x1xf32>
    %61 = vector.broadcast %60 : vector<16x1xf32> to vector<16x16xf32>
    %62 = vector.broadcast %cst_19 : f32 to vector<16x16xf32>
    %63 = arith.select %58, %61, %62 : vector<16x16xi1>, vector<16x16xf32>
    %64 = arith.addf %56, %63 : vector<16x16xf32>
    %c0_i32_20 = arith.constant 0 : i32
    %65 = vector.broadcast %c0_i32_20 : i32 to vector<16x16xi32>
    %66 = arith.cmpi eq, %32, %65 : vector<16x16xi32>
    %67 = vector.extract_strided_slice %29 {offsets = [0, 4], sizes = [16, 1], strides = [1, 1]} : vector<16x9xf32> to vector<16x1xf32>
    %cst_21 = arith.constant 0.000000e+00 : f32
    %68 = vector.shape_cast %67 : vector<16x1xf32> to vector<16x1xf32>
    %69 = vector.broadcast %68 : vector<16x1xf32> to vector<16x16xf32>
    %70 = vector.broadcast %cst_21 : f32 to vector<16x16xf32>
    %71 = arith.select %66, %69, %70 : vector<16x16xi1>, vector<16x16xf32>
    %72 = arith.addf %64, %71 : vector<16x16xf32>
    %c1_i32 = arith.constant 1 : i32
    %73 = vector.broadcast %c1_i32 : i32 to vector<16x16xi32>
    %74 = arith.cmpi eq, %32, %73 : vector<16x16xi32>
    %75 = vector.extract_strided_slice %29 {offsets = [0, 5], sizes = [16, 1], strides = [1, 1]} : vector<16x9xf32> to vector<16x1xf32>
    %cst_22 = arith.constant 0.000000e+00 : f32
    %76 = vector.shape_cast %75 : vector<16x1xf32> to vector<16x1xf32>
    %77 = vector.broadcast %76 : vector<16x1xf32> to vector<16x16xf32>
    %78 = vector.broadcast %cst_22 : f32 to vector<16x16xf32>
    %79 = arith.select %74, %77, %78 : vector<16x16xi1>, vector<16x16xf32>
    %80 = arith.addf %72, %79 : vector<16x16xf32>
    %c2_i32 = arith.constant 2 : i32
    %81 = vector.broadcast %c2_i32 : i32 to vector<16x16xi32>
    %82 = arith.cmpi eq, %32, %81 : vector<16x16xi32>
    %83 = vector.extract_strided_slice %29 {offsets = [0, 6], sizes = [16, 1], strides = [1, 1]} : vector<16x9xf32> to vector<16x1xf32>
    %cst_23 = arith.constant 0.000000e+00 : f32
    %84 = vector.shape_cast %83 : vector<16x1xf32> to vector<16x1xf32>
    %85 = vector.broadcast %84 : vector<16x1xf32> to vector<16x16xf32>
    %86 = vector.broadcast %cst_23 : f32 to vector<16x16xf32>
    %87 = arith.select %82, %85, %86 : vector<16x16xi1>, vector<16x16xf32>
    %88 = arith.addf %80, %87 : vector<16x16xf32>
    %c3_i32 = arith.constant 3 : i32
    %89 = vector.broadcast %c3_i32 : i32 to vector<16x16xi32>
    %90 = arith.cmpi eq, %32, %89 : vector<16x16xi32>
    %91 = vector.extract_strided_slice %29 {offsets = [0, 7], sizes = [16, 1], strides = [1, 1]} : vector<16x9xf32> to vector<16x1xf32>
    %cst_24 = arith.constant 0.000000e+00 : f32
    %92 = vector.shape_cast %91 : vector<16x1xf32> to vector<16x1xf32>
    %93 = vector.broadcast %92 : vector<16x1xf32> to vector<16x16xf32>
    %94 = vector.broadcast %cst_24 : f32 to vector<16x16xf32>
    %95 = arith.select %90, %93, %94 : vector<16x16xi1>, vector<16x16xf32>
    %96 = arith.addf %88, %95 : vector<16x16xf32>
    %c4_i32 = arith.constant 4 : i32
    %97 = vector.broadcast %c4_i32 : i32 to vector<16x16xi32>
    %98 = arith.cmpi eq, %32, %97 : vector<16x16xi32>
    %99 = vector.extract_strided_slice %29 {offsets = [0, 8], sizes = [16, 1], strides = [1, 1]} : vector<16x9xf32> to vector<16x1xf32>
    %cst_25 = arith.constant 0.000000e+00 : f32
    %100 = vector.shape_cast %99 : vector<16x1xf32> to vector<16x1xf32>
    %101 = vector.broadcast %100 : vector<16x1xf32> to vector<16x16xf32>
    %102 = vector.broadcast %cst_25 : f32 to vector<16x16xf32>
    %103 = arith.select %98, %101, %102 : vector<16x16xi1>, vector<16x16xf32>
    %104 = arith.addf %96, %103 : vector<16x16xf32>
    %c0_26 = arith.constant 0 : index
    %c0_27 = arith.constant 0 : index
    %c0_28 = arith.constant 0 : index
    %105 = vector.load %arg3[%c0_26, %c0_27, %c0_28] : memref<1x1x16xf32, #tpu.memory_space<vmem>>, vector<1x1x16xf32>
    %106 = vector.shape_cast %105 : vector<1x1x16xf32> to vector<1x16xf32>
    %cst_29 = arith.constant 0.000000e+00 : f32
    %107 = vector.broadcast %cst_29 : f32 to vector<1x16xf32>
    %108 = arith.cmpf oeq, %106, %107 : vector<1x16xf32>
    %cst_30 = arith.constant -1.000000e+04 : f32
    %109 = vector.shape_cast %108 : vector<1x16xi1> to vector<1x16xi1>
    %110 = vector.broadcast %109 : vector<1x16xi1> to vector<16x16xi1>
    %111 = vector.broadcast %cst_30 : f32 to vector<16x16xf32>
    %112 = arith.select %110, %111, %104 : vector<16x16xi1>, vector<16x16xf32>
    %cst_31 = arith.constant dense<0xFF800000> : vector<16xf32>
    %113 = vector.multi_reduction <maximumf>, %112, %cst_31 [1] : vector<16x16xf32> to vector<16xf32>
    %114 = vector.shape_cast %113 : vector<16xf32> to vector<16x1xf32>
    %115 = vector.broadcast %114 : vector<16x1xf32> to vector<16x16xf32>
    %116 = arith.subf %112, %115 : vector<16x16xf32>
    %117 = math.exp %116 : vector<16x16xf32>
    %cst_32 = arith.constant dense<0.000000e+00> : vector<16xf32>
    %118 = vector.multi_reduction <add>, %117, %cst_32 [1] : vector<16x16xf32> to vector<16xf32>
    %119 = vector.shape_cast %118 : vector<16xf32> to vector<16x1xf32>
    %120 = tpu.reciprocal %119 : vector<16x1xf32> -> vector<16x1xf32>
    %121 = vector.broadcast %120 : vector<16x1xf32> to vector<16x16xf32>
    %122 = arith.mulf %117, %121 : vector<16x16xf32>
    %c-4_i32_33 = arith.constant -4 : i32
    %123 = vector.broadcast %c-4_i32_33 : i32 to vector<16x16xi32>
    %124 = arith.cmpi eq, %32, %123 : vector<16x16xi32>
    %cst_34 = arith.constant 0.000000e+00 : f32
    %125 = vector.broadcast %cst_34 : f32 to vector<16x16xf32>
    %126 = arith.select %124, %122, %125 : vector<16x16xi1>, vector<16x16xf32>
    %cst_35 = arith.constant dense<0.000000e+00> : vector<16xf32>
    %127 = vector.multi_reduction <add>, %126, %cst_35 [1] : vector<16x16xf32> to vector<16xf32>
    %128 = vector.shape_cast %127 : vector<16xf32> to vector<16x1xf32>
    %c-3_i32_36 = arith.constant -3 : i32
    %129 = vector.broadcast %c-3_i32_36 : i32 to vector<16x16xi32>
    %130 = arith.cmpi eq, %32, %129 : vector<16x16xi32>
    %cst_37 = arith.constant 0.000000e+00 : f32
    %131 = vector.broadcast %cst_37 : f32 to vector<16x16xf32>
    %132 = arith.select %130, %122, %131 : vector<16x16xi1>, vector<16x16xf32>
    %cst_38 = arith.constant dense<0.000000e+00> : vector<16xf32>
    %133 = vector.multi_reduction <add>, %132, %cst_38 [1] : vector<16x16xf32> to vector<16xf32>
    %134 = vector.shape_cast %133 : vector<16xf32> to vector<16x1xf32>
    %c-2_i32_39 = arith.constant -2 : i32
    %135 = vector.broadcast %c-2_i32_39 : i32 to vector<16x16xi32>
    %136 = arith.cmpi eq, %32, %135 : vector<16x16xi32>
    %cst_40 = arith.constant 0.000000e+00 : f32
    %137 = vector.broadcast %cst_40 : f32 to vector<16x16xf32>
    %138 = arith.select %136, %122, %137 : vector<16x16xi1>, vector<16x16xf32>
    %cst_41 = arith.constant dense<0.000000e+00> : vector<16xf32>
    %139 = vector.multi_reduction <add>, %138, %cst_41 [1] : vector<16x16xf32> to vector<16xf32>
    %140 = vector.shape_cast %139 : vector<16xf32> to vector<16x1xf32>
    %c-1_i32_42 = arith.constant -1 : i32
    %141 = vector.broadcast %c-1_i32_42 : i32 to vector<16x16xi32>
    %142 = arith.cmpi eq, %32, %141 : vector<16x16xi32>
    %cst_43 = arith.constant 0.000000e+00 : f32
    %143 = vector.broadcast %cst_43 : f32 to vector<16x16xf32>
    %144 = arith.select %142, %122, %143 : vector<16x16xi1>, vector<16x16xf32>
    %cst_44 = arith.constant dense<0.000000e+00> : vector<16xf32>
    %145 = vector.multi_reduction <add>, %144, %cst_44 [1] : vector<16x16xf32> to vector<16xf32>
    %146 = vector.shape_cast %145 : vector<16xf32> to vector<16x1xf32>
    %c0_i32_45 = arith.constant 0 : i32
    %147 = vector.broadcast %c0_i32_45 : i32 to vector<16x16xi32>
    %148 = arith.cmpi eq, %32, %147 : vector<16x16xi32>
    %cst_46 = arith.constant 0.000000e+00 : f32
    %149 = vector.broadcast %cst_46 : f32 to vector<16x16xf32>
    %150 = arith.select %148, %122, %149 : vector<16x16xi1>, vector<16x16xf32>
    %cst_47 = arith.constant dense<0.000000e+00> : vector<16xf32>
    %151 = vector.multi_reduction <add>, %150, %cst_47 [1] : vector<16x16xf32> to vector<16xf32>
    %152 = vector.shape_cast %151 : vector<16xf32> to vector<16x1xf32>
    %c1_i32_48 = arith.constant 1 : i32
    %153 = vector.broadcast %c1_i32_48 : i32 to vector<16x16xi32>
    %154 = arith.cmpi eq, %32, %153 : vector<16x16xi32>
    %cst_49 = arith.constant 0.000000e+00 : f32
    %155 = vector.broadcast %cst_49 : f32 to vector<16x16xf32>
    %156 = arith.select %154, %122, %155 : vector<16x16xi1>, vector<16x16xf32>
    %cst_50 = arith.constant dense<0.000000e+00> : vector<16xf32>
    %157 = vector.multi_reduction <add>, %156, %cst_50 [1] : vector<16x16xf32> to vector<16xf32>
    %158 = vector.shape_cast %157 : vector<16xf32> to vector<16x1xf32>
    %c2_i32_51 = arith.constant 2 : i32
    %159 = vector.broadcast %c2_i32_51 : i32 to vector<16x16xi32>
    %160 = arith.cmpi eq, %32, %159 : vector<16x16xi32>
    %cst_52 = arith.constant 0.000000e+00 : f32
    %161 = vector.broadcast %cst_52 : f32 to vector<16x16xf32>
    %162 = arith.select %160, %122, %161 : vector<16x16xi1>, vector<16x16xf32>
    %cst_53 = arith.constant dense<0.000000e+00> : vector<16xf32>
    %163 = vector.multi_reduction <add>, %162, %cst_53 [1] : vector<16x16xf32> to vector<16xf32>
    %164 = vector.shape_cast %163 : vector<16xf32> to vector<16x1xf32>
    %c3_i32_54 = arith.constant 3 : i32
    %165 = vector.broadcast %c3_i32_54 : i32 to vector<16x16xi32>
    %166 = arith.cmpi eq, %32, %165 : vector<16x16xi32>
    %cst_55 = arith.constant 0.000000e+00 : f32
    %167 = vector.broadcast %cst_55 : f32 to vector<16x16xf32>
    %168 = arith.select %166, %122, %167 : vector<16x16xi1>, vector<16x16xf32>
    %cst_56 = arith.constant dense<0.000000e+00> : vector<16xf32>
    %169 = vector.multi_reduction <add>, %168, %cst_56 [1] : vector<16x16xf32> to vector<16xf32>
    %170 = vector.shape_cast %169 : vector<16xf32> to vector<16x1xf32>
    %c4_i32_57 = arith.constant 4 : i32
    %171 = vector.broadcast %c4_i32_57 : i32 to vector<16x16xi32>
    %172 = arith.cmpi eq, %32, %171 : vector<16x16xi32>
    %cst_58 = arith.constant 0.000000e+00 : f32
    %173 = vector.broadcast %cst_58 : f32 to vector<16x16xf32>
    %174 = arith.select %172, %122, %173 : vector<16x16xi1>, vector<16x16xf32>
    %cst_59 = arith.constant dense<0.000000e+00> : vector<16xf32>
    %175 = vector.multi_reduction <add>, %174, %cst_59 [1] : vector<16x16xf32> to vector<16xf32>
    %176 = vector.shape_cast %175 : vector<16xf32> to vector<16x1xf32>
    %177 = tpu.concatenate %128, %134, %140, %146, %152, %158, %164, %170, %176 in 1 : vector<16x1xf32>, vector<16x1xf32>, vector<16x1xf32>, vector<16x1xf32>, vector<16x1xf32>, vector<16x1xf32>, vector<16x1xf32>, vector<16x1xf32>, vector<16x1xf32> -> vector<16x9xf32>
    %178 = arith.truncf %122 : vector<16x16xf32> to vector<16x16xbf16>
    %179 = arith.truncf %177 : vector<16x9xf32> to vector<16x9xbf16>
    %180 = tpu.concatenate %178, %179 in 1 : vector<16x16xbf16>, vector<16x9xbf16> -> vector<16x25xbf16>
    %c0_60 = arith.constant 0 : index
    %c0_61 = arith.constant 0 : index
    %181 = vector.load %arg10[%c0_60, %c0_61] : memref<9x4xbf16, #tpu.memory_space<vmem>>, vector<9x4xbf16>
    %182 = tpu.concatenate %24, %181 in 0 : vector<16x4xbf16>, vector<9x4xbf16> -> vector<25x4xbf16>
    %cst_62 = arith.constant dense<0.000000e+00> : vector<16x4xf32>
    %183 = tpu.matmul %180, %182, %cst_62 {dimension_numbers = #tpu.dot_dimension_numbers<[1], [0], [0], [1], [0, 0, 1, 1], [], []>} : vector<16x25xbf16>, vector<25x4xbf16>, vector<16x4xf32> -> vector<16x4xf32>
    %c0_63 = arith.constant 0 : index
    %c0_64 = arith.constant 0 : index
    %184 = vector.load %arg14[%c0_63, %c0_64] : memref<16x8xf32, #tpu.memory_space<vmem>>, vector<16x8xf32>
    %185 = arith.truncf %183 : vector<16x4xf32> to vector<16x4xbf16>
    %c0_65 = arith.constant 0 : index
    %c0_66 = arith.constant 0 : index
    %c0_67 = arith.constant 0 : index
    %186 = vector.load %arg7[%c0_65, %c0_66, %c0_67] : memref<1x4x8xbf16, #tpu.memory_space<vmem>>, vector<1x4x8xbf16>
    %187 = vector.shape_cast %186 : vector<1x4x8xbf16> to vector<4x8xbf16>
    %cst_68 = arith.constant dense<0.000000e+00> : vector<16x8xf32>
    %188 = tpu.matmul %185, %187, %cst_68 {dimension_numbers = #tpu.dot_dimension_numbers<[1], [0], [0], [1], [0, 0, 1, 1], [], []>} : vector<16x4xbf16>, vector<4x8xbf16>, vector<16x8xf32> -> vector<16x8xf32>
    %189 = arith.addf %184, %188 : vector<16x8xf32>
    %c0_69 = arith.constant 0 : index
    %c0_70 = arith.constant 0 : index
    %190 = vector.load %arg14[%c0_69, %c0_70] : memref<16x8xf32, #tpu.memory_space<vmem>>, vector<16x8xf32>
    tpu.vector_store %arg14[%c0_69, %c0_70], %189 {strides = array<i32>} : memref<16x8xf32, #tpu.memory_space<vmem>>, vector<16x8xf32>,
    %c1_i32_71 = arith.constant 1 : i32
    %191 = arith.cmpi eq, %arg1, %c1_i32_71 : i32
    %192 = arith.extui %191 : i1 to i32
    %c0_i32_72 = arith.constant 0 : i32
    %193 = arith.cmpi ne, %192, %c0_i32_72 : i32
    scf.if %193 {
      %c0_73 = arith.constant 0 : index
      %c0_74 = arith.constant 0 : index
      %194 = vector.load %arg14[%c0_73, %c0_74] : memref<16x8xf32, #tpu.memory_space<vmem>>, vector<16x8xf32>
      %c0_75 = arith.constant 0 : index
      %c0_76 = arith.constant 0 : index
      %195 = vector.load %arg8[%c0_75, %c0_76] : memref<1x8xf32, #tpu.memory_space<vmem>>, vector<1x8xf32>
      %196 = vector.broadcast %195 : vector<1x8xf32> to vector<16x8xf32>
      %197 = arith.addf %194, %196 : vector<16x8xf32>
      %198 = arith.addf %8, %197 : vector<16x8xf32>
      %cst_77 = arith.constant dense<0.000000e+00> : vector<16xf32>
      %199 = vector.multi_reduction <add>, %198, %cst_77 [1] : vector<16x8xf32> to vector<16xf32>
      %200 = vector.shape_cast %199 : vector<16xf32> to vector<16x1xf32>
      %cst_78 = arith.constant 8.000000e+00 : f32
      %201 = vector.broadcast %cst_78 : f32 to vector<16x1xf32>
      %202 = arith.divf %200, %201 : vector<16x1xf32>
      %203 = vector.broadcast %202 : vector<16x1xf32> to vector<16x8xf32>
      %204 = arith.subf %198, %203 : vector<16x8xf32>
      %205 = arith.mulf %204, %204 : vector<16x8xf32>
      %cst_79 = arith.constant dense<0.000000e+00> : vector<16xf32>
      %206 = vector.multi_reduction <add>, %205, %cst_79 [1] : vector<16x8xf32> to vector<16xf32>
      %207 = vector.shape_cast %206 : vector<16xf32> to vector<16x1xf32>
      %cst_80 = arith.constant 8.000000e+00 : f32
      %208 = vector.broadcast %cst_80 : f32 to vector<16x1xf32>
      %209 = arith.divf %207, %208 : vector<16x1xf32>
      %210 = vector.broadcast %202 : vector<16x1xf32> to vector<16x8xf32>
      %211 = arith.subf %198, %210 : vector<16x8xf32>
      %cst_81 = arith.constant 9.99999974E-5 : f32
      %212 = vector.broadcast %cst_81 : f32 to vector<16x1xf32>
      %213 = arith.addf %209, %212 : vector<16x1xf32>
      %214 = math.rsqrt %213 : vector<16x1xf32>
      %215 = vector.broadcast %214 : vector<16x1xf32> to vector<16x8xf32>
      %216 = arith.mulf %211, %215 : vector<16x8xf32>
      %c0_82 = arith.constant 0 : index
      %c0_83 = arith.constant 0 : index
      %217 = vector.load %arg11[%c0_82, %c0_83] : memref<1x8xf32, #tpu.memory_space<vmem>>, vector<1x8xf32>
      %218 = vector.broadcast %217 : vector<1x8xf32> to vector<16x8xf32>
      %219 = arith.mulf %216, %218 : vector<16x8xf32>
      %c0_84 = arith.constant 0 : index
      %c0_85 = arith.constant 0 : index
      %220 = vector.load %arg12[%c0_84, %c0_85] : memref<1x8xf32, #tpu.memory_space<vmem>>, vector<1x8xf32>
      %221 = vector.broadcast %220 : vector<1x8xf32> to vector<16x8xf32>
      %222 = arith.addf %219, %221 : vector<16x8xf32>
      %223 = vector.broadcast %4 : vector<16x1xf32> to vector<16x8xf32>
      %224 = arith.mulf %222, %223 : vector<16x8xf32>
      %c0_86 = arith.constant 0 : index
      %c0_87 = arith.constant 0 : index
      %c0_88 = arith.constant 0 : index
      %225 = vector.load %arg13[%c0_86, %c0_87, %c0_88] : memref<1x16x8xf32, #tpu.memory_space<vmem>>, vector<1x16x8xf32>
      %226 = vector.shape_cast %225 : vector<1x16x8xf32> to vector<16x8xf32>
      %227 = vector.shape_cast %224 : vector<16x8xf32> to vector<1x16x8xf32>
      tpu.vector_store %arg13[%c0_86, %c0_87, %c0_88], %227 {strides = array<i32>} : memref<1x16x8xf32, #tpu.memory_space<vmem>>, vector<1x16x8xf32>,
    } else {
    }
    return
  }
  func.func @transform_0(%arg0: i32, %arg1: i32) -> (i32, i32, i32) {
    %c0_i32 = arith.constant 0 : i32
    %c0_i32_0 = arith.constant 0 : i32
    %c0_i32_1 = arith.constant 0 : i32
    return %arg0, %c0_i32, %c0_i32_0 : i32, i32, i32
  }
  func.func @transform_1(%arg0: i32, %arg1: i32) -> (i32, i32, i32) {
    %c0_i32 = arith.constant 0 : i32
    %c0_i32_0 = arith.constant 0 : i32
    %c0_i32_1 = arith.constant 0 : i32
    return %arg0, %c0_i32, %c0_i32_0 : i32, i32, i32
  }
  func.func @transform_2(%arg0: i32, %arg1: i32) -> (i32, i32, i32) {
    %c0_i32 = arith.constant 0 : i32
    %c0_i32_0 = arith.constant 0 : i32
    %c0_i32_1 = arith.constant 0 : i32
    return %arg0, %c0_i32, %c0_i32_0 : i32, i32, i32
  }
  func.func @transform_3(%arg0: i32, %arg1: i32) -> (i32, i32, i32) {
    %c0_i32 = arith.constant 0 : i32
    %c0_i32_0 = arith.constant 0 : i32
    %c0_i32_1 = arith.constant 0 : i32
    return %arg1, %c0_i32, %c0_i32_0 : i32, i32, i32
  }
  func.func @transform_4(%arg0: i32, %arg1: i32) -> (i32, i32, i32) {
    %c0_i32 = arith.constant 0 : i32
    %c0_i32_0 = arith.constant 0 : i32
    %c0_i32_1 = arith.constant 0 : i32
    return %arg1, %c0_i32, %c0_i32_0 : i32, i32, i32
  }
  func.func @transform_5(%arg0: i32, %arg1: i32) -> (i32, i32, i32) {
    %c0_i32 = arith.constant 0 : i32
    %c0_i32_0 = arith.constant 0 : i32
    %c0_i32_1 = arith.constant 0 : i32
    return %arg1, %c0_i32, %c0_i32_0 : i32, i32, i32
  }
  func.func @transform_6(%arg0: i32, %arg1: i32) -> (i32, i32) {
    %c0_i32 = arith.constant 0 : i32
    %c0_i32_0 = arith.constant 0 : i32
    %c0_i32_1 = arith.constant 0 : i32
    return %c0_i32, %c0_i32_0 : i32, i32
  }
  func.func @transform_7(%arg0: i32, %arg1: i32) -> (i32, i32) {
    %c0_i32 = arith.constant 0 : i32
    %c0_i32_0 = arith.constant 0 : i32
    %c0_i32_1 = arith.constant 0 : i32
    return %c0_i32, %c0_i32_0 : i32, i32
  }
  func.func @transform_8(%arg0: i32, %arg1: i32) -> (i32, i32) {
    %c0_i32 = arith.constant 0 : i32
    %c0_i32_0 = arith.constant 0 : i32
    %c0_i32_1 = arith.constant 0 : i32
    return %c0_i32, %c0_i32_0 : i32, i32
  }
  func.func @transform_9(%arg0: i32, %arg1: i32) -> (i32, i32) {
    %c0_i32 = arith.constant 0 : i32
    %c0_i32_0 = arith.constant 0 : i32
    %c0_i32_1 = arith.constant 0 : i32
    return %c0_i32, %c0_i32_0 : i32, i32
  }
  func.func @transform_10(%arg0: i32, %arg1: i32) -> (i32, i32) {
    %c0_i32 = arith.constant 0 : i32
    %c0_i32_0 = arith.constant 0 : i32
    %c0_i32_1 = arith.constant 0 : i32
    return %c0_i32, %c0_i32_0 : i32, i32
  }
  func.func @transform_11(%arg0: i32, %arg1: i32) -> (i32, i32, i32) {
    %c0_i32 = arith.constant 0 : i32
    %c0_i32_0 = arith.constant 0 : i32
    %c0_i32_1 = arith.constant 0 : i32
    return %arg0, %c0_i32, %c0_i32_0 : i32, i32, i32
  }
}

module attributes {stable_mosaic.version = 11 : i64} {
  func.func @_ffn_ln_kernel(%arg0: i32, %arg1: memref<1x16x8xf32, #tpu.memory_space<vmem>>, %arg2: memref<1x16x1xf32, #tpu.memory_space<vmem>>, %arg3: memref<24x16xbf16, #tpu.memory_space<vmem>>, %arg4: memref<1x16xf32, #tpu.memory_space<vmem>>, %arg5: memref<48x8xbf16, #tpu.memory_space<vmem>>, %arg6: memref<1x8xf32, #tpu.memory_space<vmem>>, %arg7: memref<1x8xf32, #tpu.memory_space<vmem>>, %arg8: memref<1x8xf32, #tpu.memory_space<vmem>>, %arg9: memref<1x16x8xf32, #tpu.memory_space<vmem>>) attributes {dimension_semantics = [#tpu.dimension_semantics<parallel>], iteration_bounds = array<i64: 2>, scalar_prefetch = 0 : i64, scratch_operands = 0 : i64, tpu.core_type = #tpu.core_type<tc>, window_params = [{transform_indices = @transform_0, window_bounds = array<i64: 1, 16, 8>}, {transform_indices = @transform_1, window_bounds = array<i64: 1, 16, 1>}, {pipeline_mode = #tpu.pipeline_mode<synchronous>, transform_indices = @transform_2, window_bounds = array<i64: 24, 16>}, {pipeline_mode = #tpu.pipeline_mode<synchronous>, transform_indices = @transform_3, window_bounds = array<i64: 1, 16>}, {pipeline_mode = #tpu.pipeline_mode<synchronous>, transform_indices = @transform_4, window_bounds = array<i64: 48, 8>}, {pipeline_mode = #tpu.pipeline_mode<synchronous>, transform_indices = @transform_5, window_bounds = array<i64: 1, 8>}, {pipeline_mode = #tpu.pipeline_mode<synchronous>, transform_indices = @transform_6, window_bounds = array<i64: 1, 8>}, {pipeline_mode = #tpu.pipeline_mode<synchronous>, transform_indices = @transform_7, window_bounds = array<i64: 1, 8>}, {transform_indices = @transform_8, window_bounds = array<i64: 1, 16, 8>}]} {
    %c0 = arith.constant 0 : index
    %c0_0 = arith.constant 0 : index
    %c0_1 = arith.constant 0 : index
    %0 = vector.load %arg2[%c0, %c0_0, %c0_1] : memref<1x16x1xf32, #tpu.memory_space<vmem>>, vector<1x16x1xf32>
    %1 = vector.shape_cast %0 : vector<1x16x1xf32> to vector<16x1xf32>
    %c0_2 = arith.constant 0 : index
    %c0_3 = arith.constant 0 : index
    %c0_4 = arith.constant 0 : index
    %2 = vector.load %arg1[%c0_2, %c0_3, %c0_4] : memref<1x16x8xf32, #tpu.memory_space<vmem>>, vector<1x16x8xf32>
    %3 = vector.shape_cast %2 : vector<1x16x8xf32> to vector<16x8xf32>
    %4 = vector.broadcast %1 : vector<16x1xf32> to vector<16x8xf32>
    %5 = arith.mulf %3, %4 : vector<16x8xf32>
    %6 = arith.truncf %5 : vector<16x8xf32> to vector<16x8xbf16>
    %cst = arith.constant 0.000000e+00 : bf16
    %7 = vector.broadcast %cst : bf16 to vector<1x8xbf16>
    %8 = vector.extract_strided_slice %6 {offsets = [0, 0], sizes = [15, 8], strides = [1, 1]} : vector<16x8xbf16> to vector<15x8xbf16>
    %9 = tpu.concatenate %7, %8 in 0 : vector<1x8xbf16>, vector<15x8xbf16> -> vector<16x8xbf16>
    %10 = vector.extract_strided_slice %6 {offsets = [1, 0], sizes = [15, 8], strides = [1, 1]} : vector<16x8xbf16> to vector<15x8xbf16>
    %cst_5 = arith.constant 0.000000e+00 : bf16
    %11 = vector.broadcast %cst_5 : bf16 to vector<1x8xbf16>
    %12 = tpu.concatenate %10, %11 in 0 : vector<15x8xbf16>, vector<1x8xbf16> -> vector<16x8xbf16>
    %13 = tpu.concatenate %9, %6, %12 in 1 : vector<16x8xbf16>, vector<16x8xbf16>, vector<16x8xbf16> -> vector<16x24xbf16>
    %c0_6 = arith.constant 0 : index
    %c0_7 = arith.constant 0 : index
    %14 = vector.load %arg3[%c0_6, %c0_7] : memref<24x16xbf16, #tpu.memory_space<vmem>>, vector<24x16xbf16>
    %cst_8 = arith.constant dense<0.000000e+00> : vector<16x16xf32>
    %15 = tpu.matmul %13, %14, %cst_8 {dimension_numbers = #tpu.dot_dimension_numbers<[1], [0], [0], [1], [0, 0, 1, 1], [], []>} : vector<16x24xbf16>, vector<24x16xbf16>, vector<16x16xf32> -> vector<16x16xf32>
    %c0_9 = arith.constant 0 : index
    %c0_10 = arith.constant 0 : index
    %16 = vector.load %arg4[%c0_9, %c0_10] : memref<1x16xf32, #tpu.memory_space<vmem>>, vector<1x16xf32>
    %17 = vector.broadcast %16 : vector<1x16xf32> to vector<16x16xf32>
    %18 = arith.addf %15, %17 : vector<16x16xf32>
    %cst_11 = arith.constant 0.000000e+00 : f32
    %19 = vector.broadcast %cst_11 : f32 to vector<16x16xf32>
    %20 = arith.maximumf %18, %19 : vector<16x16xf32>
    %21 = vector.broadcast %1 : vector<16x1xf32> to vector<16x16xf32>
    %22 = arith.mulf %20, %21 : vector<16x16xf32>
    %23 = arith.truncf %22 : vector<16x16xf32> to vector<16x16xbf16>
    %cst_12 = arith.constant 0.000000e+00 : bf16
    %24 = vector.broadcast %cst_12 : bf16 to vector<1x16xbf16>
    %25 = vector.extract_strided_slice %23 {offsets = [0, 0], sizes = [15, 16], strides = [1, 1]} : vector<16x16xbf16> to vector<15x16xbf16>
    %26 = tpu.concatenate %24, %25 in 0 : vector<1x16xbf16>, vector<15x16xbf16> -> vector<16x16xbf16>
    %27 = vector.extract_strided_slice %23 {offsets = [1, 0], sizes = [15, 16], strides = [1, 1]} : vector<16x16xbf16> to vector<15x16xbf16>
    %cst_13 = arith.constant 0.000000e+00 : bf16
    %28 = vector.broadcast %cst_13 : bf16 to vector<1x16xbf16>
    %29 = tpu.concatenate %27, %28 in 0 : vector<15x16xbf16>, vector<1x16xbf16> -> vector<16x16xbf16>
    %30 = tpu.concatenate %26, %23, %29 in 1 : vector<16x16xbf16>, vector<16x16xbf16>, vector<16x16xbf16> -> vector<16x48xbf16>
    %c0_14 = arith.constant 0 : index
    %c0_15 = arith.constant 0 : index
    %31 = vector.load %arg5[%c0_14, %c0_15] : memref<48x8xbf16, #tpu.memory_space<vmem>>, vector<48x8xbf16>
    %cst_16 = arith.constant dense<0.000000e+00> : vector<16x8xf32>
    %32 = tpu.matmul %30, %31, %cst_16 {dimension_numbers = #tpu.dot_dimension_numbers<[1], [0], [0], [1], [0, 0, 1, 1], [], []>} : vector<16x48xbf16>, vector<48x8xbf16>, vector<16x8xf32> -> vector<16x8xf32>
    %c0_17 = arith.constant 0 : index
    %c0_18 = arith.constant 0 : index
    %33 = vector.load %arg6[%c0_17, %c0_18] : memref<1x8xf32, #tpu.memory_space<vmem>>, vector<1x8xf32>
    %34 = vector.broadcast %33 : vector<1x8xf32> to vector<16x8xf32>
    %35 = arith.addf %32, %34 : vector<16x8xf32>
    %36 = vector.broadcast %1 : vector<16x1xf32> to vector<16x8xf32>
    %37 = arith.mulf %35, %36 : vector<16x8xf32>
    %38 = arith.addf %5, %37 : vector<16x8xf32>
    %cst_19 = arith.constant dense<0.000000e+00> : vector<16xf32>
    %39 = vector.multi_reduction <add>, %38, %cst_19 [1] : vector<16x8xf32> to vector<16xf32>
    %40 = vector.shape_cast %39 : vector<16xf32> to vector<16x1xf32>
    %cst_20 = arith.constant 8.000000e+00 : f32
    %41 = vector.broadcast %cst_20 : f32 to vector<16x1xf32>
    %42 = arith.divf %40, %41 : vector<16x1xf32>
    %43 = vector.broadcast %42 : vector<16x1xf32> to vector<16x8xf32>
    %44 = arith.subf %38, %43 : vector<16x8xf32>
    %45 = arith.mulf %44, %44 : vector<16x8xf32>
    %cst_21 = arith.constant dense<0.000000e+00> : vector<16xf32>
    %46 = vector.multi_reduction <add>, %45, %cst_21 [1] : vector<16x8xf32> to vector<16xf32>
    %47 = vector.shape_cast %46 : vector<16xf32> to vector<16x1xf32>
    %cst_22 = arith.constant 8.000000e+00 : f32
    %48 = vector.broadcast %cst_22 : f32 to vector<16x1xf32>
    %49 = arith.divf %47, %48 : vector<16x1xf32>
    %50 = vector.broadcast %42 : vector<16x1xf32> to vector<16x8xf32>
    %51 = arith.subf %38, %50 : vector<16x8xf32>
    %cst_23 = arith.constant 9.99999974E-5 : f32
    %52 = vector.broadcast %cst_23 : f32 to vector<16x1xf32>
    %53 = arith.addf %49, %52 : vector<16x1xf32>
    %54 = math.rsqrt %53 : vector<16x1xf32>
    %55 = vector.broadcast %54 : vector<16x1xf32> to vector<16x8xf32>
    %56 = arith.mulf %51, %55 : vector<16x8xf32>
    %c0_24 = arith.constant 0 : index
    %c0_25 = arith.constant 0 : index
    %57 = vector.load %arg7[%c0_24, %c0_25] : memref<1x8xf32, #tpu.memory_space<vmem>>, vector<1x8xf32>
    %58 = vector.broadcast %57 : vector<1x8xf32> to vector<16x8xf32>
    %59 = arith.mulf %56, %58 : vector<16x8xf32>
    %c0_26 = arith.constant 0 : index
    %c0_27 = arith.constant 0 : index
    %60 = vector.load %arg8[%c0_26, %c0_27] : memref<1x8xf32, #tpu.memory_space<vmem>>, vector<1x8xf32>
    %61 = vector.broadcast %60 : vector<1x8xf32> to vector<16x8xf32>
    %62 = arith.addf %59, %61 : vector<16x8xf32>
    %63 = vector.broadcast %1 : vector<16x1xf32> to vector<16x8xf32>
    %64 = arith.mulf %62, %63 : vector<16x8xf32>
    %c0_28 = arith.constant 0 : index
    %c0_29 = arith.constant 0 : index
    %c0_30 = arith.constant 0 : index
    %65 = vector.load %arg9[%c0_28, %c0_29, %c0_30] : memref<1x16x8xf32, #tpu.memory_space<vmem>>, vector<1x16x8xf32>
    %66 = vector.shape_cast %65 : vector<1x16x8xf32> to vector<16x8xf32>
    %67 = vector.shape_cast %64 : vector<16x8xf32> to vector<1x16x8xf32>
    tpu.vector_store %arg9[%c0_28, %c0_29, %c0_30], %67 {strides = array<i32>} : memref<1x16x8xf32, #tpu.memory_space<vmem>>, vector<1x16x8xf32>,
    return
  }
  func.func @transform_0(%arg0: i32) -> (i32, i32, i32) {
    %c0_i32 = arith.constant 0 : i32
    %c0_i32_0 = arith.constant 0 : i32
    %c0_i32_1 = arith.constant 0 : i32
    return %arg0, %c0_i32, %c0_i32_0 : i32, i32, i32
  }
  func.func @transform_1(%arg0: i32) -> (i32, i32, i32) {
    %c0_i32 = arith.constant 0 : i32
    %c0_i32_0 = arith.constant 0 : i32
    %c0_i32_1 = arith.constant 0 : i32
    return %arg0, %c0_i32, %c0_i32_0 : i32, i32, i32
  }
  func.func @transform_2(%arg0: i32) -> (i32, i32) {
    %c0_i32 = arith.constant 0 : i32
    %c0_i32_0 = arith.constant 0 : i32
    %c0_i32_1 = arith.constant 0 : i32
    return %c0_i32, %c0_i32_0 : i32, i32
  }
  func.func @transform_3(%arg0: i32) -> (i32, i32) {
    %c0_i32 = arith.constant 0 : i32
    %c0_i32_0 = arith.constant 0 : i32
    %c0_i32_1 = arith.constant 0 : i32
    return %c0_i32, %c0_i32_0 : i32, i32
  }
  func.func @transform_4(%arg0: i32) -> (i32, i32) {
    %c0_i32 = arith.constant 0 : i32
    %c0_i32_0 = arith.constant 0 : i32
    %c0_i32_1 = arith.constant 0 : i32
    return %c0_i32, %c0_i32_0 : i32, i32
  }
  func.func @transform_5(%arg0: i32) -> (i32, i32) {
    %c0_i32 = arith.constant 0 : i32
    %c0_i32_0 = arith.constant 0 : i32
    %c0_i32_1 = arith.constant 0 : i32
    return %c0_i32, %c0_i32_0 : i32, i32
  }
  func.func @transform_6(%arg0: i32) -> (i32, i32) {
    %c0_i32 = arith.constant 0 : i32
    %c0_i32_0 = arith.constant 0 : i32
    %c0_i32_1 = arith.constant 0 : i32
    return %c0_i32, %c0_i32_0 : i32, i32
  }
  func.func @transform_7(%arg0: i32) -> (i32, i32) {
    %c0_i32 = arith.constant 0 : i32
    %c0_i32_0 = arith.constant 0 : i32
    %c0_i32_1 = arith.constant 0 : i32
    return %c0_i32, %c0_i32_0 : i32, i32
  }
  func.func @transform_8(%arg0: i32) -> (i32, i32, i32) {
    %c0_i32 = arith.constant 0 : i32
    %c0_i32_0 = arith.constant 0 : i32
    %c0_i32_1 = arith.constant 0 : i32
    return %arg0, %c0_i32, %c0_i32_0 : i32, i32, i32
  }
}

module attributes {stable_mosaic.version = 11 : i64} {
  func.func @_ffn_ln_kernel(%arg0: i32, %arg1: memref<1x16x8xf32, #tpu.memory_space<vmem>>, %arg2: memref<1x16x1xf32, #tpu.memory_space<vmem>>, %arg3: memref<24x16xbf16, #tpu.memory_space<vmem>>, %arg4: memref<1x16xf32, #tpu.memory_space<vmem>>, %arg5: memref<48x16xbf16, #tpu.memory_space<vmem>>, %arg6: memref<1x16xf32, #tpu.memory_space<vmem>>, %arg7: memref<1x16xf32, #tpu.memory_space<vmem>>, %arg8: memref<1x16xf32, #tpu.memory_space<vmem>>, %arg9: memref<8x16xbf16, #tpu.memory_space<vmem>>, %arg10: memref<1x16xf32, #tpu.memory_space<vmem>>, %arg11: memref<1x16x16xf32, #tpu.memory_space<vmem>>) attributes {dimension_semantics = [#tpu.dimension_semantics<parallel>], iteration_bounds = array<i64: 2>, scalar_prefetch = 0 : i64, scratch_operands = 0 : i64, tpu.core_type = #tpu.core_type<tc>, window_params = [{transform_indices = @transform_0, window_bounds = array<i64: 1, 16, 8>}, {transform_indices = @transform_1, window_bounds = array<i64: 1, 16, 1>}, {pipeline_mode = #tpu.pipeline_mode<synchronous>, transform_indices = @transform_2, window_bounds = array<i64: 24, 16>}, {pipeline_mode = #tpu.pipeline_mode<synchronous>, transform_indices = @transform_3, window_bounds = array<i64: 1, 16>}, {pipeline_mode = #tpu.pipeline_mode<synchronous>, transform_indices = @transform_4, window_bounds = array<i64: 48, 16>}, {pipeline_mode = #tpu.pipeline_mode<synchronous>, transform_indices = @transform_5, window_bounds = array<i64: 1, 16>}, {pipeline_mode = #tpu.pipeline_mode<synchronous>, transform_indices = @transform_6, window_bounds = array<i64: 1, 16>}, {pipeline_mode = #tpu.pipeline_mode<synchronous>, transform_indices = @transform_7, window_bounds = array<i64: 1, 16>}, {pipeline_mode = #tpu.pipeline_mode<synchronous>, transform_indices = @transform_8, window_bounds = array<i64: 8, 16>}, {pipeline_mode = #tpu.pipeline_mode<synchronous>, transform_indices = @transform_9, window_bounds = array<i64: 1, 16>}, {transform_indices = @transform_10, window_bounds = array<i64: 1, 16, 16>}]} {
    %c0 = arith.constant 0 : index
    %c0_0 = arith.constant 0 : index
    %c0_1 = arith.constant 0 : index
    %0 = vector.load %arg2[%c0, %c0_0, %c0_1] : memref<1x16x1xf32, #tpu.memory_space<vmem>>, vector<1x16x1xf32>
    %1 = vector.shape_cast %0 : vector<1x16x1xf32> to vector<16x1xf32>
    %c0_2 = arith.constant 0 : index
    %c0_3 = arith.constant 0 : index
    %c0_4 = arith.constant 0 : index
    %2 = vector.load %arg1[%c0_2, %c0_3, %c0_4] : memref<1x16x8xf32, #tpu.memory_space<vmem>>, vector<1x16x8xf32>
    %3 = vector.shape_cast %2 : vector<1x16x8xf32> to vector<16x8xf32>
    %4 = vector.broadcast %1 : vector<16x1xf32> to vector<16x8xf32>
    %5 = arith.mulf %3, %4 : vector<16x8xf32>
    %6 = arith.truncf %5 : vector<16x8xf32> to vector<16x8xbf16>
    %cst = arith.constant 0.000000e+00 : bf16
    %7 = vector.broadcast %cst : bf16 to vector<1x8xbf16>
    %8 = vector.extract_strided_slice %6 {offsets = [0, 0], sizes = [15, 8], strides = [1, 1]} : vector<16x8xbf16> to vector<15x8xbf16>
    %9 = tpu.concatenate %7, %8 in 0 : vector<1x8xbf16>, vector<15x8xbf16> -> vector<16x8xbf16>
    %10 = vector.extract_strided_slice %6 {offsets = [1, 0], sizes = [15, 8], strides = [1, 1]} : vector<16x8xbf16> to vector<15x8xbf16>
    %cst_5 = arith.constant 0.000000e+00 : bf16
    %11 = vector.broadcast %cst_5 : bf16 to vector<1x8xbf16>
    %12 = tpu.concatenate %10, %11 in 0 : vector<15x8xbf16>, vector<1x8xbf16> -> vector<16x8xbf16>
    %13 = tpu.concatenate %9, %6, %12 in 1 : vector<16x8xbf16>, vector<16x8xbf16>, vector<16x8xbf16> -> vector<16x24xbf16>
    %c0_6 = arith.constant 0 : index
    %c0_7 = arith.constant 0 : index
    %14 = vector.load %arg3[%c0_6, %c0_7] : memref<24x16xbf16, #tpu.memory_space<vmem>>, vector<24x16xbf16>
    %cst_8 = arith.constant dense<0.000000e+00> : vector<16x16xf32>
    %15 = tpu.matmul %13, %14, %cst_8 {dimension_numbers = #tpu.dot_dimension_numbers<[1], [0], [0], [1], [0, 0, 1, 1], [], []>} : vector<16x24xbf16>, vector<24x16xbf16>, vector<16x16xf32> -> vector<16x16xf32>
    %c0_9 = arith.constant 0 : index
    %c0_10 = arith.constant 0 : index
    %16 = vector.load %arg4[%c0_9, %c0_10] : memref<1x16xf32, #tpu.memory_space<vmem>>, vector<1x16xf32>
    %17 = vector.broadcast %16 : vector<1x16xf32> to vector<16x16xf32>
    %18 = arith.addf %15, %17 : vector<16x16xf32>
    %cst_11 = arith.constant 0.000000e+00 : f32
    %19 = vector.broadcast %cst_11 : f32 to vector<16x16xf32>
    %20 = arith.maximumf %18, %19 : vector<16x16xf32>
    %21 = vector.broadcast %1 : vector<16x1xf32> to vector<16x16xf32>
    %22 = arith.mulf %20, %21 : vector<16x16xf32>
    %23 = arith.truncf %22 : vector<16x16xf32> to vector<16x16xbf16>
    %cst_12 = arith.constant 0.000000e+00 : bf16
    %24 = vector.broadcast %cst_12 : bf16 to vector<1x16xbf16>
    %25 = vector.extract_strided_slice %23 {offsets = [0, 0], sizes = [15, 16], strides = [1, 1]} : vector<16x16xbf16> to vector<15x16xbf16>
    %26 = tpu.concatenate %24, %25 in 0 : vector<1x16xbf16>, vector<15x16xbf16> -> vector<16x16xbf16>
    %27 = vector.extract_strided_slice %23 {offsets = [1, 0], sizes = [15, 16], strides = [1, 1]} : vector<16x16xbf16> to vector<15x16xbf16>
    %cst_13 = arith.constant 0.000000e+00 : bf16
    %28 = vector.broadcast %cst_13 : bf16 to vector<1x16xbf16>
    %29 = tpu.concatenate %27, %28 in 0 : vector<15x16xbf16>, vector<1x16xbf16> -> vector<16x16xbf16>
    %30 = tpu.concatenate %26, %23, %29 in 1 : vector<16x16xbf16>, vector<16x16xbf16>, vector<16x16xbf16> -> vector<16x48xbf16>
    %c0_14 = arith.constant 0 : index
    %c0_15 = arith.constant 0 : index
    %31 = vector.load %arg5[%c0_14, %c0_15] : memref<48x16xbf16, #tpu.memory_space<vmem>>, vector<48x16xbf16>
    %cst_16 = arith.constant dense<0.000000e+00> : vector<16x16xf32>
    %32 = tpu.matmul %30, %31, %cst_16 {dimension_numbers = #tpu.dot_dimension_numbers<[1], [0], [0], [1], [0, 0, 1, 1], [], []>} : vector<16x48xbf16>, vector<48x16xbf16>, vector<16x16xf32> -> vector<16x16xf32>
    %c0_17 = arith.constant 0 : index
    %c0_18 = arith.constant 0 : index
    %33 = vector.load %arg6[%c0_17, %c0_18] : memref<1x16xf32, #tpu.memory_space<vmem>>, vector<1x16xf32>
    %34 = vector.broadcast %33 : vector<1x16xf32> to vector<16x16xf32>
    %35 = arith.addf %32, %34 : vector<16x16xf32>
    %36 = vector.broadcast %1 : vector<16x1xf32> to vector<16x16xf32>
    %37 = arith.mulf %35, %36 : vector<16x16xf32>
    %38 = arith.truncf %5 : vector<16x8xf32> to vector<16x8xbf16>
    %c0_19 = arith.constant 0 : index
    %c0_20 = arith.constant 0 : index
    %39 = vector.load %arg9[%c0_19, %c0_20] : memref<8x16xbf16, #tpu.memory_space<vmem>>, vector<8x16xbf16>
    %cst_21 = arith.constant dense<0.000000e+00> : vector<16x16xf32>
    %40 = tpu.matmul %38, %39, %cst_21 {dimension_numbers = #tpu.dot_dimension_numbers<[1], [0], [0], [1], [0, 0, 1, 1], [], []>} : vector<16x8xbf16>, vector<8x16xbf16>, vector<16x16xf32> -> vector<16x16xf32>
    %c0_22 = arith.constant 0 : index
    %c0_23 = arith.constant 0 : index
    %41 = vector.load %arg10[%c0_22, %c0_23] : memref<1x16xf32, #tpu.memory_space<vmem>>, vector<1x16xf32>
    %42 = vector.broadcast %41 : vector<1x16xf32> to vector<16x16xf32>
    %43 = arith.addf %40, %42 : vector<16x16xf32>
    %44 = arith.addf %43, %37 : vector<16x16xf32>
    %cst_24 = arith.constant dense<0.000000e+00> : vector<16xf32>
    %45 = vector.multi_reduction <add>, %44, %cst_24 [1] : vector<16x16xf32> to vector<16xf32>
    %46 = vector.shape_cast %45 : vector<16xf32> to vector<16x1xf32>
    %cst_25 = arith.constant 1.600000e+01 : f32
    %47 = vector.broadcast %cst_25 : f32 to vector<16x1xf32>
    %48 = arith.divf %46, %47 : vector<16x1xf32>
    %49 = vector.broadcast %48 : vector<16x1xf32> to vector<16x16xf32>
    %50 = arith.subf %44, %49 : vector<16x16xf32>
    %51 = arith.mulf %50, %50 : vector<16x16xf32>
    %cst_26 = arith.constant dense<0.000000e+00> : vector<16xf32>
    %52 = vector.multi_reduction <add>, %51, %cst_26 [1] : vector<16x16xf32> to vector<16xf32>
    %53 = vector.shape_cast %52 : vector<16xf32> to vector<16x1xf32>
    %cst_27 = arith.constant 1.600000e+01 : f32
    %54 = vector.broadcast %cst_27 : f32 to vector<16x1xf32>
    %55 = arith.divf %53, %54 : vector<16x1xf32>
    %56 = vector.broadcast %48 : vector<16x1xf32> to vector<16x16xf32>
    %57 = arith.subf %44, %56 : vector<16x16xf32>
    %cst_28 = arith.constant 9.99999974E-5 : f32
    %58 = vector.broadcast %cst_28 : f32 to vector<16x1xf32>
    %59 = arith.addf %55, %58 : vector<16x1xf32>
    %60 = math.rsqrt %59 : vector<16x1xf32>
    %61 = vector.broadcast %60 : vector<16x1xf32> to vector<16x16xf32>
    %62 = arith.mulf %57, %61 : vector<16x16xf32>
    %c0_29 = arith.constant 0 : index
    %c0_30 = arith.constant 0 : index
    %63 = vector.load %arg7[%c0_29, %c0_30] : memref<1x16xf32, #tpu.memory_space<vmem>>, vector<1x16xf32>
    %64 = vector.broadcast %63 : vector<1x16xf32> to vector<16x16xf32>
    %65 = arith.mulf %62, %64 : vector<16x16xf32>
    %c0_31 = arith.constant 0 : index
    %c0_32 = arith.constant 0 : index
    %66 = vector.load %arg8[%c0_31, %c0_32] : memref<1x16xf32, #tpu.memory_space<vmem>>, vector<1x16xf32>
    %67 = vector.broadcast %66 : vector<1x16xf32> to vector<16x16xf32>
    %68 = arith.addf %65, %67 : vector<16x16xf32>
    %69 = vector.broadcast %1 : vector<16x1xf32> to vector<16x16xf32>
    %70 = arith.mulf %68, %69 : vector<16x16xf32>
    %c0_33 = arith.constant 0 : index
    %c0_34 = arith.constant 0 : index
    %c0_35 = arith.constant 0 : index
    %71 = vector.load %arg11[%c0_33, %c0_34, %c0_35] : memref<1x16x16xf32, #tpu.memory_space<vmem>>, vector<1x16x16xf32>
    %72 = vector.shape_cast %71 : vector<1x16x16xf32> to vector<16x16xf32>
    %73 = vector.shape_cast %70 : vector<16x16xf32> to vector<1x16x16xf32>
    tpu.vector_store %arg11[%c0_33, %c0_34, %c0_35], %73 {strides = array<i32>} : memref<1x16x16xf32, #tpu.memory_space<vmem>>, vector<1x16x16xf32>,
    return
  }
  func.func @transform_0(%arg0: i32) -> (i32, i32, i32) {
    %c0_i32 = arith.constant 0 : i32
    %c0_i32_0 = arith.constant 0 : i32
    %c0_i32_1 = arith.constant 0 : i32
    return %arg0, %c0_i32, %c0_i32_0 : i32, i32, i32
  }
  func.func @transform_1(%arg0: i32) -> (i32, i32, i32) {
    %c0_i32 = arith.constant 0 : i32
    %c0_i32_0 = arith.constant 0 : i32
    %c0_i32_1 = arith.constant 0 : i32
    return %arg0, %c0_i32, %c0_i32_0 : i32, i32, i32
  }
  func.func @transform_2(%arg0: i32) -> (i32, i32) {
    %c0_i32 = arith.constant 0 : i32
    %c0_i32_0 = arith.constant 0 : i32
    %c0_i32_1 = arith.constant 0 : i32
    return %c0_i32, %c0_i32_0 : i32, i32
  }
  func.func @transform_3(%arg0: i32) -> (i32, i32) {
    %c0_i32 = arith.constant 0 : i32
    %c0_i32_0 = arith.constant 0 : i32
    %c0_i32_1 = arith.constant 0 : i32
    return %c0_i32, %c0_i32_0 : i32, i32
  }
  func.func @transform_4(%arg0: i32) -> (i32, i32) {
    %c0_i32 = arith.constant 0 : i32
    %c0_i32_0 = arith.constant 0 : i32
    %c0_i32_1 = arith.constant 0 : i32
    return %c0_i32, %c0_i32_0 : i32, i32
  }
  func.func @transform_5(%arg0: i32) -> (i32, i32) {
    %c0_i32 = arith.constant 0 : i32
    %c0_i32_0 = arith.constant 0 : i32
    %c0_i32_1 = arith.constant 0 : i32
    return %c0_i32, %c0_i32_0 : i32, i32
  }
  func.func @transform_6(%arg0: i32) -> (i32, i32) {
    %c0_i32 = arith.constant 0 : i32
    %c0_i32_0 = arith.constant 0 : i32
    %c0_i32_1 = arith.constant 0 : i32
    return %c0_i32, %c0_i32_0 : i32, i32
  }
  func.func @transform_7(%arg0: i32) -> (i32, i32) {
    %c0_i32 = arith.constant 0 : i32
    %c0_i32_0 = arith.constant 0 : i32
    %c0_i32_1 = arith.constant 0 : i32
    return %c0_i32, %c0_i32_0 : i32, i32
  }
  func.func @transform_8(%arg0: i32) -> (i32, i32) {
    %c0_i32 = arith.constant 0 : i32
    %c0_i32_0 = arith.constant 0 : i32
    %c0_i32_1 = arith.constant 0 : i32
    return %c0_i32, %c0_i32_0 : i32, i32
  }
  func.func @transform_9(%arg0: i32) -> (i32, i32) {
    %c0_i32 = arith.constant 0 : i32
    %c0_i32_0 = arith.constant 0 : i32
    %c0_i32_1 = arith.constant 0 : i32
    return %c0_i32, %c0_i32_0 : i32, i32
  }
  func.func @transform_10(%arg0: i32) -> (i32, i32, i32) {
    %c0_i32 = arith.constant 0 : i32
    %c0_i32_0 = arith.constant 0 : i32
    %c0_i32_1 = arith.constant 0 : i32
    return %arg0, %c0_i32, %c0_i32_0 : i32, i32, i32
  }
}

</mosaic_0001>

<llo_original>
// kernel: _lambda_.5
$region0: #{_lambda_.5}
  #allocation0 [shape = 'u32[]', space=smem, size = 0x4, offset = 0x4, fixed_abs, tag = 'smem constant byte address 0x4 - core index']
  #allocation1 [shape = 'u32[144,128]{1,0:T(1,128)}', space=vmem, size = 0x12000, scoped, tag = 'internal scratch']
  %s0 = inlined_call_operand.vmem [shape: f32[2,16,8], index: 0, kind: input, shape index: {}]
  %s1 = inlined_call_operand.vmem [shape: f32[2,16,1], index: 1, kind: input, shape index: {}]
  %s2 = inlined_call_operand.vmem [shape: bf16[24,16], index: 2, kind: input, shape index: {}]
  %s3 = inlined_call_operand.vmem [shape: f32[1,16], index: 3, kind: input, shape index: {}]
  %s4 = inlined_call_operand.vmem [shape: bf16[48,8], index: 4, kind: input, shape index: {}]
  %s5 = inlined_call_operand.vmem [shape: f32[1,8], index: 5, kind: input, shape index: {}]
  %s6 = inlined_call_operand.vmem [shape: f32[1,8], index: 6, kind: input, shape index: {}]
  %s7 = inlined_call_operand.vmem [shape: f32[1,8], index: 7, kind: input, shape index: {}]
  %s8 = inlined_call_operand.vmem [shape: f32[2,16,8], index: 8, kind: output, shape index: {}]
  %s9 = sld [smem:[#allocation0]]
  $region65: #{_lambda_.5} parent=0
    _
  %s11 = ssub.s32 1, %s9
  %s12 = scalar_select 0, %s11, %s9
  loop: start=0, step=1, limit=4
  $region2: #{_lambda_.5} parent=0 // loop_pre_header
    _
  $region3: #{_lambda_.5} parent=0 // loop_header
    %s14 = sphi 0, %s18
    %p15 = scmp.ge.s32.totalorder %s14, 4
    %s24 = sphi 0, %s26
    %s27 = sphi 0, %s24
    %s28 = sphi 0, %s27
    %s44 = sphi 0, %s28
    %s50 = sphi 0, %s52
    %s53 = sphi 0, %s50
    %s54 = sphi 0, %s53
    %s70 = sphi 0, %s54
    %s74 = sphi 0, %s74
    %s76 = sphi 0, %s74
    %s77 = sphi 0, %s76
    %s91 = sphi 0, %s77
    %s95 = sphi 0, %s95
    %s97 = sphi 0, %s95
    %s98 = sphi 0, %s97
    %s112 = sphi 0, %s98
    %s116 = sphi 0, %s116
    %s118 = sphi 0, %s116
    %s119 = sphi 0, %s118
    %s133 = sphi 0, %s119
    %s137 = sphi 0, %s137
    %s139 = sphi 0, %s137
    %s140 = sphi 0, %s139
    %s154 = sphi 0, %s140
    %s158 = sphi 0, %s158
    %s160 = sphi 0, %s158
    %s161 = sphi 0, %s160
    %s175 = sphi 0, %s161
    %s179 = sphi 0, %s179
    %s181 = sphi 0, %s179
    %s182 = sphi 0, %s181
    %s196 = sphi 0, %s182
    %s202 = sphi 0, %s204
    %s205 = sphi 0, %s202
    %s206 = sphi 0, %s205
    %s222 = sphi 0, %s206
  $region4: #{_lambda_.5} parent=0 // loop_header_branch
    %17 = sbr.rel (%p15) target = $region8
  $region5: #{_lambda_.5} parent=0 // loop_body
    %s19 = ssub.s32 %s14, 1
    %s20 = ssub.s32 %s14, 2
    %s21 = sadd.s32 %s14, 1
    %s22 = ssub.s32 %s14, %s21
    %p23 = scmp.eq.s32.totalorder %s22, 0
    %s25 = sadd.s32 %s24, 1
    %s26 = scalar_select %p23, %s24, %s25
    %p29 = pneg %p23
    %p30 = scmp.eq.s32.totalorder %s14, 1
    %p31 = por %p29, %p30
    %p32 = scmp.ne.s32.totalorder %s24, %s27
    %p33 = scmp.eq.s32.totalorder %s14, 0
    %p34 = por %p32, %p33
    %p35 = scmp.ne.s32.totalorder %s24, %s27
    %p36 = scmp.eq.s32.totalorder %s19, 1
    %p37 = por %p35, %p36
    %p38 = scmp.ne.s32.totalorder %s27, %s28
    %p39 = scmp.eq.s32.totalorder %s19, 0
    %p40 = por %p38, %p39
    %p41 = scmp.ne.s32.totalorder %s27, %s28
    %p42 = scmp.eq.s32.totalorder %s20, 1
    %p43 = por %p41, %p42
    %p45 = scmp.ne.s32.totalorder %s28, %s44
    %p46 = scmp.eq.s32.totalorder %s20, 0
    %p47 = por %p45, %p46
    %s48 = ssub.s32 %s14, %s21
    %p49 = scmp.eq.s32.totalorder %s48, 0
    %s51 = sadd.s32 %s50, 1
    %s52 = scalar_select %p49, %s50, %s51
    %p55 = pneg %p49
    %p56 = scmp.eq.s32.totalorder %s14, 1
    %p57 = por %p55, %p56
    %p58 = scmp.ne.s32.totalorder %s50, %s53
    %p59 = scmp.eq.s32.totalorder %s14, 0
    %p60 = por %p58, %p59
    %p61 = scmp.ne.s32.totalorder %s50, %s53
    %p62 = scmp.eq.s32.totalorder %s19, 1
    %p63 = por %p61, %p62
    %p64 = scmp.ne.s32.totalorder %s53, %s54
    %p65 = scmp.eq.s32.totalorder %s19, 0
    %p66 = por %p64, %p65
    %p67 = scmp.ne.s32.totalorder %s53, %s54
    %p68 = scmp.eq.s32.totalorder %s20, 1
    %p69 = por %p67, %p68
    %p71 = scmp.ne.s32.totalorder %s54, %s70
    %p72 = scmp.eq.s32.totalorder %s20, 0
    %p73 = por %p71, %p72
    %s75 = sadd.s32 %s74, 1
    %p78 = scmp.eq.s32.totalorder %s14, 1
    %p79 = scmp.ne.s32.totalorder %s74, %s76
    %p80 = scmp.eq.s32.totalorder %s14, 0
    %p81 = por %p79, %p80
    %p82 = scmp.ne.s32.totalorder %s74, %s76
    %p83 = scmp.eq.s32.totalorder %s19, 1
    %p84 = por %p82, %p83
    %p85 = scmp.ne.s32.totalorder %s76, %s77
    %p86 = scmp.eq.s32.totalorder %s19, 0
    %p87 = por %p85, %p86
    %p88 = scmp.ne.s32.totalorder %s76, %s77
    %p89 = scmp.eq.s32.totalorder %s20, 1
    %p90 = por %p88, %p89
    %p92 = scmp.ne.s32.totalorder %s77, %s91
    %p93 = scmp.eq.s32.totalorder %s20, 0
    %p94 = por %p92, %p93
    %s96 = sadd.s32 %s95, 1
    %p99 = scmp.eq.s32.totalorder %s14, 1
    %p100 = scmp.ne.s32.totalorder %s95, %s97
    %p101 = scmp.eq.s32.totalorder %s14, 0
    %p102 = por %p100, %p101
    %p103 = scmp.ne.s32.totalorder %s95, %s97
    %p104 = scmp.eq.s32.totalorder %s19, 1
    %p105 = por %p103, %p104
    %p106 = scmp.ne.s32.totalorder %s97, %s98
    %p107 = scmp.eq.s32.totalorder %s19, 0
    %p108 = por %p106, %p107
    %p109 = scmp.ne.s32.totalorder %s97, %s98
    %p110 = scmp.eq.s32.totalorder %s20, 1
    %p111 = por %p109, %p110
    %p113 = scmp.ne.s32.totalorder %s98, %s112
    %p114 = scmp.eq.s32.totalorder %s20, 0
    %p115 = por %p113, %p114
    %s117 = sadd.s32 %s116, 1
    %p120 = scmp.eq.s32.totalorder %s14, 1
    %p121 = scmp.ne.s32.totalorder %s116, %s118
    %p122 = scmp.eq.s32.totalorder %s14, 0
    %p123 = por %p121, %p122
    %p124 = scmp.ne.s32.totalorder %s116, %s118
    %p125 = scmp.eq.s32.totalorder %s19, 1
    %p126 = por %p124, %p125
    %p127 = scmp.ne.s32.totalorder %s118, %s119
    %p128 = scmp.eq.s32.totalorder %s19, 0
    %p129 = por %p127, %p128
    %p130 = scmp.ne.s32.totalorder %s118, %s119
    %p131 = scmp.eq.s32.totalorder %s20, 1
    %p132 = por %p130, %p131
    %p134 = scmp.ne.s32.totalorder %s119, %s133
    %p135 = scmp.eq.s32.totalorder %s20, 0
    %p136 = por %p134, %p135
    %s138 = sadd.s32 %s137, 1
    %p141 = scmp.eq.s32.totalorder %s14, 1
    %p142 = scmp.ne.s32.totalorder %s137, %s139
    %p143 = scmp.eq.s32.totalorder %s14, 0
    %p144 = por %p142, %p143
    %p145 = scmp.ne.s32.totalorder %s137, %s139
    %p146 = scmp.eq.s32.totalorder %s19, 1
    %p147 = por %p145, %p146
    %p148 = scmp.ne.s32.totalorder %s139, %s140
    %p149 = scmp.eq.s32.totalorder %s19, 0
    %p150 = por %p148, %p149
    %p151 = scmp.ne.s32.totalorder %s139, %s140
    %p152 = scmp.eq.s32.totalorder %s20, 1
    %p153 = por %p151, %p152
    %p155 = scmp.ne.s32.totalorder %s140, %s154
    %p156 = scmp.eq.s32.totalorder %s20, 0
    %p157 = por %p155, %p156
    %s159 = sadd.s32 %s158, 1
    %p162 = scmp.eq.s32.totalorder %s14, 1
    %p163 = scmp.ne.s32.totalorder %s158, %s160
    %p164 = scmp.eq.s32.totalorder %s14, 0
    %p165 = por %p163, %p164
    %p166 = scmp.ne.s32.totalorder %s158, %s160
    %p167 = scmp.eq.s32.totalorder %s19, 1
    %p168 = por %p166, %p167
    %p169 = scmp.ne.s32.totalorder %s160, %s161
    %p170 = scmp.eq.s32.totalorder %s19, 0
    %p171 = por %p169, %p170
    %p172 = scmp.ne.s32.totalorder %s160, %s161
    %p173 = scmp.eq.s32.totalorder %s20, 1
    %p174 = por %p172, %p173
    %p176 = scmp.ne.s32.totalorder %s161, %s175
    %p177 = scmp.eq.s32.totalorder %s20, 0
    %p178 = por %p176, %p177
    %s180 = sadd.s32 %s179, 1
    %p183 = scmp.eq.s32.totalorder %s14, 1
    %p184 = scmp.ne.s32.totalorder %s179, %s181
    %p185 = scmp.eq.s32.totalorder %s14, 0
    %p186 = por %p184, %p185
    %p187 = scmp.ne.s32.totalorder %s179, %s181
    %p188 = scmp.eq.s32.totalorder %s19, 1
    %p189 = por %p187, %p188
    %p190 = scmp.ne.s32.totalorder %s181, %s182
    %p191 = scmp.eq.s32.totalorder %s19, 0
    %p192 = por %p190, %p191
    %p193 = scmp.ne.s32.totalorder %s181, %s182
    %p194 = scmp.eq.s32.totalorder %s20, 1
    %p195 = por %p193, %p194
    %p197 = scmp.ne.s32.totalorder %s182, %s196
    %p198 = scmp.eq.s32.totalorder %s20, 0
    %p199 = por %p197, %p198
    %s200 = ssub.s32 %s14, %s21
    %p201 = scmp.eq.s32.totalorder %s200, 0
    %s203 = sadd.s32 %s202, 1
    %s204 = scalar_select %p201, %s202, %s203
    %p207 = pneg %p201
    %p208 = scmp.eq.s32.totalorder %s14, 1
    %p209 = por %p207, %p208
    %p210 = scmp.ne.s32.totalorder %s202, %s205
    %p211 = scmp.eq.s32.totalorder %s14, 0
    %p212 = por %p210, %p211
    %p213 = scmp.ne.s32.totalorder %s202, %s205
    %p214 = scmp.eq.s32.totalorder %s19, 1
    %p215 = por %p213, %p214
    %p216 = scmp.ne.s32.totalorder %s205, %s206
    %p217 = scmp.eq.s32.totalorder %s19, 0
    %p218 = por %p216, %p217
    %p219 = scmp.ne.s32.totalorder %s205, %s206
    %p220 = scmp.eq.s32.totalorder %s20, 1
    %p221 = por %p219, %p220
    %p223 = scmp.ne.s32.totalorder %s206, %s222
    %p224 = scmp.eq.s32.totalorder %s20, 0
    %p225 = por %p223, %p224
    %p226 = scmp.le.s32.totalorder 1, %s14
    %p227 = scmp.lt.s32.totalorder %s14, 3
    %p228 = pnand %p226, %p227
    %p229 = pneg %p228
    // Predicated region
    $region9: #{_lambda_.5} parent=5 // pred_check
      _
    $region10: #{_lambda_.5} parent=5 // pred_check_branch
      %231 = sbr.rel (%p228) target = $region12
    $region11: #{_lambda_.5} parent=5 // pred_region
      %s232 = ssub.s32 %s14, 1
      // Predicated region
      $region13: #{_lambda_.5} parent=11 // pred_check
        %p233 = pneg %p87
      $region14: #{_lambda_.5} parent=11 // pred_check_branch
        %235 = sbr.rel (%p233) target = $region16
      $region15: #{_lambda_.5} parent=11 // pred_region
        _
      $region16: #{_lambda_.5} parent=11 // pred_fallthru
        _
      // Predicated region
      $region17: #{_lambda_.5} parent=11 // pred_check
        %p236 = pneg %p108
      $region18: #{_lambda_.5} parent=11 // pred_check_branch
        %238 = sbr.rel (%p236) target = $region20
      $region19: #{_lambda_.5} parent=11 // pred_region
        _
      $region20: #{_lambda_.5} parent=11 // pred_fallthru
        _
      // Predicated region
      $region21: #{_lambda_.5} parent=11 // pred_check
        %p239 = pneg %p129
      $region22: #{_lambda_.5} parent=11 // pred_check_branch
        %241 = sbr.rel (%p239) target = $region24
      $region23: #{_lambda_.5} parent=11 // pred_region
        _
      $region24: #{_lambda_.5} parent=11 // pred_fallthru
        _
      // Predicated region
      $region25: #{_lambda_.5} parent=11 // pred_check
        %p242 = pneg %p150
      $region26: #{_lambda_.5} parent=11 // pred_check_branch
        %244 = sbr.rel (%p242) target = $region28
      $region27: #{_lambda_.5} parent=11 // pred_region
        _
      $region28: #{_lambda_.5} parent=11 // pred_fallthru
        _
      // Predicated region
      $region29: #{_lambda_.5} parent=11 // pred_check
        %p245 = pneg %p171
      $region30: #{_lambda_.5} parent=11 // pred_check_branch
        %247 = sbr.rel (%p245) target = $region32
      $region31: #{_lambda_.5} parent=11 // pred_region
        _
      $region32: #{_lambda_.5} parent=11 // pred_fallthru
        _
      // Predicated region
      $region33: #{_lambda_.5} parent=11 // pred_check
        %p248 = pneg %p192
      $region34: #{_lambda_.5} parent=11 // pred_check_branch
        %250 = sbr.rel (%p248) target = $region36
      $region35: #{_lambda_.5} parent=11 // pred_region
        _
      $region36: #{_lambda_.5} parent=11 // pred_fallthru
        _
    $region12: #{_lambda_.5} parent=5 // pred_fallthru
      _
    %p251 = scmp.lt.s32.totalorder %s14, 2
    // Predicated region
    $region37: #{_lambda_.5} parent=5 // pred_check
      %p252 = pneg %p251
    $region38: #{_lambda_.5} parent=5 // pred_check_branch
      %254 = sbr.rel (%p252) target = $region40
    $region39: #{_lambda_.5} parent=5 // pred_region
      // Predicated region
      $region41: #{_lambda_.5} parent=39 // pred_check
        %p255 = pneg %p34
      $region42: #{_lambda_.5} parent=39 // pred_check_branch
        %257 = sbr.rel (%p255) target = $region44
      $region43: #{_lambda_.5} parent=39 // pred_region
        %p258 = scmp.lt.s32.totalorder %s14, 1
        %s259 = scalar_select %p258, %s14, 1
        %s260 = smul.addr %s259, 2
        %s261 = smul.addr %s260, 8
        %s262 = scalar_lea.vmem %s0, %s261
      $region44: #{_lambda_.5} parent=39 // pred_fallthru
        _
      // Predicated region
      $region45: #{_lambda_.5} parent=39 // pred_check
        %p263 = pneg %p60
      $region46: #{_lambda_.5} parent=39 // pred_check_branch
        %265 = sbr.rel (%p263) target = $region48
      $region47: #{_lambda_.5} parent=39 // pred_region
        %p266 = scmp.lt.s32.totalorder %s14, 1
        %s267 = scalar_select %p266, %s14, 1
        %s268 = smul.addr %s267, 2
        %s269 = smul.addr %s268, 8
        %s270 = scalar_lea.vmem %s1, %s269
      $region48: #{_lambda_.5} parent=39 // pred_fallthru
        _
    $region40: #{_lambda_.5} parent=5 // pred_fallthru
      _
    %p271 = scmp.le.s32.totalorder 1, %s14
    %p272 = scmp.lt.s32.totalorder %s14, 3
    %p273 = pnand %p271, %p272
    %p274 = pneg %p273
    // Predicated region
    $region49: #{_lambda_.5} parent=5 // pred_check
      _
    $region50: #{_lambda_.5} parent=5 // pred_check_branch
      %276 = sbr.rel (%p273) target = $region52
    $region51: #{_lambda_.5} parent=5 // pred_region
      %s277 = ssub.s32 %s14, 1
      %p278 = scmp.lt.s32.totalorder %s19, 1
      %s279 = scalar_select %p278, %s19, 1
      %s280 = smul.addr %s279, 2
      %s281 = smul.addr %s280, 8
      %s282 = scalar_lea.vmem %s0, %s281
      %p283 = pneg %p40
      %p284 = pneg %p37
      %p285 = scmp.lt.s32.totalorder %s19, 1
      %s286 = scalar_select %p285, %s19, 1
      %s287 = smul.addr %s286, 2
      %s288 = smul.addr %s287, 8
      %s289 = scalar_lea.vmem %s1, %s288
      %p290 = pneg %p66
      %p291 = pneg %p63
      %p292 = pneg %p87
      %p293 = pneg %p84
      %p294 = pneg %p108
      %p295 = pneg %p105
      %p296 = pneg %p129
      %p297 = pneg %p126
      %p298 = pneg %p150
      %p299 = pneg %p147
      %p300 = pneg %p171
      %p301 = pneg %p168
      %p302 = pneg %p192
      %p303 = pneg %p189
      %p304 = pneg %p218
      %p305 = pneg %p215
      %p306 = scmp.lt.s32.totalorder %s19, 1
      %s307 = scalar_select %p306, %s19, 1
      %s308 = smul.addr %s307, 2
      %s309 = smul.addr %s308, 8
      %s310 = scalar_lea.vmem %s8, %s309
      %p311 = scmp.lt.s32.totalorder %s19, 1
      %s312 = scalar_select %p311, %s19, 1
      %s313 = smul.addr %s312, 2
      %s314 = smul.addr %s313, 8
      %s315 = scalar_lea.vmem %s0, %s314
      %p316 = scmp.lt.s32.totalorder %s19, 1
      %s317 = scalar_select %p316, %s19, 1
      %s318 = smul.addr %s317, 2
      %s319 = smul.addr %s318, 8
      %s320 = scalar_lea.vmem %s1, %s319
      %p321 = scmp.lt.s32.totalorder %s19, 1
      %s322 = scalar_select %p321, %s19, 1
      %s323 = smul.addr %s322, 2
      %s324 = smul.addr %s323, 8
      %s325 = scalar_lea.vmem %s8, %s324
      %v327 = vld [vmem:[%s320] sm:$0xff]
      %v328 = vld [vmem:[%s320 + $0x8] sm:$0xff]
      %v329 = vld [vmem:[%s315] sm:$0xff]
      %v330 = vld [vmem:[%s315 + $0x8] sm:$0xff]
      %332 = vset.pattern.permute.xlu0 0
      %333 = vperm.xlu0 %332, %v327
      %v334 = vpop.permute.xlu0 %333
      %337 = vset.pattern.permute.xlu0 0
      %338 = vperm.xlu0 %337, %v328
      %v339 = vpop.permute.xlu0 %338
      %v341 = vmul.f32 %v329, %v334
      %v342 = vmul.f32 %v330, %v339
      %v343 = vpack.c.bf16 %v342, %v341
      %v345 = vshrl.u32 %v343, 16
      %v347 = vrot.slane %v345, 7
      %v348 = vshll.u32 %v343, 16
      %v350 = vor.u32 %v347, %v348
      %vm352 = vcmask 1040384
      %vm353 = vsmask.f32 256
      %vm354 = vmand %vm352, %vm353
      %v355 = vsel %vm354, 0, %v350
      %v356 = vrot.slane %v348, 1
      %v357 = vor.u32 %v345, %v356
      %vm359 = vcmask 1047552
      %vm360 = vsmask.f32 7424
      %vm361 = vmand %vm359, %vm360
      %v362 = vsel %vm361, %v357, 0
      %364 = vrot.lane.b32.xlu0 %v343, 8
      %v365 = vpop.permute.xlu0 %364
      %367 = vrot.lane.b32.xlu0 %v362, 16
      %v368 = vpop.permute.xlu0 %367
      %vm369 = vcmask 64512
      %v372 = vsel %vm369, %v355, %v365
      %vm373 = vcmask 130048
      %v375 = vsel %vm373, %v372, %v368
      %v376 = vld [vmem:[%s2] sm:$0xf]
      %v377 = vld [vmem:[%s2 + $0x4] sm:$0xf]
      %v378 = vld [vmem:[%s2 + $0x8] sm:$0xf]
      %v379 = vld [vmem:[%s3] sm:$0x1]
      %v381 = vlaneseq
      %v382 = vshrl.u32 %v381, 7
      %v383 = vsub.s32 0, %v382
      %v384 = vrot.slane %v379, %v383
      %v389 = vunpack.c.l.b16 %v376
      %v390 = vunpack.c.l.b16 %v377
      %v391 = vunpack.c.l.b16 %v378
      %v392 = vpack.c.b16 %v390, %v389
      %v393 = vpack.c.b16 %v391, %v391
      %vm395 = vcmask 195584
      %v396 = vsel %vm395, %v375, 0
      %vm398 = vcmask 1043456
      %v400 = vsel %vm398, %v393, 0
      %402 = vmatprep.subr.bf16.mxu0 0
      %403 = vmatpush1.bf16.msra.mxu0 %v392
      %404 = vmatprep.subr.bf16.mxu0 0
      %405 = vmatpush1.bf16.msra.mxu0 %v400
      %406 = vmatprep.subr.bf16.mxu0 0
      %407 = vmatpush1.bf16.msra.mxu0 0
      %408 = vmatprep.subr.bf16.mxu0 0
      %409 = vmatpush1.bf16.msra.mxu0 0
      %410 = vmatprep.subr.bf16.mxu0 0
      %411 = vmatpush1.bf16.msra.mxu0 0
      %412 = vmatprep.subr.bf16.mxu0 0
      %413 = vmatpush1.bf16.msra.mxu0 0
      %414 = vmatprep.subr.bf16.mxu0 0
      %415 = vmatpush1.bf16.msra.mxu0 0
      %416 = vmatprep.subr.bf16.mxu0 0
      %417 = vmatpush1.bf16.msra.mxu0 0
      %418 = vmatprep.subr.bf16.mxu0 0
      %419 = vmatpush1.bf16.msra.mxu0 0
      %420 = vmatprep.subr.bf16.mxu0 0
      %421 = vmatpush1.bf16.msra.mxu0 0
      %422 = vmatprep.subr.bf16.mxu0 0
      %423 = vmatpush1.bf16.msra.mxu0 0
      %424 = vmatprep.subr.bf16.mxu0 0
      %425 = vmatpush1.bf16.msra.mxu0 0
      %426 = vmatprep.subr.bf16.mxu0 0
      %427 = vmatpush1.bf16.msra.mxu0 0
      %428 = vmatprep.subr.bf16.mxu0 0
      %429 = vmatpush1.bf16.msra.mxu0 0
      %430 = vmatprep.subr.bf16.mxu0 0
      %431 = vmatpush1.bf16.msra.mxu0 0
      %432 = vmatprep.subr.bf16.mxu0 0
      %433 = vmatpush1.bf16.msra.mxu0 0
      %434 = vmatprep.mubr.bf16.mxu0 0
      %435 = vmatmul.mubr.bf16.gmra.mrb[0].mxu0 %v396
      %v436 = vpop.f32.mrb[0].mxu0
      %v437 = vadd.f32 %v384, %v436
      %v438 = vpop.f32.mrb[0].mxu0
      %v439 = vpop.f32.mrb[0].mxu0
      %v440 = vadd.f32 %v384, %v439
      %v441 = vpop.f32.mrb[0].mxu0
      %442 = vdwg.mxu0
      %v443 = vmax.f32 %v437, 0.0
      %v444 = vmax.f32 %v440, 0.0
      %v445 = vmul.f32 %v443, %v334
      %v446 = vmul.f32 %v444, %v339
      %v447 = vpack.c.bf16 %v446, %v445
      %v449 = vshrl.u32 %v447, 16
      %v451 = vrot.slane %v449, 7
      %v452 = vshll.u32 %v447, 16
      %v454 = vor.u32 %v451, %v452
      %v456 = vsel %vm354, 0, %v454
      %v457 = vrot.slane %v452, 1
      %v458 = vor.u32 %v449, %v457
      %v460 = vsel %vm361, %v458, 0
      %462 = vrot.lane.b32.xlu0 %v447, 16
      %v463 = vpop.permute.xlu0 %462
      %465 = vrot.lane.b32.xlu0 %v460, 32
      %v466 = vpop.permute.xlu0 %465
      %v469 = vsel %vm373, %v456, %v463
      %vm470 = vcmask 261120
      %v472 = vsel %vm470, %v469, %v466
      %v473 = vld [vmem:[%s4] sm:$0xf]
      %v474 = vld [vmem:[%s4 + $0x4] sm:$0xf]
      %v475 = vld [vmem:[%s4 + $0x8] sm:$0xf]
      %v476 = vld [vmem:[%s4 + $0xc] sm:$0xf]
      %v477 = vld [vmem:[%s4 + $0x10] sm:$0xf]
      %v478 = vld [vmem:[%s4 + $0x14] sm:$0xf]
      %v479 = vld [vmem:[%s5] sm:$0x1]
      %v481 = vlaneseq
      %v482 = vshrl.u32 %v481, 7
      %v483 = vsub.s32 0, %v482
      %v484 = vrot.slane %v479, %v483
      %v492 = vunpack.c.l.b16 %v473
      %v493 = vunpack.c.l.b16 %v474
      %v494 = vunpack.c.l.b16 %v475
      %v495 = vunpack.c.l.b16 %v476
      %v496 = vunpack.c.l.b16 %v477
      %v497 = vunpack.c.l.b16 %v478
      %v498 = vpack.c.b16 %v493, %v492
      %v499 = vpack.c.b16 %v495, %v494
      %v500 = vpack.c.b16 %v497, %v496
      %vm504 = vcmask 392192
      %v505 = vsel %vm504, %v472, 0
      %507 = vmatprep.subr.bf16.mxu0 0
      %508 = vmatpush1.bf16.msra.mxu0 %v498
      %509 = vmatprep.subr.bf16.mxu0 0
      %510 = vmatpush1.bf16.msra.mxu0 %v499
      %511 = vmatprep.subr.bf16.mxu0 0
      %512 = vmatpush1.bf16.msra.mxu0 %v500
      %513 = vmatprep.subr.bf16.mxu0 0
      %514 = vmatpush1.bf16.msra.mxu0 0
      %515 = vmatprep.subr.bf16.mxu0 0
      %516 = vmatpush1.bf16.msra.mxu0 0
      %517 = vmatprep.subr.bf16.mxu0 0
      %518 = vmatpush1.bf16.msra.mxu0 0
      %519 = vmatprep.subr.bf16.mxu0 0
      %520 = vmatpush1.bf16.msra.mxu0 0
      %521 = vmatprep.subr.bf16.mxu0 0
      %522 = vmatpush1.bf16.msra.mxu0 0
      %523 = vmatprep.subr.bf16.mxu0 0
      %524 = vmatpush1.bf16.msra.mxu0 0
      %525 = vmatprep.subr.bf16.mxu0 0
      %526 = vmatpush1.bf16.msra.mxu0 0
      %527 = vmatprep.subr.bf16.mxu0 0
      %528 = vmatpush1.bf16.msra.mxu0 0
      %529 = vmatprep.subr.bf16.mxu0 0
      %530 = vmatpush1.bf16.msra.mxu0 0
      %531 = vmatprep.subr.bf16.mxu0 0
      %532 = vmatpush1.bf16.msra.mxu0 0
      %533 = vmatprep.subr.bf16.mxu0 0
      %534 = vmatpush1.bf16.msra.mxu0 0
      %535 = vmatprep.subr.bf16.mxu0 0
      %536 = vmatpush1.bf16.msra.mxu0 0
      %537 = vmatprep.subr.bf16.mxu0 0
      %538 = vmatpush1.bf16.msra.mxu0 0
      %539 = vmatprep.mubr.bf16.mxu0 0
      %540 = vmatmul.mubr.bf16.gmra.mrb[0].mxu0 %v505
      %v541 = vpop.f32.mrb[0].mxu0
      %v542 = vadd.f32 %v484, %v541
      %v543 = vpop.f32.mrb[0].mxu0
      %v544 = vpop.f32.mrb[0].mxu0
      %v545 = vadd.f32 %v484, %v544
      %v546 = vpop.f32.mrb[0].mxu0
      %547 = vdwg.mxu0
      %v548 = vmul.f32 %v542, %v334
      %v549 = vmul.f32 %v545, %v339
      %v550 = vadd.f32 %v341, %v548
      %v551 = vadd.f32 %v342, %v549
      %v552 = vsel %vm369, %v550, 0.0
      %553 = vadd.xlane.f32.xlu0 %v552
      %v554 = vpop.xlane.xlu0 %553
      %v555 = vsel %vm369, %v551, 0.0
      %556 = vadd.xlane.f32.xlu0 %v555
      %v557 = vpop.xlane.xlu0 %556
      %v558 = vrcp.pop 8.0
      %v559 = vmul.f32 %v554, %v558
      %v560 = vmul.f32 %v557, %v558
      %v561 = vsub.f32 %v550, %v559
      %v562 = vsub.f32 %v551, %v560
      %v563 = vmul.f32 %v561, %v561
      %v564 = vmul.f32 %v562, %v562
      %v565 = vsel %vm369, %v563, 0.0
      %566 = vadd.xlane.f32.xlu0 %v565
      %v567 = vpop.xlane.xlu0 %566
      %v568 = vsel %vm369, %v564, 0.0
      %569 = vadd.xlane.f32.xlu0 %v568
      %v570 = vpop.xlane.xlu0 %569
      %v571 = vmul.f32 %v567, %v558
      %v572 = vmul.f32 %v570, %v558
      %v573 = vadd.f32 %v571, 0.0001
      %v574 = vadd.f32 %v572, 0.0001
      %v575 = vrsqrt.pop %v573
      %v576 = vrsqrt.pop %v574
      %v577 = vmul.f32 %v561, %v575
      %v578 = vmul.f32 %v562, %v576
      %v579 = vld [vmem:[%s6] sm:$0x1]
      %v581 = vlaneseq
      %v582 = vshrl.u32 %v581, 7
      %v583 = vsub.s32 0, %v582
      %v584 = vrot.slane %v579, %v583
      %v586 = vmul.f32 %v577, %v584
      %v587 = vmul.f32 %v578, %v584
      %v588 = vld [vmem:[%s7] sm:$0x1]
      %v590 = vlaneseq
      %v591 = vshrl.u32 %v590, 7
      %v592 = vsub.s32 0, %v591
      %v593 = vrot.slane %v588, %v592
      %v595 = vadd.f32 %v586, %v593
      %v596 = vadd.f32 %v587, %v593
      %v597 = vmul.f32 %v595, %v334
      %v598 = vmul.f32 %v596, %v339
      %599 = vst.msk [vmem:[%s325] sm:$0xff] %vm369, %v597
      %600 = vst.msk [vmem:[%s325 + $0x8] sm:$0xff] %vm369, %v598
      %p601 = scmp.lt.s32.totalorder %s19, 1
      %s602 = scalar_select %p601, %s19, 1
      %s603 = smul.addr %s602, 2
      %s604 = smul.addr %s603, 8
      %s605 = scalar_lea.vmem %s8, %s604
      // Predicated region
      $region53: #{_lambda_.5} parent=51 // pred_check
        %p606 = pneg %p215
      $region54: #{_lambda_.5} parent=51 // pred_check_branch
        %608 = sbr.rel (%p606) target = $region56
      $region55: #{_lambda_.5} parent=51 // pred_region
        _
      $region56: #{_lambda_.5} parent=51 // pred_fallthru
        _
    $region52: #{_lambda_.5} parent=5 // pred_fallthru
      _
    %p609 = scmp.le.s32.totalorder 2, %s14
    // Predicated region
    $region57: #{_lambda_.5} parent=5 // pred_check
      %p610 = pneg %p609
    $region58: #{_lambda_.5} parent=5 // pred_check_branch
      %612 = sbr.rel (%p610) target = $region60
    $region59: #{_lambda_.5} parent=5 // pred_region
      %s613 = ssub.s32 %s14, 2
      // Predicated region
      $region61: #{_lambda_.5} parent=59 // pred_check
        %p614 = pneg %p221
      $region62: #{_lambda_.5} parent=59 // pred_check_branch
        %616 = sbr.rel (%p614) target = $region64
      $region63: #{_lambda_.5} parent=59 // pred_region
        %p617 = scmp.lt.s32.totalorder %s20, 1
        %s618 = scalar_select %p617, %s20, 1
        %s619 = smul.addr %s618, 2
        %s620 = smul.addr %s619, 8
        %s621 = scalar_lea.vmem %s8, %s620
      $region64: #{_lambda_.5} parent=59 // pred_fallthru
        _
    $region60: #{_lambda_.5} parent=5 // pred_fallthru
      _
  $region6: #{_lambda_.5} parent=0 // loop_footer
    %s18 = sadd.s32 1, %s14
  $region7: #{_lambda_.5} parent=0 // loop_footer_branch
    %13 = sbr.rel target = $region3
  $region8: #{_lambda_.5} parent=0 // loop_exit
    _

// kernel: _lambda_.7
$region0: #{_lambda_.7}
  #allocation0 [shape = 'u32[]', space=smem, size = 0x4, offset = 0x4, fixed_abs, tag = 'smem constant byte address 0x4 - core index']
  #allocation1 [shape = 'u32[144,128]{1,0:T(1,128)}', space=vmem, size = 0x12000, scoped, tag = 'internal scratch']
  %s0 = inlined_call_operand.vmem [shape: f32[2,16,8], index: 0, kind: input, shape index: {}]
  %s1 = inlined_call_operand.vmem [shape: f32[2,16,1], index: 1, kind: input, shape index: {}]
  %s2 = inlined_call_operand.vmem [shape: bf16[24,16], index: 2, kind: input, shape index: {}]
  %s3 = inlined_call_operand.vmem [shape: f32[1,16], index: 3, kind: input, shape index: {}]
  %s4 = inlined_call_operand.vmem [shape: bf16[48,16], index: 4, kind: input, shape index: {}]
  %s5 = inlined_call_operand.vmem [shape: f32[1,16], index: 5, kind: input, shape index: {}]
  %s6 = inlined_call_operand.vmem [shape: f32[1,16], index: 6, kind: input, shape index: {}]
  %s7 = inlined_call_operand.vmem [shape: f32[1,16], index: 7, kind: input, shape index: {}]
  %s8 = inlined_call_operand.vmem [shape: bf16[8,16], index: 8, kind: input, shape index: {}]
  %s9 = inlined_call_operand.vmem [shape: f32[1,16], index: 9, kind: input, shape index: {}]
  %s10 = inlined_call_operand.vmem [shape: f32[2,16,16], index: 10, kind: output, shape index: {}]
  %s11 = sld [smem:[#allocation0]]
  $region73: #{_lambda_.7} parent=0
    _
  %s13 = ssub.s32 1, %s11
  %s14 = scalar_select 0, %s13, %s11
  loop: start=0, step=1, limit=4
  $region2: #{_lambda_.7} parent=0 // loop_pre_header
    _
  $region3: #{_lambda_.7} parent=0 // loop_header
    %s16 = sphi 0, %s20
    %p17 = scmp.ge.s32.totalorder %s16, 4
    %s26 = sphi 0, %s28
    %s29 = sphi 0, %s26
    %s30 = sphi 0, %s29
    %s46 = sphi 0, %s30
    %s52 = sphi 0, %s54
    %s55 = sphi 0, %s52
    %s56 = sphi 0, %s55
    %s72 = sphi 0, %s56
    %s76 = sphi 0, %s76
    %s78 = sphi 0, %s76
    %s79 = sphi 0, %s78
    %s93 = sphi 0, %s79
    %s97 = sphi 0, %s97
    %s99 = sphi 0, %s97
    %s100 = sphi 0, %s99
    %s114 = sphi 0, %s100
    %s118 = sphi 0, %s118
    %s120 = sphi 0, %s118
    %s121 = sphi 0, %s120
    %s135 = sphi 0, %s121
    %s139 = sphi 0, %s139
    %s141 = sphi 0, %s139
    %s142 = sphi 0, %s141
    %s156 = sphi 0, %s142
    %s160 = sphi 0, %s160
    %s162 = sphi 0, %s160
    %s163 = sphi 0, %s162
    %s177 = sphi 0, %s163
    %s181 = sphi 0, %s181
    %s183 = sphi 0, %s181
    %s184 = sphi 0, %s183
    %s198 = sphi 0, %s184
    %s202 = sphi 0, %s202
    %s204 = sphi 0, %s202
    %s205 = sphi 0, %s204
    %s219 = sphi 0, %s205
    %s223 = sphi 0, %s223
    %s225 = sphi 0, %s223
    %s226 = sphi 0, %s225
    %s240 = sphi 0, %s226
    %s246 = sphi 0, %s248
    %s249 = sphi 0, %s246
    %s250 = sphi 0, %s249
    %s266 = sphi 0, %s250
  $region4: #{_lambda_.7} parent=0 // loop_header_branch
    %19 = sbr.rel (%p17) target = $region8
  $region5: #{_lambda_.7} parent=0 // loop_body
    %s21 = ssub.s32 %s16, 1
    %s22 = ssub.s32 %s16, 2
    %s23 = sadd.s32 %s16, 1
    %s24 = ssub.s32 %s16, %s23
    %p25 = scmp.eq.s32.totalorder %s24, 0
    %s27 = sadd.s32 %s26, 1
    %s28 = scalar_select %p25, %s26, %s27
    %p31 = pneg %p25
    %p32 = scmp.eq.s32.totalorder %s16, 1
    %p33 = por %p31, %p32
    %p34 = scmp.ne.s32.totalorder %s26, %s29
    %p35 = scmp.eq.s32.totalorder %s16, 0
    %p36 = por %p34, %p35
    %p37 = scmp.ne.s32.totalorder %s26, %s29
    %p38 = scmp.eq.s32.totalorder %s21, 1
    %p39 = por %p37, %p38
    %p40 = scmp.ne.s32.totalorder %s29, %s30
    %p41 = scmp.eq.s32.totalorder %s21, 0
    %p42 = por %p40, %p41
    %p43 = scmp.ne.s32.totalorder %s29, %s30
    %p44 = scmp.eq.s32.totalorder %s22, 1
    %p45 = por %p43, %p44
    %p47 = scmp.ne.s32.totalorder %s30, %s46
    %p48 = scmp.eq.s32.totalorder %s22, 0
    %p49 = por %p47, %p48
    %s50 = ssub.s32 %s16, %s23
    %p51 = scmp.eq.s32.totalorder %s50, 0
    %s53 = sadd.s32 %s52, 1
    %s54 = scalar_select %p51, %s52, %s53
    %p57 = pneg %p51
    %p58 = scmp.eq.s32.totalorder %s16, 1
    %p59 = por %p57, %p58
    %p60 = scmp.ne.s32.totalorder %s52, %s55
    %p61 = scmp.eq.s32.totalorder %s16, 0
    %p62 = por %p60, %p61
    %p63 = scmp.ne.s32.totalorder %s52, %s55
    %p64 = scmp.eq.s32.totalorder %s21, 1
    %p65 = por %p63, %p64
    %p66 = scmp.ne.s32.totalorder %s55, %s56
    %p67 = scmp.eq.s32.totalorder %s21, 0
    %p68 = por %p66, %p67
    %p69 = scmp.ne.s32.totalorder %s55, %s56
    %p70 = scmp.eq.s32.totalorder %s22, 1
    %p71 = por %p69, %p70
    %p73 = scmp.ne.s32.totalorder %s56, %s72
    %p74 = scmp.eq.s32.totalorder %s22, 0
    %p75 = por %p73, %p74
    %s77 = sadd.s32 %s76, 1
    %p80 = scmp.eq.s32.totalorder %s16, 1
    %p81 = scmp.ne.s32.totalorder %s76, %s78
    %p82 = scmp.eq.s32.totalorder %s16, 0
    %p83 = por %p81, %p82
    %p84 = scmp.ne.s32.totalorder %s76, %s78
    %p85 = scmp.eq.s32.totalorder %s21, 1
    %p86 = por %p84, %p85
    %p87 = scmp.ne.s32.totalorder %s78, %s79
    %p88 = scmp.eq.s32.totalorder %s21, 0
    %p89 = por %p87, %p88
    %p90 = scmp.ne.s32.totalorder %s78, %s79
    %p91 = scmp.eq.s32.totalorder %s22, 1
    %p92 = por %p90, %p91
    %p94 = scmp.ne.s32.totalorder %s79, %s93
    %p95 = scmp.eq.s32.totalorder %s22, 0
    %p96 = por %p94, %p95
    %s98 = sadd.s32 %s97, 1
    %p101 = scmp.eq.s32.totalorder %s16, 1
    %p102 = scmp.ne.s32.totalorder %s97, %s99
    %p103 = scmp.eq.s32.totalorder %s16, 0
    %p104 = por %p102, %p103
    %p105 = scmp.ne.s32.totalorder %s97, %s99
    %p106 = scmp.eq.s32.totalorder %s21, 1
    %p107 = por %p105, %p106
    %p108 = scmp.ne.s32.totalorder %s99, %s100
    %p109 = scmp.eq.s32.totalorder %s21, 0
    %p110 = por %p108, %p109
    %p111 = scmp.ne.s32.totalorder %s99, %s100
    %p112 = scmp.eq.s32.totalorder %s22, 1
    %p113 = por %p111, %p112
    %p115 = scmp.ne.s32.totalorder %s100, %s114
    %p116 = scmp.eq.s32.totalorder %s22, 0
    %p117 = por %p115, %p116
    %s119 = sadd.s32 %s118, 1
    %p122 = scmp.eq.s32.totalorder %s16, 1
    %p123 = scmp.ne.s32.totalorder %s118, %s120
    %p124 = scmp.eq.s32.totalorder %s16, 0
    %p125 = por %p123, %p124
    %p126 = scmp.ne.s32.totalorder %s118, %s120
    %p127 = scmp.eq.s32.totalorder %s21, 1
    %p128 = por %p126, %p127
    %p129 = scmp.ne.s32.totalorder %s120, %s121
    %p130 = scmp.eq.s32.totalorder %s21, 0
    %p131 = por %p129, %p130
    %p132 = scmp.ne.s32.totalorder %s120, %s121
    %p133 = scmp.eq.s32.totalorder %s22, 1
    %p134 = por %p132, %p133
    %p136 = scmp.ne.s32.totalorder %s121, %s135
    %p137 = scmp.eq.s32.totalorder %s22, 0
    %p138 = por %p136, %p137
    %s140 = sadd.s32 %s139, 1
    %p143 = scmp.eq.s32.totalorder %s16, 1
    %p144 = scmp.ne.s32.totalorder %s139, %s141
    %p145 = scmp.eq.s32.totalorder %s16, 0
    %p146 = por %p144, %p145
    %p147 = scmp.ne.s32.totalorder %s139, %s141
    %p148 = scmp.eq.s32.totalorder %s21, 1
    %p149 = por %p147, %p148
    %p150 = scmp.ne.s32.totalorder %s141, %s142
    %p151 = scmp.eq.s32.totalorder %s21, 0
    %p152 = por %p150, %p151
    %p153 = scmp.ne.s32.totalorder %s141, %s142
    %p154 = scmp.eq.s32.totalorder %s22, 1
    %p155 = por %p153, %p154
    %p157 = scmp.ne.s32.totalorder %s142, %s156
    %p158 = scmp.eq.s32.totalorder %s22, 0
    %p159 = por %p157, %p158
    %s161 = sadd.s32 %s160, 1
    %p164 = scmp.eq.s32.totalorder %s16, 1
    %p165 = scmp.ne.s32.totalorder %s160, %s162
    %p166 = scmp.eq.s32.totalorder %s16, 0
    %p167 = por %p165, %p166
    %p168 = scmp.ne.s32.totalorder %s160, %s162
    %p169 = scmp.eq.s32.totalorder %s21, 1
    %p170 = por %p168, %p169
    %p171 = scmp.ne.s32.totalorder %s162, %s163
    %p172 = scmp.eq.s32.totalorder %s21, 0
    %p173 = por %p171, %p172
    %p174 = scmp.ne.s32.totalorder %s162, %s163
    %p175 = scmp.eq.s32.totalorder %s22, 1
    %p176 = por %p174, %p175
    %p178 = scmp.ne.s32.totalorder %s163, %s177
    %p179 = scmp.eq.s32.totalorder %s22, 0
    %p180 = por %p178, %p179
    %s182 = sadd.s32 %s181, 1
    %p185 = scmp.eq.s32.totalorder %s16, 1
    %p186 = scmp.ne.s32.totalorder %s181, %s183
    %p187 = scmp.eq.s32.totalorder %s16, 0
    %p188 = por %p186, %p187
    %p189 = scmp.ne.s32.totalorder %s181, %s183
    %p190 = scmp.eq.s32.totalorder %s21, 1
    %p191 = por %p189, %p190
    %p192 = scmp.ne.s32.totalorder %s183, %s184
    %p193 = scmp.eq.s32.totalorder %s21, 0
    %p194 = por %p192, %p193
    %p195 = scmp.ne.s32.totalorder %s183, %s184
    %p196 = scmp.eq.s32.totalorder %s22, 1
    %p197 = por %p195, %p196
    %p199 = scmp.ne.s32.totalorder %s184, %s198
    %p200 = scmp.eq.s32.totalorder %s22, 0
    %p201 = por %p199, %p200
    %s203 = sadd.s32 %s202, 1
    %p206 = scmp.eq.s32.totalorder %s16, 1
    %p207 = scmp.ne.s32.totalorder %s202, %s204
    %p208 = scmp.eq.s32.totalorder %s16, 0
    %p209 = por %p207, %p208
    %p210 = scmp.ne.s32.totalorder %s202, %s204
    %p211 = scmp.eq.s32.totalorder %s21, 1
    %p212 = por %p210, %p211
    %p213 = scmp.ne.s32.totalorder %s204, %s205
    %p214 = scmp.eq.s32.totalorder %s21, 0
    %p215 = por %p213, %p214
    %p216 = scmp.ne.s32.totalorder %s204, %s205
    %p217 = scmp.eq.s32.totalorder %s22, 1
    %p218 = por %p216, %p217
    %p220 = scmp.ne.s32.totalorder %s205, %s219
    %p221 = scmp.eq.s32.totalorder %s22, 0
    %p222 = por %p220, %p221
    %s224 = sadd.s32 %s223, 1
    %p227 = scmp.eq.s32.totalorder %s16, 1
    %p228 = scmp.ne.s32.totalorder %s223, %s225
    %p229 = scmp.eq.s32.totalorder %s16, 0
    %p230 = por %p228, %p229
    %p231 = scmp.ne.s32.totalorder %s223, %s225
    %p232 = scmp.eq.s32.totalorder %s21, 1
    %p233 = por %p231, %p232
    %p234 = scmp.ne.s32.totalorder %s225, %s226
    %p235 = scmp.eq.s32.totalorder %s21, 0
    %p236 = por %p234, %p235
    %p237 = scmp.ne.s32.totalorder %s225, %s226
    %p238 = scmp.eq.s32.totalorder %s22, 1
    %p239 = por %p237, %p238
    %p241 = scmp.ne.s32.totalorder %s226, %s240
    %p242 = scmp.eq.s32.totalorder %s22, 0
    %p243 = por %p241, %p242
    %s244 = ssub.s32 %s16, %s23
    %p245 = scmp.eq.s32.totalorder %s244, 0
    %s247 = sadd.s32 %s246, 1
    %s248 = scalar_select %p245, %s246, %s247
    %p251 = pneg %p245
    %p252 = scmp.eq.s32.totalorder %s16, 1
    %p253 = por %p251, %p252
    %p254 = scmp.ne.s32.totalorder %s246, %s249
    %p255 = scmp.eq.s32.totalorder %s16, 0
    %p256 = por %p254, %p255
    %p257 = scmp.ne.s32.totalorder %s246, %s249
    %p258 = scmp.eq.s32.totalorder %s21, 1
    %p259 = por %p257, %p258
    %p260 = scmp.ne.s32.totalorder %s249, %s250
    %p261 = scmp.eq.s32.totalorder %s21, 0
    %p262 = por %p260, %p261
    %p263 = scmp.ne.s32.totalorder %s249, %s250
    %p264 = scmp.eq.s32.totalorder %s22, 1
    %p265 = por %p263, %p264
    %p267 = scmp.ne.s32.totalorder %s250, %s266
    %p268 = scmp.eq.s32.totalorder %s22, 0
    %p269 = por %p267, %p268
    %p270 = scmp.le.s32.totalorder 1, %s16
    %p271 = scmp.lt.s32.totalorder %s16, 3
    %p272 = pnand %p270, %p271
    %p273 = pneg %p272
    // Predicated region
    $region9: #{_lambda_.7} parent=5 // pred_check
      _
    $region10: #{_lambda_.7} parent=5 // pred_check_branch
      %275 = sbr.rel (%p272) target = $region12
    $region11: #{_lambda_.7} parent=5 // pred_region
      %s276 = ssub.s32 %s16, 1
      // Predicated region
      $region13: #{_lambda_.7} parent=11 // pred_check
        %p277 = pneg %p89
      $region14: #{_lambda_.7} parent=11 // pred_check_branch
        %279 = sbr.rel (%p277) target = $region16
      $region15: #{_lambda_.7} parent=11 // pred_region
        _
      $region16: #{_lambda_.7} parent=11 // pred_fallthru
        _
      // Predicated region
      $region17: #{_lambda_.7} parent=11 // pred_check
        %p280 = pneg %p110
      $region18: #{_lambda_.7} parent=11 // pred_check_branch
        %282 = sbr.rel (%p280) target = $region20
      $region19: #{_lambda_.7} parent=11 // pred_region
        _
      $region20: #{_lambda_.7} parent=11 // pred_fallthru
        _
      // Predicated region
      $region21: #{_lambda_.7} parent=11 // pred_check
        %p283 = pneg %p131
      $region22: #{_lambda_.7} parent=11 // pred_check_branch
        %285 = sbr.rel (%p283) target = $region24
      $region23: #{_lambda_.7} parent=11 // pred_region
        _
      $region24: #{_lambda_.7} parent=11 // pred_fallthru
        _
      // Predicated region
      $region25: #{_lambda_.7} parent=11 // pred_check
        %p286 = pneg %p152
      $region26: #{_lambda_.7} parent=11 // pred_check_branch
        %288 = sbr.rel (%p286) target = $region28
      $region27: #{_lambda_.7} parent=11 // pred_region
        _
      $region28: #{_lambda_.7} parent=11 // pred_fallthru
        _
      // Predicated region
      $region29: #{_lambda_.7} parent=11 // pred_check
        %p289 = pneg %p173
      $region30: #{_lambda_.7} parent=11 // pred_check_branch
        %291 = sbr.rel (%p289) target = $region32
      $region31: #{_lambda_.7} parent=11 // pred_region
        _
      $region32: #{_lambda_.7} parent=11 // pred_fallthru
        _
      // Predicated region
      $region33: #{_lambda_.7} parent=11 // pred_check
        %p292 = pneg %p194
      $region34: #{_lambda_.7} parent=11 // pred_check_branch
        %294 = sbr.rel (%p292) target = $region36
      $region35: #{_lambda_.7} parent=11 // pred_region
        _
      $region36: #{_lambda_.7} parent=11 // pred_fallthru
        _
      // Predicated region
      $region37: #{_lambda_.7} parent=11 // pred_check
        %p295 = pneg %p215
      $region38: #{_lambda_.7} parent=11 // pred_check_branch
        %297 = sbr.rel (%p295) target = $region40
      $region39: #{_lambda_.7} parent=11 // pred_region
        _
      $region40: #{_lambda_.7} parent=11 // pred_fallthru
        _
      // Predicated region
      $region41: #{_lambda_.7} parent=11 // pred_check
        %p298 = pneg %p236
      $region42: #{_lambda_.7} parent=11 // pred_check_branch
        %300 = sbr.rel (%p298) target = $region44
      $region43: #{_lambda_.7} parent=11 // pred_region
        _
      $region44: #{_lambda_.7} parent=11 // pred_fallthru
        _
    $region12: #{_lambda_.7} parent=5 // pred_fallthru
      _
    %p301 = scmp.lt.s32.totalorder %s16, 2
    // Predicated region
    $region45: #{_lambda_.7} parent=5 // pred_check
      %p302 = pneg %p301
    $region46: #{_lambda_.7} parent=5 // pred_check_branch
      %304 = sbr.rel (%p302) target = $region48
    $region47: #{_lambda_.7} parent=5 // pred_region
      // Predicated region
      $region49: #{_lambda_.7} parent=47 // pred_check
        %p305 = pneg %p36
      $region50: #{_lambda_.7} parent=47 // pred_check_branch
        %307 = sbr.rel (%p305) target = $region52
      $region51: #{_lambda_.7} parent=47 // pred_region
        %p308 = scmp.lt.s32.totalorder %s16, 1
        %s309 = scalar_select %p308, %s16, 1
        %s310 = smul.addr %s309, 2
        %s311 = smul.addr %s310, 8
        %s312 = scalar_lea.vmem %s0, %s311
      $region52: #{_lambda_.7} parent=47 // pred_fallthru
        _
      // Predicated region
      $region53: #{_lambda_.7} parent=47 // pred_check
        %p313 = pneg %p62
      $region54: #{_lambda_.7} parent=47 // pred_check_branch
        %315 = sbr.rel (%p313) target = $region56
      $region55: #{_lambda_.7} parent=47 // pred_region
        %p316 = scmp.lt.s32.totalorder %s16, 1
        %s317 = scalar_select %p316, %s16, 1
        %s318 = smul.addr %s317, 2
        %s319 = smul.addr %s318, 8
        %s320 = scalar_lea.vmem %s1, %s319
      $region56: #{_lambda_.7} parent=47 // pred_fallthru
        _
    $region48: #{_lambda_.7} parent=5 // pred_fallthru
      _
    %p321 = scmp.le.s32.totalorder 1, %s16
    %p322 = scmp.lt.s32.totalorder %s16, 3
    %p323 = pnand %p321, %p322
    %p324 = pneg %p323
    // Predicated region
    $region57: #{_lambda_.7} parent=5 // pred_check
      _
    $region58: #{_lambda_.7} parent=5 // pred_check_branch
      %326 = sbr.rel (%p323) target = $region60
    $region59: #{_lambda_.7} parent=5 // pred_region
      %s327 = ssub.s32 %s16, 1
      %p328 = scmp.lt.s32.totalorder %s21, 1
      %s329 = scalar_select %p328, %s21, 1
      %s330 = smul.addr %s329, 2
      %s331 = smul.addr %s330, 8
      %s332 = scalar_lea.vmem %s0, %s331
      %p333 = pneg %p42
      %p334 = pneg %p39
      %p335 = scmp.lt.s32.totalorder %s21, 1
      %s336 = scalar_select %p335, %s21, 1
      %s337 = smul.addr %s336, 2
      %s338 = smul.addr %s337, 8
      %s339 = scalar_lea.vmem %s1, %s338
      %p340 = pneg %p68
      %p341 = pneg %p65
      %p342 = pneg %p89
      %p343 = pneg %p86
      %p344 = pneg %p110
      %p345 = pneg %p107
      %p346 = pneg %p131
      %p347 = pneg %p128
      %p348 = pneg %p152
      %p349 = pneg %p149
      %p350 = pneg %p173
      %p351 = pneg %p170
      %p352 = pneg %p194
      %p353 = pneg %p191
      %p354 = pneg %p215
      %p355 = pneg %p212
      %p356 = pneg %p236
      %p357 = pneg %p233
      %p358 = pneg %p262
      %p359 = pneg %p259
      %p360 = scmp.lt.s32.totalorder %s21, 1
      %s361 = scalar_select %p360, %s21, 1
      %s362 = smul.addr %s361, 2
      %s363 = smul.addr %s362, 8
      %s364 = scalar_lea.vmem %s10, %s363
      %p365 = scmp.lt.s32.totalorder %s21, 1
      %s366 = scalar_select %p365, %s21, 1
      %s367 = smul.addr %s366, 2
      %s368 = smul.addr %s367, 8
      %s369 = scalar_lea.vmem %s0, %s368
      %p370 = scmp.lt.s32.totalorder %s21, 1
      %s371 = scalar_select %p370, %s21, 1
      %s372 = smul.addr %s371, 2
      %s373 = smul.addr %s372, 8
      %s374 = scalar_lea.vmem %s1, %s373
      %p375 = scmp.lt.s32.totalorder %s21, 1
      %s376 = scalar_select %p375, %s21, 1
      %s377 = smul.addr %s376, 2
      %s378 = smul.addr %s377, 8
      %s379 = scalar_lea.vmem %s10, %s378
      %v381 = vld [vmem:[%s374] sm:$0xff]
      %v382 = vld [vmem:[%s374 + $0x8] sm:$0xff]
      %v383 = vld [vmem:[%s369] sm:$0xff]
      %v384 = vld [vmem:[%s369 + $0x8] sm:$0xff]
      %386 = vset.pattern.permute.xlu0 0
      %387 = vperm.xlu0 %386, %v381
      %v388 = vpop.permute.xlu0 %387
      %391 = vset.pattern.permute.xlu0 0
      %392 = vperm.xlu0 %391, %v382
      %v393 = vpop.permute.xlu0 %392
      %v395 = vmul.f32 %v383, %v388
      %v396 = vmul.f32 %v384, %v393
      %v397 = vpack.c.bf16 %v396, %v395
      %v399 = vshrl.u32 %v397, 16
      %v401 = vrot.slane %v399, 7
      %v402 = vshll.u32 %v397, 16
      %v404 = vor.u32 %v401, %v402
      %vm406 = vcmask 1040384
      %vm407 = vsmask.f32 256
      %vm408 = vmand %vm406, %vm407
      %v409 = vsel %vm408, 0, %v404
      %v410 = vrot.slane %v402, 1
      %v411 = vor.u32 %v399, %v410
      %vm413 = vcmask 1047552
      %vm414 = vsmask.f32 7424
      %vm415 = vmand %vm413, %vm414
      %v416 = vsel %vm415, %v411, 0
      %418 = vrot.lane.b32.xlu0 %v397, 8
      %v419 = vpop.permute.xlu0 %418
      %421 = vrot.lane.b32.xlu0 %v416, 16
      %v422 = vpop.permute.xlu0 %421
      %vm423 = vcmask 64512
      %v426 = vsel %vm423, %v409, %v419
      %vm427 = vcmask 130048
      %v429 = vsel %vm427, %v426, %v422
      %v430 = vld [vmem:[%s2] sm:$0xf]
      %v431 = vld [vmem:[%s2 + $0x4] sm:$0xf]
      %v432 = vld [vmem:[%s2 + $0x8] sm:$0xf]
      %v433 = vld [vmem:[%s3] sm:$0x1]
      %v435 = vlaneseq
      %v436 = vshrl.u32 %v435, 7
      %v437 = vsub.s32 0, %v436
      %v438 = vrot.slane %v433, %v437
      %v443 = vunpack.c.l.b16 %v430
      %v444 = vunpack.c.l.b16 %v431
      %v445 = vunpack.c.l.b16 %v432
      %v446 = vpack.c.b16 %v444, %v443
      %v447 = vpack.c.b16 %v445, %v445
      %vm449 = vcmask 195584
      %v450 = vsel %vm449, %v429, 0
      %vm452 = vcmask 1043456
      %v454 = vsel %vm452, %v447, 0
      %456 = vmatprep.subr.bf16.mxu0 0
      %457 = vmatpush1.bf16.msra.mxu0 %v446
      %458 = vmatprep.subr.bf16.mxu0 0
      %459 = vmatpush1.bf16.msra.mxu0 %v454
      %460 = vmatprep.subr.bf16.mxu0 0
      %461 = vmatpush1.bf16.msra.mxu0 0
      %462 = vmatprep.subr.bf16.mxu0 0
      %463 = vmatpush1.bf16.msra.mxu0 0
      %464 = vmatprep.subr.bf16.mxu0 0
      %465 = vmatpush1.bf16.msra.mxu0 0
      %466 = vmatprep.subr.bf16.mxu0 0
      %467 = vmatpush1.bf16.msra.mxu0 0
      %468 = vmatprep.subr.bf16.mxu0 0
      %469 = vmatpush1.bf16.msra.mxu0 0
      %470 = vmatprep.subr.bf16.mxu0 0
      %471 = vmatpush1.bf16.msra.mxu0 0
      %472 = vmatprep.subr.bf16.mxu0 0
      %473 = vmatpush1.bf16.msra.mxu0 0
      %474 = vmatprep.subr.bf16.mxu0 0
      %475 = vmatpush1.bf16.msra.mxu0 0
      %476 = vmatprep.subr.bf16.mxu0 0
      %477 = vmatpush1.bf16.msra.mxu0 0
      %478 = vmatprep.subr.bf16.mxu0 0
      %479 = vmatpush1.bf16.msra.mxu0 0
      %480 = vmatprep.subr.bf16.mxu0 0
      %481 = vmatpush1.bf16.msra.mxu0 0
      %482 = vmatprep.subr.bf16.mxu0 0
      %483 = vmatpush1.bf16.msra.mxu0 0
      %484 = vmatprep.subr.bf16.mxu0 0
      %485 = vmatpush1.bf16.msra.mxu0 0
      %486 = vmatprep.subr.bf16.mxu0 0
      %487 = vmatpush1.bf16.msra.mxu0 0
      %488 = vmatprep.mubr.bf16.mxu0 0
      %489 = vmatmul.mubr.bf16.gmra.mrb[0].mxu0 %v450
      %v490 = vpop.f32.mrb[0].mxu0
      %v491 = vadd.f32 %v438, %v490
      %v492 = vpop.f32.mrb[0].mxu0
      %v493 = vpop.f32.mrb[0].mxu0
      %v494 = vadd.f32 %v438, %v493
      %v495 = vpop.f32.mrb[0].mxu0
      %496 = vdwg.mxu0
      %v497 = vmax.f32 %v491, 0.0
      %v498 = vmax.f32 %v494, 0.0
      %v499 = vmul.f32 %v497, %v388
      %v500 = vmul.f32 %v498, %v393
      %v501 = vpack.c.bf16 %v500, %v499
      %v503 = vshrl.u32 %v501, 16
      %v505 = vrot.slane %v503, 7
      %v506 = vshll.u32 %v501, 16
      %v508 = vor.u32 %v505, %v506
      %v510 = vsel %vm408, 0, %v508
      %v511 = vrot.slane %v506, 1
      %v512 = vor.u32 %v503, %v511
      %v514 = vsel %vm415, %v512, 0
      %516 = vrot.lane.b32.xlu0 %v501, 16
      %v517 = vpop.permute.xlu0 %516
      %519 = vrot.lane.b32.xlu0 %v514, 32
      %v520 = vpop.permute.xlu0 %519
      %v523 = vsel %vm427, %v510, %v517
      %vm524 = vcmask 261120
      %v526 = vsel %vm524, %v523, %v520
      %v527 = vld [vmem:[%s4] sm:$0xf]
      %v528 = vld [vmem:[%s4 + $0x4] sm:$0xf]
      %v529 = vld [vmem:[%s4 + $0x8] sm:$0xf]
      %v530 = vld [vmem:[%s4 + $0xc] sm:$0xf]
      %v531 = vld [vmem:[%s4 + $0x10] sm:$0xf]
      %v532 = vld [vmem:[%s4 + $0x14] sm:$0xf]
      %v533 = vld [vmem:[%s5] sm:$0x1]
      %v535 = vlaneseq
      %v536 = vshrl.u32 %v535, 7
      %v537 = vsub.s32 0, %v536
      %v538 = vrot.slane %v533, %v537
      %v546 = vunpack.c.l.b16 %v527
      %v547 = vunpack.c.l.b16 %v528
      %v548 = vunpack.c.l.b16 %v529
      %v549 = vunpack.c.l.b16 %v530
      %v550 = vunpack.c.l.b16 %v531
      %v551 = vunpack.c.l.b16 %v532
      %v552 = vpack.c.b16 %v547, %v546
      %v553 = vpack.c.b16 %v549, %v548
      %v554 = vpack.c.b16 %v551, %v550
      %vm558 = vcmask 392192
      %v559 = vsel %vm558, %v526, 0
      %561 = vmatprep.subr.bf16.mxu0 0
      %562 = vmatpush1.bf16.msra.mxu0 %v552
      %563 = vmatprep.subr.bf16.mxu0 0
      %564 = vmatpush1.bf16.msra.mxu0 %v553
      %565 = vmatprep.subr.bf16.mxu0 0
      %566 = vmatpush1.bf16.msra.mxu0 %v554
      %567 = vmatprep.subr.bf16.mxu0 0
      %568 = vmatpush1.bf16.msra.mxu0 0
      %569 = vmatprep.subr.bf16.mxu0 0
      %570 = vmatpush1.bf16.msra.mxu0 0
      %571 = vmatprep.subr.bf16.mxu0 0
      %572 = vmatpush1.bf16.msra.mxu0 0
      %573 = vmatprep.subr.bf16.mxu0 0
      %574 = vmatpush1.bf16.msra.mxu0 0
      %575 = vmatprep.subr.bf16.mxu0 0
      %576 = vmatpush1.bf16.msra.mxu0 0
      %577 = vmatprep.subr.bf16.mxu0 0
      %578 = vmatpush1.bf16.msra.mxu0 0
      %579 = vmatprep.subr.bf16.mxu0 0
      %580 = vmatpush1.bf16.msra.mxu0 0
      %581 = vmatprep.subr.bf16.mxu0 0
      %582 = vmatpush1.bf16.msra.mxu0 0
      %583 = vmatprep.subr.bf16.mxu0 0
      %584 = vmatpush1.bf16.msra.mxu0 0
      %585 = vmatprep.subr.bf16.mxu0 0
      %586 = vmatpush1.bf16.msra.mxu0 0
      %587 = vmatprep.subr.bf16.mxu0 0
      %588 = vmatpush1.bf16.msra.mxu0 0
      %589 = vmatprep.subr.bf16.mxu0 0
      %590 = vmatpush1.bf16.msra.mxu0 0
      %591 = vmatprep.subr.bf16.mxu0 0
      %592 = vmatpush1.bf16.msra.mxu0 0
      %593 = vmatprep.mubr.bf16.mxu0 0
      %594 = vmatmul.mubr.bf16.gmra.mrb[0].mxu0 %v559
      %v595 = vpop.f32.mrb[0].mxu0
      %v596 = vadd.f32 %v538, %v595
      %v597 = vpop.f32.mrb[0].mxu0
      %v598 = vpop.f32.mrb[0].mxu0
      %v599 = vadd.f32 %v538, %v598
      %v600 = vpop.f32.mrb[0].mxu0
      %601 = vdwg.mxu0
      %v602 = vmul.f32 %v596, %v388
      %v603 = vmul.f32 %v599, %v393
      %v604 = vld [vmem:[%s8] sm:$0xf]
      %v605 = vld [vmem:[%s9] sm:$0x1]
      %v607 = vlaneseq
      %v608 = vshrl.u32 %v607, 7
      %v609 = vsub.s32 0, %v608
      %v610 = vrot.slane %v605, %v609
      %v612 = vsel %vm423, %v397, 0
      %v615 = vsel %vm452, %v604, 0
      %617 = vmatprep.subr.bf16.mxu0 0
      %618 = vmatpush1.bf16.msra.mxu0 %v615
      %619 = vmatprep.subr.bf16.mxu0 0
      %620 = vmatpush1.bf16.msra.mxu0 0
      %621 = vmatprep.subr.bf16.mxu0 0
      %622 = vmatpush1.bf16.msra.mxu0 0
      %623 = vmatprep.subr.bf16.mxu0 0
      %624 = vmatpush1.bf16.msra.mxu0 0
      %625 = vmatprep.subr.bf16.mxu0 0
      %626 = vmatpush1.bf16.msra.mxu0 0
      %627 = vmatprep.subr.bf16.mxu0 0
      %628 = vmatpush1.bf16.msra.mxu0 0
      %629 = vmatprep.subr.bf16.mxu0 0
      %630 = vmatpush1.bf16.msra.mxu0 0
      %631 = vmatprep.subr.bf16.mxu0 0
      %632 = vmatpush1.bf16.msra.mxu0 0
      %633 = vmatprep.subr.bf16.mxu0 0
      %634 = vmatpush1.bf16.msra.mxu0 0
      %635 = vmatprep.subr.bf16.mxu0 0
      %636 = vmatpush1.bf16.msra.mxu0 0
      %637 = vmatprep.subr.bf16.mxu0 0
      %638 = vmatpush1.bf16.msra.mxu0 0
      %639 = vmatprep.subr.bf16.mxu0 0
      %640 = vmatpush1.bf16.msra.mxu0 0
      %641 = vmatprep.subr.bf16.mxu0 0
      %642 = vmatpush1.bf16.msra.mxu0 0
      %643 = vmatprep.subr.bf16.mxu0 0
      %644 = vmatpush1.bf16.msra.mxu0 0
      %645 = vmatprep.subr.bf16.mxu0 0
      %646 = vmatpush1.bf16.msra.mxu0 0
      %647 = vmatprep.subr.bf16.mxu0 0
      %648 = vmatpush1.bf16.msra.mxu0 0
      %649 = vmatprep.mubr.bf16.mxu0 0
      %650 = vmatmul.mubr.bf16.gmra.mrb[0].mxu0 %v612
      %v651 = vpop.f32.mrb[0].mxu0
      %v652 = vadd.f32 %v610, %v651
      %v653 = vpop.f32.mrb[0].mxu0
      %v654 = vpop.f32.mrb[0].mxu0
      %v655 = vadd.f32 %v610, %v654
      %v656 = vpop.f32.mrb[0].mxu0
      %657 = vdwg.mxu0
      %v658 = vadd.f32 %v652, %v602
      %v659 = vadd.f32 %v655, %v603
      %v660 = vsel %vm427, %v658, 0.0
      %661 = vadd.xlane.f32.xlu0 %v660
      %v662 = vpop.xlane.xlu0 %661
      %v663 = vsel %vm427, %v659, 0.0
      %664 = vadd.xlane.f32.xlu0 %v663
      %v665 = vpop.xlane.xlu0 %664
      %v666 = vrcp.pop 16.0
      %v667 = vmul.f32 %v662, %v666
      %v668 = vmul.f32 %v665, %v666
      %v669 = vsub.f32 %v658, %v667
      %v670 = vsub.f32 %v659, %v668
      %v671 = vmul.f32 %v669, %v669
      %v672 = vmul.f32 %v670, %v670
      %v673 = vsel %vm427, %v671, 0.0
      %674 = vadd.xlane.f32.xlu0 %v673
      %v675 = vpop.xlane.xlu0 %674
      %v676 = vsel %vm427, %v672, 0.0
      %677 = vadd.xlane.f32.xlu0 %v676
      %v678 = vpop.xlane.xlu0 %677
      %v679 = vmul.f32 %v675, %v666
      %v680 = vmul.f32 %v678, %v666
      %v681 = vadd.f32 %v679, 0.0001
      %v682 = vadd.f32 %v680, 0.0001
      %v683 = vrsqrt.pop %v681
      %v684 = vrsqrt.pop %v682
      %v685 = vmul.f32 %v669, %v683
      %v686 = vmul.f32 %v670, %v684
      %v687 = vld [vmem:[%s6] sm:$0x1]
      %v689 = vlaneseq
      %v690 = vshrl.u32 %v689, 7
      %v691 = vsub.s32 0, %v690
      %v692 = vrot.slane %v687, %v691
      %v694 = vmul.f32 %v685, %v692
      %v695 = vmul.f32 %v686, %v692
      %v696 = vld [vmem:[%s7] sm:$0x1]
      %v698 = vlaneseq
      %v699 = vshrl.u32 %v698, 7
      %v700 = vsub.s32 0, %v699
      %v701 = vrot.slane %v696, %v700
      %v703 = vadd.f32 %v694, %v701
      %v704 = vadd.f32 %v695, %v701
      %v705 = vmul.f32 %v703, %v388
      %v706 = vmul.f32 %v704, %v393
      %707 = vst.msk [vmem:[%s379] sm:$0xff] %vm427, %v705
      %708 = vst.msk [vmem:[%s379 + $0x8] sm:$0xff] %vm427, %v706
      %p709 = scmp.lt.s32.totalorder %s21, 1
      %s710 = scalar_select %p709, %s21, 1
      %s711 = smul.addr %s710, 2
      %s712 = smul.addr %s711, 8
      %s713 = scalar_lea.vmem %s10, %s712
      // Predicated region
      $region61: #{_lambda_.7} parent=59 // pred_check
        %p714 = pneg %p259
      $region62: #{_lambda_.7} parent=59 // pred_check_branch
        %716 = sbr.rel (%p714) target = $region64
      $region63: #{_lambda_.7} parent=59 // pred_region
        _
      $region64: #{_lambda_.7} parent=59 // pred_fallthru
        _
    $region60: #{_lambda_.7} parent=5 // pred_fallthru
      _
    %p717 = scmp.le.s32.totalorder 2, %s16
    // Predicated region
    $region65: #{_lambda_.7} parent=5 // pred_check
      %p718 = pneg %p717
    $region66: #{_lambda_.7} parent=5 // pred_check_branch
      %720 = sbr.rel (%p718) target = $region68
    $region67: #{_lambda_.7} parent=5 // pred_region
      %s721 = ssub.s32 %s16, 2
      // Predicated region
      $region69: #{_lambda_.7} parent=67 // pred_check
        %p722 = pneg %p265
      $region70: #{_lambda_.7} parent=67 // pred_check_branch
        %724 = sbr.rel (%p722) target = $region72
      $region71: #{_lambda_.7} parent=67 // pred_region
        %p725 = scmp.lt.s32.totalorder %s22, 1
        %s726 = scalar_select %p725, %s22, 1
        %s727 = smul.addr %s726, 2
        %s728 = smul.addr %s727, 8
        %s729 = scalar_lea.vmem %s10, %s728
      $region72: #{_lambda_.7} parent=67 // pred_fallthru
        _
    $region68: #{_lambda_.7} parent=5 // pred_fallthru
      _
  $region6: #{_lambda_.7} parent=0 // loop_footer
    %s20 = sadd.s32 1, %s16
  $region7: #{_lambda_.7} parent=0 // loop_footer_branch
    %15 = sbr.rel target = $region3
  $region8: #{_lambda_.7} parent=0 // loop_exit
    _

// kernel: _lambda_.4
$region0: #{_lambda_.4}
  #allocation0 [shape = 'u32[]', space=smem, size = 0x4, offset = 0x4, fixed_abs, tag = 'smem constant byte address 0x4 - core index']
  #allocation1 [shape = 'u32[144,128]{1,0:T(1,128)}', space=vmem, size = 0x12000, scoped, tag = 'internal scratch']
  #allocation2 [shape = 'f32[16,8]{1,0:T(8,128)}', space=vmem, size = 0x2000, scoped, tag = 'scratch operand']
  %s0 = inlined_call_operand.vmem [shape: f32[2,16,8], index: 0, kind: input, shape index: {}]
  %s1 = inlined_call_operand.vmem [shape: f32[2,1,16], index: 1, kind: input, shape index: {}]
  %s2 = inlined_call_operand.vmem [shape: f32[2,16,1], index: 2, kind: input, shape index: {}]
  %s3 = inlined_call_operand.vmem [shape: bf16[2,8,12], index: 3, kind: input, shape index: {}]
  %s4 = inlined_call_operand.vmem [shape: f32[2,1,12], index: 4, kind: input, shape index: {}]
  %s5 = inlined_call_operand.vmem [shape: bf16[2,4,8], index: 5, kind: input, shape index: {}]
  %s6 = inlined_call_operand.vmem [shape: f32[1,8], index: 6, kind: input, shape index: {}]
  %s7 = inlined_call_operand.vmem [shape: bf16[9,4], index: 7, kind: input, shape index: {}]
  %s8 = inlined_call_operand.vmem [shape: bf16[9,4], index: 8, kind: input, shape index: {}]
  %s9 = inlined_call_operand.vmem [shape: f32[1,8], index: 9, kind: input, shape index: {}]
  %s10 = inlined_call_operand.vmem [shape: f32[1,8], index: 10, kind: input, shape index: {}]
  %s11 = inlined_call_operand.vmem [shape: f32[2,16,8], index: 11, kind: output, shape index: {}]
  %s12 = sld [smem:[#allocation0]]
  $region85: #{_lambda_.4} parent=0
    _
  %s14 = ssub.s32 1, %s12
  %s15 = scalar_select 0, %s14, %s12
  loop: start=0, step=1, limit=6
  $region2: #{_lambda_.4} parent=0 // loop_pre_header
    _
  $region3: #{_lambda_.4} parent=0 // loop_header
    %s17 = sphi 0, %s21
    %p18 = scmp.ge.s32.totalorder %s17, 6
    %s24 = sphi 0, %s36
    %s25 = sphi 0, %s32
    %s26 = sphi 0, %s24
    %s27 = sphi 0, %s25
    %s28 = sphi 0, %s26
    %s29 = sphi 0, %s27
    %s39 = sphi 0, %s41
    %s42 = sphi 0, %s39
    %s43 = sphi 0, %s42
    %s59 = sphi 0, %s43
    %s65 = sphi 0, %s67
    %s68 = sphi 0, %s65
    %s69 = sphi 0, %s68
    %s85 = sphi 0, %s69
    %s91 = sphi 0, %s93
    %s94 = sphi 0, %s91
    %s95 = sphi 0, %s94
    %s111 = sphi 0, %s95
    %s117 = sphi 0, %s119
    %s120 = sphi 0, %s117
    %s121 = sphi 0, %s120
    %s137 = sphi 0, %s121
    %s143 = sphi 0, %s145
    %s146 = sphi 0, %s143
    %s147 = sphi 0, %s146
    %s163 = sphi 0, %s147
    %s169 = sphi 0, %s171
    %s172 = sphi 0, %s169
    %s173 = sphi 0, %s172
    %s189 = sphi 0, %s173
    %s193 = sphi 0, %s193
    %s195 = sphi 0, %s193
    %s196 = sphi 0, %s195
    %s210 = sphi 0, %s196
    %s214 = sphi 0, %s214
    %s216 = sphi 0, %s214
    %s217 = sphi 0, %s216
    %s231 = sphi 0, %s217
    %s235 = sphi 0, %s235
    %s237 = sphi 0, %s235
    %s238 = sphi 0, %s237
    %s252 = sphi 0, %s238
    %s256 = sphi 0, %s256
    %s258 = sphi 0, %s256
    %s259 = sphi 0, %s258
    %s273 = sphi 0, %s259
    %s277 = sphi 0, %s277
    %s279 = sphi 0, %s277
    %s280 = sphi 0, %s279
    %s294 = sphi 0, %s280
    %s300 = sphi 0, %s302
    %s303 = sphi 0, %s300
    %s304 = sphi 0, %s303
    %s320 = sphi 0, %s304
  $region4: #{_lambda_.4} parent=0 // loop_header_branch
    %20 = sbr.rel (%p18) target = $region8
  $region5: #{_lambda_.4} parent=0 // loop_body
    %s22 = ssub.s32 %s17, 1
    %s23 = ssub.s32 %s17, 2
    %s30 = sadd.s32 1, %s25
    %p31 = scmp.ge.s32.totalorder %s30, 2
    %s32 = scalar_select %p31, 0, %s30
    %s33 = sadd.s32 1, %s24
    %s34 = scalar_select %p31, %s33, %s24
    %p35 = scmp.ge.s32.totalorder %s34, 2
    %s36 = scalar_select %p35, 0, %s34
    %s37 = ssub.s32 %s24, %s36
    %p38 = scmp.eq.s32.totalorder %s37, 0
    %s40 = sadd.s32 %s39, 1
    %s41 = scalar_select %p38, %s39, %s40
    %p44 = pneg %p38
    %p45 = scmp.eq.s32.totalorder %s17, 3
    %p46 = por %p44, %p45
    %p47 = scmp.ne.s32.totalorder %s39, %s42
    %p48 = scmp.eq.s32.totalorder %s17, 0
    %p49 = por %p47, %p48
    %p50 = scmp.ne.s32.totalorder %s39, %s42
    %p51 = scmp.eq.s32.totalorder %s22, 3
    %p52 = por %p50, %p51
    %p53 = scmp.ne.s32.totalorder %s42, %s43
    %p54 = scmp.eq.s32.totalorder %s22, 0
    %p55 = por %p53, %p54
    %p56 = scmp.ne.s32.totalorder %s42, %s43
    %p57 = scmp.eq.s32.totalorder %s23, 3
    %p58 = por %p56, %p57
    %p60 = scmp.ne.s32.totalorder %s43, %s59
    %p61 = scmp.eq.s32.totalorder %s23, 0
    %p62 = por %p60, %p61
    %s63 = ssub.s32 %s24, %s36
    %p64 = scmp.eq.s32.totalorder %s63, 0
    %s66 = sadd.s32 %s65, 1
    %s67 = scalar_select %p64, %s65, %s66
    %p70 = pneg %p64
    %p71 = scmp.eq.s32.totalorder %s17, 3
    %p72 = por %p70, %p71
    %p73 = scmp.ne.s32.totalorder %s65, %s68
    %p74 = scmp.eq.s32.totalorder %s17, 0
    %p75 = por %p73, %p74
    %p76 = scmp.ne.s32.totalorder %s65, %s68
    %p77 = scmp.eq.s32.totalorder %s22, 3
    %p78 = por %p76, %p77
    %p79 = scmp.ne.s32.totalorder %s68, %s69
    %p80 = scmp.eq.s32.totalorder %s22, 0
    %p81 = por %p79, %p80
    %p82 = scmp.ne.s32.totalorder %s68, %s69
    %p83 = scmp.eq.s32.totalorder %s23, 3
    %p84 = por %p82, %p83
    %p86 = scmp.ne.s32.totalorder %s69, %s85
    %p87 = scmp.eq.s32.totalorder %s23, 0
    %p88 = por %p86, %p87
    %s89 = ssub.s32 %s24, %s36
    %p90 = scmp.eq.s32.totalorder %s89, 0
    %s92 = sadd.s32 %s91, 1
    %s93 = scalar_select %p90, %s91, %s92
    %p96 = pneg %p90
    %p97 = scmp.eq.s32.totalorder %s17, 3
    %p98 = por %p96, %p97
    %p99 = scmp.ne.s32.totalorder %s91, %s94
    %p100 = scmp.eq.s32.totalorder %s17, 0
    %p101 = por %p99, %p100
    %p102 = scmp.ne.s32.totalorder %s91, %s94
    %p103 = scmp.eq.s32.totalorder %s22, 3
    %p104 = por %p102, %p103
    %p105 = scmp.ne.s32.totalorder %s94, %s95
    %p106 = scmp.eq.s32.totalorder %s22, 0
    %p107 = por %p105, %p106
    %p108 = scmp.ne.s32.totalorder %s94, %s95
    %p109 = scmp.eq.s32.totalorder %s23, 3
    %p110 = por %p108, %p109
    %p112 = scmp.ne.s32.totalorder %s95, %s111
    %p113 = scmp.eq.s32.totalorder %s23, 0
    %p114 = por %p112, %p113
    %s115 = ssub.s32 %s25, %s32
    %p116 = scmp.eq.s32.totalorder %s115, 0
    %s118 = sadd.s32 %s117, 1
    %s119 = scalar_select %p116, %s117, %s118
    %p122 = pneg %p116
    %p123 = scmp.eq.s32.totalorder %s17, 3
    %p124 = por %p122, %p123
    %p125 = scmp.ne.s32.totalorder %s117, %s120
    %p126 = scmp.eq.s32.totalorder %s17, 0
    %p127 = por %p125, %p126
    %p128 = scmp.ne.s32.totalorder %s117, %s120
    %p129 = scmp.eq.s32.totalorder %s22, 3
    %p130 = por %p128, %p129
    %p131 = scmp.ne.s32.totalorder %s120, %s121
    %p132 = scmp.eq.s32.totalorder %s22, 0
    %p133 = por %p131, %p132
    %p134 = scmp.ne.s32.totalorder %s120, %s121
    %p135 = scmp.eq.s32.totalorder %s23, 3
    %p136 = por %p134, %p135
    %p138 = scmp.ne.s32.totalorder %s121, %s137
    %p139 = scmp.eq.s32.totalorder %s23, 0
    %p140 = por %p138, %p139
    %s141 = ssub.s32 %s25, %s32
    %p142 = scmp.eq.s32.totalorder %s141, 0
    %s144 = sadd.s32 %s143, 1
    %s145 = scalar_select %p142, %s143, %s144
    %p148 = pneg %p142
    %p149 = scmp.eq.s32.totalorder %s17, 3
    %p150 = por %p148, %p149
    %p151 = scmp.ne.s32.totalorder %s143, %s146
    %p152 = scmp.eq.s32.totalorder %s17, 0
    %p153 = por %p151, %p152
    %p154 = scmp.ne.s32.totalorder %s143, %s146
    %p155 = scmp.eq.s32.totalorder %s22, 3
    %p156 = por %p154, %p155
    %p157 = scmp.ne.s32.totalorder %s146, %s147
    %p158 = scmp.eq.s32.totalorder %s22, 0
    %p159 = por %p157, %p158
    %p160 = scmp.ne.s32.totalorder %s146, %s147
    %p161 = scmp.eq.s32.totalorder %s23, 3
    %p162 = por %p160, %p161
    %p164 = scmp.ne.s32.totalorder %s147, %s163
    %p165 = scmp.eq.s32.totalorder %s23, 0
    %p166 = por %p164, %p165
    %s167 = ssub.s32 %s25, %s32
    %p168 = scmp.eq.s32.totalorder %s167, 0
    %s170 = sadd.s32 %s169, 1
    %s171 = scalar_select %p168, %s169, %s170
    %p174 = pneg %p168
    %p175 = scmp.eq.s32.totalorder %s17, 3
    %p176 = por %p174, %p175
    %p177 = scmp.ne.s32.totalorder %s169, %s172
    %p178 = scmp.eq.s32.totalorder %s17, 0
    %p179 = por %p177, %p178
    %p180 = scmp.ne.s32.totalorder %s169, %s172
    %p181 = scmp.eq.s32.totalorder %s22, 3
    %p182 = por %p180, %p181
    %p183 = scmp.ne.s32.totalorder %s172, %s173
    %p184 = scmp.eq.s32.totalorder %s22, 0
    %p185 = por %p183, %p184
    %p186 = scmp.ne.s32.totalorder %s172, %s173
    %p187 = scmp.eq.s32.totalorder %s23, 3
    %p188 = por %p186, %p187
    %p190 = scmp.ne.s32.totalorder %s173, %s189
    %p191 = scmp.eq.s32.totalorder %s23, 0
    %p192 = por %p190, %p191
    %s194 = sadd.s32 %s193, 1
    %p197 = scmp.eq.s32.totalorder %s17, 3
    %p198 = scmp.ne.s32.totalorder %s193, %s195
    %p199 = scmp.eq.s32.totalorder %s17, 0
    %p200 = por %p198, %p199
    %p201 = scmp.ne.s32.totalorder %s193, %s195
    %p202 = scmp.eq.s32.totalorder %s22, 3
    %p203 = por %p201, %p202
    %p204 = scmp.ne.s32.totalorder %s195, %s196
    %p205 = scmp.eq.s32.totalorder %s22, 0
    %p206 = por %p204, %p205
    %p207 = scmp.ne.s32.totalorder %s195, %s196
    %p208 = scmp.eq.s32.totalorder %s23, 3
    %p209 = por %p207, %p208
    %p211 = scmp.ne.s32.totalorder %s196, %s210
    %p212 = scmp.eq.s32.totalorder %s23, 0
    %p213 = por %p211, %p212
    %s215 = sadd.s32 %s214, 1
    %p218 = scmp.eq.s32.totalorder %s17, 3
    %p219 = scmp.ne.s32.totalorder %s214, %s216
    %p220 = scmp.eq.s32.totalorder %s17, 0
    %p221 = por %p219, %p220
    %p222 = scmp.ne.s32.totalorder %s214, %s216
    %p223 = scmp.eq.s32.totalorder %s22, 3
    %p224 = por %p222, %p223
    %p225 = scmp.ne.s32.totalorder %s216, %s217
    %p226 = scmp.eq.s32.totalorder %s22, 0
    %p227 = por %p225, %p226
    %p228 = scmp.ne.s32.totalorder %s216, %s217
    %p229 = scmp.eq.s32.totalorder %s23, 3
    %p230 = por %p228, %p229
    %p232 = scmp.ne.s32.totalorder %s217, %s231
    %p233 = scmp.eq.s32.totalorder %s23, 0
    %p234 = por %p232, %p233
    %s236 = sadd.s32 %s235, 1
    %p239 = scmp.eq.s32.totalorder %s17, 3
    %p240 = scmp.ne.s32.totalorder %s235, %s237
    %p241 = scmp.eq.s32.totalorder %s17, 0
    %p242 = por %p240, %p241
    %p243 = scmp.ne.s32.totalorder %s235, %s237
    %p244 = scmp.eq.s32.totalorder %s22, 3
    %p245 = por %p243, %p244
    %p246 = scmp.ne.s32.totalorder %s237, %s238
    %p247 = scmp.eq.s32.totalorder %s22, 0
    %p248 = por %p246, %p247
    %p249 = scmp.ne.s32.totalorder %s237, %s238
    %p250 = scmp.eq.s32.totalorder %s23, 3
    %p251 = por %p249, %p250
    %p253 = scmp.ne.s32.totalorder %s238, %s252
    %p254 = scmp.eq.s32.totalorder %s23, 0
    %p255 = por %p253, %p254
    %s257 = sadd.s32 %s256, 1
    %p260 = scmp.eq.s32.totalorder %s17, 3
    %p261 = scmp.ne.s32.totalorder %s256, %s258
    %p262 = scmp.eq.s32.totalorder %s17, 0
    %p263 = por %p261, %p262
    %p264 = scmp.ne.s32.totalorder %s256, %s258
    %p265 = scmp.eq.s32.totalorder %s22, 3
    %p266 = por %p264, %p265
    %p267 = scmp.ne.s32.totalorder %s258, %s259
    %p268 = scmp.eq.s32.totalorder %s22, 0
    %p269 = por %p267, %p268
    %p270 = scmp.ne.s32.totalorder %s258, %s259
    %p271 = scmp.eq.s32.totalorder %s23, 3
    %p272 = por %p270, %p271
    %p274 = scmp.ne.s32.totalorder %s259, %s273
    %p275 = scmp.eq.s32.totalorder %s23, 0
    %p276 = por %p274, %p275
    %s278 = sadd.s32 %s277, 1
    %p281 = scmp.eq.s32.totalorder %s17, 3
    %p282 = scmp.ne.s32.totalorder %s277, %s279
    %p283 = scmp.eq.s32.totalorder %s17, 0
    %p284 = por %p282, %p283
    %p285 = scmp.ne.s32.totalorder %s277, %s279
    %p286 = scmp.eq.s32.totalorder %s22, 3
    %p287 = por %p285, %p286
    %p288 = scmp.ne.s32.totalorder %s279, %s280
    %p289 = scmp.eq.s32.totalorder %s22, 0
    %p290 = por %p288, %p289
    %p291 = scmp.ne.s32.totalorder %s279, %s280
    %p292 = scmp.eq.s32.totalorder %s23, 3
    %p293 = por %p291, %p292
    %p295 = scmp.ne.s32.totalorder %s280, %s294
    %p296 = scmp.eq.s32.totalorder %s23, 0
    %p297 = por %p295, %p296
    %s298 = ssub.s32 %s24, %s36
    %p299 = scmp.eq.s32.totalorder %s298, 0
    %s301 = sadd.s32 %s300, 1
    %s302 = scalar_select %p299, %s300, %s301
    %p305 = pneg %p299
    %p306 = scmp.eq.s32.totalorder %s17, 3
    %p307 = por %p305, %p306
    %p308 = scmp.ne.s32.totalorder %s300, %s303
    %p309 = scmp.eq.s32.totalorder %s17, 0
    %p310 = por %p308, %p309
    %p311 = scmp.ne.s32.totalorder %s300, %s303
    %p312 = scmp.eq.s32.totalorder %s22, 3
    %p313 = por %p311, %p312
    %p314 = scmp.ne.s32.totalorder %s303, %s304
    %p315 = scmp.eq.s32.totalorder %s22, 0
    %p316 = por %p314, %p315
    %p317 = scmp.ne.s32.totalorder %s303, %s304
    %p318 = scmp.eq.s32.totalorder %s23, 3
    %p319 = por %p317, %p318
    %p321 = scmp.ne.s32.totalorder %s304, %s320
    %p322 = scmp.eq.s32.totalorder %s23, 0
    %p323 = por %p321, %p322
    %p324 = scmp.le.s32.totalorder 1, %s17
    %p325 = scmp.lt.s32.totalorder %s17, 5
    %p326 = pnand %p324, %p325
    %p327 = pneg %p326
    // Predicated region
    $region9: #{_lambda_.4} parent=5 // pred_check
      _
    $region10: #{_lambda_.4} parent=5 // pred_check_branch
      %329 = sbr.rel (%p326) target = $region12
    $region11: #{_lambda_.4} parent=5 // pred_region
      %s330 = ssub.s32 %s17, 1
      // Predicated region
      $region13: #{_lambda_.4} parent=11 // pred_check
        %p331 = pneg %p206
      $region14: #{_lambda_.4} parent=11 // pred_check_branch
        %333 = sbr.rel (%p331) target = $region16
      $region15: #{_lambda_.4} parent=11 // pred_region
        _
      $region16: #{_lambda_.4} parent=11 // pred_fallthru
        _
      // Predicated region
      $region17: #{_lambda_.4} parent=11 // pred_check
        %p334 = pneg %p227
      $region18: #{_lambda_.4} parent=11 // pred_check_branch
        %336 = sbr.rel (%p334) target = $region20
      $region19: #{_lambda_.4} parent=11 // pred_region
        _
      $region20: #{_lambda_.4} parent=11 // pred_fallthru
        _
      // Predicated region
      $region21: #{_lambda_.4} parent=11 // pred_check
        %p337 = pneg %p248
      $region22: #{_lambda_.4} parent=11 // pred_check_branch
        %339 = sbr.rel (%p337) target = $region24
      $region23: #{_lambda_.4} parent=11 // pred_region
        _
      $region24: #{_lambda_.4} parent=11 // pred_fallthru
        _
      // Predicated region
      $region25: #{_lambda_.4} parent=11 // pred_check
        %p340 = pneg %p269
      $region26: #{_lambda_.4} parent=11 // pred_check_branch
        %342 = sbr.rel (%p340) target = $region28
      $region27: #{_lambda_.4} parent=11 // pred_region
        _
      $region28: #{_lambda_.4} parent=11 // pred_fallthru
        _
      // Predicated region
      $region29: #{_lambda_.4} parent=11 // pred_check
        %p343 = pneg %p290
      $region30: #{_lambda_.4} parent=11 // pred_check_branch
        %345 = sbr.rel (%p343) target = $region32
      $region31: #{_lambda_.4} parent=11 // pred_region
        _
      $region32: #{_lambda_.4} parent=11 // pred_fallthru
        _
    $region12: #{_lambda_.4} parent=5 // pred_fallthru
      _
    %p346 = scmp.lt.s32.totalorder %s17, 4
    // Predicated region
    $region33: #{_lambda_.4} parent=5 // pred_check
      %p347 = pneg %p346
    $region34: #{_lambda_.4} parent=5 // pred_check_branch
      %349 = sbr.rel (%p347) target = $region36
    $region35: #{_lambda_.4} parent=5 // pred_region
      // Predicated region
      $region37: #{_lambda_.4} parent=35 // pred_check
        %p350 = pneg %p49
      $region38: #{_lambda_.4} parent=35 // pred_check_branch
        %352 = sbr.rel (%p350) target = $region40
      $region39: #{_lambda_.4} parent=35 // pred_region
        %p353 = scmp.lt.s32.totalorder %s24, 1
        %s354 = scalar_select %p353, %s24, 1
        %s355 = smul.addr %s354, 2
        %s356 = smul.addr %s355, 8
        %s357 = scalar_lea.vmem %s0, %s356
      $region40: #{_lambda_.4} parent=35 // pred_fallthru
        _
      // Predicated region
      $region41: #{_lambda_.4} parent=35 // pred_check
        %p358 = pneg %p75
      $region42: #{_lambda_.4} parent=35 // pred_check_branch
        %360 = sbr.rel (%p358) target = $region44
      $region43: #{_lambda_.4} parent=35 // pred_region
        %p361 = scmp.lt.s32.totalorder %s24, 1
        %s362 = scalar_select %p361, %s24, 1
        %s363 = scalar_lea.vmem %s1, %s362
      $region44: #{_lambda_.4} parent=35 // pred_fallthru
        _
      // Predicated region
      $region45: #{_lambda_.4} parent=35 // pred_check
        %p364 = pneg %p101
      $region46: #{_lambda_.4} parent=35 // pred_check_branch
        %366 = sbr.rel (%p364) target = $region48
      $region47: #{_lambda_.4} parent=35 // pred_region
        %p367 = scmp.lt.s32.totalorder %s24, 1
        %s368 = scalar_select %p367, %s24, 1
        %s369 = smul.addr %s368, 2
        %s370 = smul.addr %s369, 8
        %s371 = scalar_lea.vmem %s2, %s370
      $region48: #{_lambda_.4} parent=35 // pred_fallthru
        _
      // Predicated region
      $region49: #{_lambda_.4} parent=35 // pred_check
        %p372 = pneg %p127
      $region50: #{_lambda_.4} parent=35 // pred_check_branch
        %374 = sbr.rel (%p372) target = $region52
      $region51: #{_lambda_.4} parent=35 // pred_region
        %p375 = scmp.lt.s32.totalorder %s25, 1
        %s376 = scalar_select %p375, %s25, 1
        %s377 = smul.addr %s376, 4
        %s378 = scalar_lea.vmem %s3, %s377
      $region52: #{_lambda_.4} parent=35 // pred_fallthru
        _
      // Predicated region
      $region53: #{_lambda_.4} parent=35 // pred_check
        %p379 = pneg %p153
      $region54: #{_lambda_.4} parent=35 // pred_check_branch
        %381 = sbr.rel (%p379) target = $region56
      $region55: #{_lambda_.4} parent=35 // pred_region
        %p382 = scmp.lt.s32.totalorder %s25, 1
        %s383 = scalar_select %p382, %s25, 1
        %s384 = scalar_lea.vmem %s4, %s383
      $region56: #{_lambda_.4} parent=35 // pred_fallthru
        _
      // Predicated region
      $region57: #{_lambda_.4} parent=35 // pred_check
        %p385 = pneg %p179
      $region58: #{_lambda_.4} parent=35 // pred_check_branch
        %387 = sbr.rel (%p385) target = $region60
      $region59: #{_lambda_.4} parent=35 // pred_region
        %p388 = scmp.lt.s32.totalorder %s25, 1
        %s389 = scalar_select %p388, %s25, 1
        %s390 = smul.addr %s389, 2
        %s391 = scalar_lea.vmem %s5, %s390
      $region60: #{_lambda_.4} parent=35 // pred_fallthru
        _
    $region36: #{_lambda_.4} parent=5 // pred_fallthru
      _
    %p392 = scmp.le.s32.totalorder 1, %s17
    %p393 = scmp.lt.s32.totalorder %s17, 5
    %p394 = pnand %p392, %p393
    %p395 = pneg %p394
    // Predicated region
    $region61: #{_lambda_.4} parent=5 // pred_check
      _
    $region62: #{_lambda_.4} parent=5 // pred_check_branch
      %397 = sbr.rel (%p394) target = $region64
    $region63: #{_lambda_.4} parent=5 // pred_region
      %s398 = ssub.s32 %s17, 1
      %p399 = scmp.lt.s32.totalorder %s26, 1
      %s400 = scalar_select %p399, %s26, 1
      %s401 = smul.addr %s400, 2
      %s402 = smul.addr %s401, 8
      %s403 = scalar_lea.vmem %s0, %s402
      %p404 = pneg %p55
      %p405 = pneg %p52
      %p406 = scmp.lt.s32.totalorder %s26, 1
      %s407 = scalar_select %p406, %s26, 1
      %s408 = scalar_lea.vmem %s1, %s407
      %p409 = pneg %p81
      %p410 = pneg %p78
      %p411 = scmp.lt.s32.totalorder %s26, 1
      %s412 = scalar_select %p411, %s26, 1
      %s413 = smul.addr %s412, 2
      %s414 = smul.addr %s413, 8
      %s415 = scalar_lea.vmem %s2, %s414
      %p416 = pneg %p107
      %p417 = pneg %p104
      %p418 = scmp.lt.s32.totalorder %s27, 1
      %s419 = scalar_select %p418, %s27, 1
      %s420 = smul.addr %s419, 4
      %s421 = scalar_lea.vmem %s3, %s420
      %p422 = pneg %p133
      %p423 = pneg %p130
      %p424 = scmp.lt.s32.totalorder %s27, 1
      %s425 = scalar_select %p424, %s27, 1
      %s426 = scalar_lea.vmem %s4, %s425
      %p427 = pneg %p159
      %p428 = pneg %p156
      %p429 = scmp.lt.s32.totalorder %s27, 1
      %s430 = scalar_select %p429, %s27, 1
      %s431 = smul.addr %s430, 2
      %s432 = scalar_lea.vmem %s5, %s431
      %p433 = pneg %p185
      %p434 = pneg %p182
      %p435 = pneg %p206
      %p436 = pneg %p203
      %p437 = pneg %p227
      %p438 = pneg %p224
      %p439 = pneg %p248
      %p440 = pneg %p245
      %p441 = pneg %p269
      %p442 = pneg %p266
      %p443 = pneg %p290
      %p444 = pneg %p287
      %p445 = pneg %p316
      %p446 = pneg %p313
      %p447 = scmp.lt.s32.totalorder %s26, 1
      %s448 = scalar_select %p447, %s26, 1
      %s449 = smul.addr %s448, 2
      %s450 = smul.addr %s449, 8
      %s451 = scalar_lea.vmem %s11, %s450
      %p452 = scmp.lt.s32.totalorder %s26, 1
      %s453 = scalar_select %p452, %s26, 1
      %s454 = smul.addr %s453, 2
      %s455 = smul.addr %s454, 8
      %s456 = scalar_lea.vmem %s0, %s455
      %p457 = scmp.lt.s32.totalorder %s26, 1
      %s458 = scalar_select %p457, %s26, 1
      %s459 = scalar_lea.vmem %s1, %s458
      %p460 = scmp.lt.s32.totalorder %s26, 1
      %s461 = scalar_select %p460, %s26, 1
      %s462 = smul.addr %s461, 2
      %s463 = smul.addr %s462, 8
      %s464 = scalar_lea.vmem %s2, %s463
      %p465 = scmp.lt.s32.totalorder %s27, 1
      %s466 = scalar_select %p465, %s27, 1
      %s467 = smul.addr %s466, 4
      %s468 = scalar_lea.vmem %s3, %s467
      %p469 = scmp.lt.s32.totalorder %s27, 1
      %s470 = scalar_select %p469, %s27, 1
      %s471 = scalar_lea.vmem %s4, %s470
      %p472 = scmp.lt.s32.totalorder %s27, 1
      %s473 = scalar_select %p472, %s27, 1
      %s474 = smul.addr %s473, 2
      %s475 = scalar_lea.vmem %s5, %s474
      %p476 = scmp.lt.s32.totalorder %s26, 1
      %s477 = scalar_select %p476, %s26, 1
      %s478 = smul.addr %s477, 2
      %s479 = smul.addr %s478, 8
      %s480 = scalar_lea.vmem %s11, %s479
      %p482 = scmp.eq.s32.totalorder %s27, 0
      // Predicated region
      $region65: #{_lambda_.4} parent=63 // pred_check
        %p483 = pneg %p482
      $region66: #{_lambda_.4} parent=63 // pred_check_branch
        %485 = sbr.rel (%p483) target = $region68
      $region67: #{_lambda_.4} parent=63 // pred_region
        %vm486 = vcmask 64512
        %487 = vst.msk [vmem:[#allocation2] sm:$0xff] %vm486, 0.0
        %488 = vst.msk [vmem:[#allocation2 + $0x8] sm:$0xff] %vm486, 0.0
      $region68: #{_lambda_.4} parent=63 // pred_fallthru
        _
      %v489 = vld [vmem:[%s464] sm:$0xff]
      %v490 = vld [vmem:[%s464 + $0x8] sm:$0xff]
      %v491 = vld [vmem:[%s456] sm:$0xff]
      %v492 = vld [vmem:[%s456 + $0x8] sm:$0xff]
      %494 = vset.pattern.permute.xlu0 0
      %495 = vperm.xlu0 %494, %v489
      %v496 = vpop.permute.xlu0 %495
      %499 = vset.pattern.permute.xlu0 0
      %500 = vperm.xlu0 %499, %v490
      %v501 = vpop.permute.xlu0 %500
      %v503 = vmul.f32 %v491, %v496
      %v504 = vmul.f32 %v492, %v501
      %v505 = vpack.c.bf16 %v504, %v503
      %v506 = vld [vmem:[%s468] sm:$0xf]
      %v507 = vld [vmem:[%s471] sm:$0x1]
      %v509 = vlaneseq
      %v510 = vshrl.u32 %v509, 7
      %v511 = vsub.s32 0, %v510
      %v512 = vrot.slane %v507, %v511
      %vm514 = vcmask 64512
      %v516 = vsel %vm514, %v505, 0
      %vm518 = vcmask 1043456
      %v520 = vsel %vm518, %v506, 0
      %522 = vmatprep.subr.bf16.mxu0 0
      %523 = vmatpush1.bf16.msra.mxu0 %v520
      %524 = vmatprep.subr.bf16.mxu0 0
      %525 = vmatpush1.bf16.msra.mxu0 0
      %526 = vmatprep.subr.bf16.mxu0 0
      %527 = vmatpush1.bf16.msra.mxu0 0
      %528 = vmatprep.subr.bf16.mxu0 0
      %529 = vmatpush1.bf16.msra.mxu0 0
      %530 = vmatprep.subr.bf16.mxu0 0
      %531 = vmatpush1.bf16.msra.mxu0 0
      %532 = vmatprep.subr.bf16.mxu0 0
      %533 = vmatpush1.bf16.msra.mxu0 0
      %534 = vmatprep.subr.bf16.mxu0 0
      %535 = vmatpush1.bf16.msra.mxu0 0
      %536 = vmatprep.subr.bf16.mxu0 0
      %537 = vmatpush1.bf16.msra.mxu0 0
      %538 = vmatprep.subr.bf16.mxu0 0
      %539 = vmatpush1.bf16.msra.mxu0 0
      %540 = vmatprep.subr.bf16.mxu0 0
      %541 = vmatpush1.bf16.msra.mxu0 0
      %542 = vmatprep.subr.bf16.mxu0 0
      %543 = vmatpush1.bf16.msra.mxu0 0
      %544 = vmatprep.subr.bf16.mxu0 0
      %545 = vmatpush1.bf16.msra.mxu0 0
      %546 = vmatprep.subr.bf16.mxu0 0
      %547 = vmatpush1.bf16.msra.mxu0 0
      %548 = vmatprep.subr.bf16.mxu0 0
      %549 = vmatpush1.bf16.msra.mxu0 0
      %550 = vmatprep.subr.bf16.mxu0 0
      %551 = vmatpush1.bf16.msra.mxu0 0
      %552 = vmatprep.subr.bf16.mxu0 0
      %553 = vmatpush1.bf16.msra.mxu0 0
      %554 = vmatprep.mubr.bf16.mxu0 0
      %555 = vmatmul.mubr.bf16.gmra.mrb[0].mxu0 %v516
      %v556 = vpop.f32.mrb[0].mxu0
      %v557 = vadd.f32 %v512, %v556
      %v558 = vpop.f32.mrb[0].mxu0
      %v559 = vpop.f32.mrb[0].mxu0
      %v560 = vadd.f32 %v512, %v559
      %v561 = vpop.f32.mrb[0].mxu0
      %562 = vdwg.mxu0
      %v563 = vmul.f32 %v557, 0.5
      %v564 = vmul.f32 %v560, 0.5
      %v565 = vpack.c.bf16 %v564, %v563
      %v566 = vpack.c.bf16 %v560, %v557
      %v567 = vld [vmem:[%s7] sm:$0xf]
      %v568 = vld [vmem:[%s7 + $0x4] sm:$0x1]
      %v571 = vunpack.c.l.b16 %v567
      %v572 = vunpack.c.l.b16 %v568
      %v573 = vpack.c.b16 %v572, %v571
      %574 = vrot.lane.b32.xlu0 %v573, 4
      %v575 = vpop.permute.xlu0 %574
      %577 = vrot.lane.b32.xlu0 %v566, 124
      %v578 = vpop.permute.xlu0 %577
      %579 = vrot.lane.b32.xlu0 %v575, 124
      %v580 = vpop.permute.xlu0 %579
      %vm581 = vcmask 31744
      %v583 = vsel %vm581, %v565, 0
      %v586 = vsel %vm581, %v578, 0
      %v589 = vsel %vm581, %v580, 0
      %591 = vmatprep.subr.bf16.mxu0 0
      %592 = vmatpush1.bf16.xpose.msra.mxu0 %v586
      %593 = vmatprep.subr.bf16.mxu0 0
      %594 = vmatpush1.bf16.xpose.msra.mxu0 %v589
      %595 = vmatprep.subr.bf16.mxu0 0
      %596 = vmatpush1.bf16.xpose.msra.mxu0 0
      %597 = vmatprep.subr.bf16.mxu0 0
      %598 = vmatpush1.bf16.xpose.msra.mxu0 0
      %599 = vmatprep.subr.bf16.mxu0 0
      %600 = vmatpush1.bf16.xpose.msra.mxu0 0
      %601 = vmatprep.subr.bf16.mxu0 0
      %602 = vmatpush1.bf16.xpose.msra.mxu0 0
      %603 = vmatprep.subr.bf16.mxu0 0
      %604 = vmatpush1.bf16.xpose.msra.mxu0 0
      %605 = vmatprep.subr.bf16.mxu0 0
      %606 = vmatpush1.bf16.xpose.msra.mxu0 0
      %607 = vmatprep.subr.bf16.mxu0 0
      %608 = vmatpush1.bf16.xpose.msra.mxu0 0
      %609 = vmatprep.subr.bf16.mxu0 0
      %610 = vmatpush1.bf16.xpose.msra.mxu0 0
      %611 = vmatprep.subr.bf16.mxu0 0
      %612 = vmatpush1.bf16.xpose.msra.mxu0 0
      %613 = vmatprep.subr.bf16.mxu0 0
      %614 = vmatpush1.bf16.xpose.msra.mxu0 0
      %615 = vmatprep.subr.bf16.mxu0 0
      %616 = vmatpush1.bf16.xpose.msra.mxu0 0
      %617 = vmatprep.subr.bf16.mxu0 0
      %618 = vmatpush1.bf16.xpose.msra.mxu0 0
      %619 = vmatprep.subr.bf16.mxu0 0
      %620 = vmatpush1.bf16.xpose.msra.mxu0 0
      %621 = vmatprep.subr.bf16.mxu0 0
      %622 = vmatpush1.bf16.xpose.msra.mxu0 0
      %623 = vmatprep.mubr.bf16.mxu0 0
      %624 = vmatmul.mubr.bf16.gmra.mrb[0].mxu0 %v583
      %v625 = vpop.f32.mrb[0].mxu0
      %v626 = vadd.f32 0.0, %v625
      %v627 = vpop.f32.mrb[0].mxu0
      %v628 = vpop.f32.mrb[0].mxu0
      %v629 = vadd.f32 0.0, %v628
      %v630 = vpop.f32.mrb[0].mxu0
      %631 = vdwg.mxu0
      %v632 = vlaneseq
      %v633 = vshrl.u32 %v632, 7
      %v634 = vadd.s32 %v633, 8
      %v635 = vlaneseq
      %v636 = vand.u32 %v635, 127
      %v637 = vsub.s32 %v636, %v633
      %v638 = vsub.s32 %v636, %v634
      %vm639 = vcmp.eq.s32.totalorder %v637, 4294967292
      %vm640 = vcmp.eq.s32.totalorder %v638, 4294967292
      %642 = vset.pattern.permute.xlu0 16
      %643 = vperm.xlu0 %642, %v626
      %v644 = vpop.permute.xlu0 %643
      %647 = vset.pattern.permute.xlu0 16
      %648 = vperm.xlu0 %647, %v629
      %v649 = vpop.permute.xlu0 %648
      %v651 = vsel %vm639, %v644, 0.0
      %v652 = vsel %vm640, %v649, 0.0
      %v653 = vadd.f32 %v626, %v651
      %v654 = vadd.f32 %v629, %v652
      %vm655 = vcmp.eq.s32.totalorder %v637, 4294967293
      %vm656 = vcmp.eq.s32.totalorder %v638, 4294967293
      %657 = vset.pattern.permute.xlu0 17
      %658 = vperm.xlu0 %657, %v626
      %v659 = vpop.permute.xlu0 %658
      %661 = vset.pattern.permute.xlu0 17
      %662 = vperm.xlu0 %661, %v629
      %v663 = vpop.permute.xlu0 %662
      %v665 = vsel %vm655, %v659, 0.0
      %v666 = vsel %vm656, %v663, 0.0
      %v667 = vadd.f32 %v653, %v665
      %v668 = vadd.f32 %v654, %v666
      %vm669 = vcmp.eq.s32.totalorder %v637, 4294967294
      %vm670 = vcmp.eq.s32.totalorder %v638, 4294967294
      %671 = vset.pattern.permute.xlu0 18
      %672 = vperm.xlu0 %671, %v626
      %v673 = vpop.permute.xlu0 %672
      %675 = vset.pattern.permute.xlu0 18
      %676 = vperm.xlu0 %675, %v629
      %v677 = vpop.permute.xlu0 %676
      %v679 = vsel %vm669, %v673, 0.0
      %v680 = vsel %vm670, %v677, 0.0
      %v681 = vadd.f32 %v667, %v679
      %v682 = vadd.f32 %v668, %v680
      %vm683 = vcmp.eq.s32.totalorder %v637, 4294967295
      %vm684 = vcmp.eq.s32.totalorder %v638, 4294967295
      %685 = vset.pattern.permute.xlu0 19
      %686 = vperm.xlu0 %685, %v626
      %v687 = vpop.permute.xlu0 %686
      %689 = vset.pattern.permute.xlu0 19
      %690 = vperm.xlu0 %689, %v629
      %v691 = vpop.permute.xlu0 %690
      %v693 = vsel %vm683, %v687, 0.0
      %v694 = vsel %vm684, %v691, 0.0
      %v695 = vadd.f32 %v681, %v693
      %v696 = vadd.f32 %v682, %v694
      %vm697 = vcmp.eq.s32.totalorder %v637, 0
      %vm698 = vcmp.eq.s32.totalorder %v638, 0
      %699 = vset.pattern.permute.xlu0 20
      %700 = vperm.xlu0 %699, %v626
      %v701 = vpop.permute.xlu0 %700
      %703 = vset.pattern.permute.xlu0 20
      %704 = vperm.xlu0 %703, %v629
      %v705 = vpop.permute.xlu0 %704
      %v707 = vsel %vm697, %v701, 0.0
      %v708 = vsel %vm698, %v705, 0.0
      %v709 = vadd.f32 %v695, %v707
      %v710 = vadd.f32 %v696, %v708
      %vm711 = vcmp.eq.s32.totalorder %v637, 1
      %vm712 = vcmp.eq.s32.totalorder %v638, 1
      %713 = vset.pattern.permute.xlu0 21
      %714 = vperm.xlu0 %713, %v626
      %v715 = vpop.permute.xlu0 %714
      %717 = vset.pattern.permute.xlu0 21
      %718 = vperm.xlu0 %717, %v629
      %v719 = vpop.permute.xlu0 %718
      %v721 = vsel %vm711, %v715, 0.0
      %v722 = vsel %vm712, %v719, 0.0
      %v723 = vadd.f32 %v709, %v721
      %v724 = vadd.f32 %v710, %v722
      %vm725 = vcmp.eq.s32.totalorder %v637, 2
      %vm726 = vcmp.eq.s32.totalorder %v638, 2
      %727 = vset.pattern.permute.xlu0 22
      %728 = vperm.xlu0 %727, %v626
      %v729 = vpop.permute.xlu0 %728
      %731 = vset.pattern.permute.xlu0 22
      %732 = vperm.xlu0 %731, %v629
      %v733 = vpop.permute.xlu0 %732
      %v735 = vsel %vm725, %v729, 0.0
      %v736 = vsel %vm726, %v733, 0.0
      %v737 = vadd.f32 %v723, %v735
      %v738 = vadd.f32 %v724, %v736
      %vm739 = vcmp.eq.s32.totalorder %v637, 3
      %vm740 = vcmp.eq.s32.totalorder %v638, 3
      %741 = vset.pattern.permute.xlu0 23
      %742 = vperm.xlu0 %741, %v626
      %v743 = vpop.permute.xlu0 %742
      %745 = vset.pattern.permute.xlu0 23
      %746 = vperm.xlu0 %745, %v629
      %v747 = vpop.permute.xlu0 %746
      %v749 = vsel %vm739, %v743, 0.0
      %v750 = vsel %vm740, %v747, 0.0
      %v751 = vadd.f32 %v737, %v749
      %v752 = vadd.f32 %v738, %v750
      %vm753 = vcmp.eq.s32.totalorder %v637, 4
      %vm754 = vcmp.eq.s32.totalorder %v638, 4
      %755 = vset.pattern.permute.xlu0 24
      %756 = vperm.xlu0 %755, %v626
      %v757 = vpop.permute.xlu0 %756
      %759 = vset.pattern.permute.xlu0 24
      %760 = vperm.xlu0 %759, %v629
      %v761 = vpop.permute.xlu0 %760
      %v763 = vsel %vm753, %v757, 0.0
      %v764 = vsel %vm754, %v761, 0.0
      %v765 = vadd.f32 %v751, %v763
      %v766 = vadd.f32 %v752, %v764
      %v767 = vld [vmem:[%s459] sm:$0x1]
      %vm768 = vcmp.eq.f32.partialorder %v767, 0.0
      %v769 = vsel %vm768, 1, 0
      %v770 = vlaneseq
      %v771 = vshrl.u32 %v770, 7
      %v772 = vsub.s32 0, %v771
      %v773 = vrot.slane %v769, %v772
      %vm774 = vcmp.eq.s32.totalorder %v773, 1
      %v775 = vsel %vm774, -10000.0, %v765
      %v776 = vsel %vm774, -10000.0, %v766
      %vm777 = vcmask 130048
      %v778 = vsel %vm777, %v775, -inf
      %779 = vmax.xlane.f32.xlu0 %v778
      %v780 = vpop.xlane.xlu0 %779
      %v781 = vsel %vm777, %v776, -inf
      %782 = vmax.xlane.f32.xlu0 %v781
      %v783 = vpop.xlane.xlu0 %782
      %v784 = vsub.f32 %v775, %v780
      %v785 = vsub.f32 %v776, %v783
      %v786 = vmul.f32 %v784, 1.442695
      %v787 = vpow.pop %v786
      %v788 = vmul.f32 %v785, 1.442695
      %v789 = vpow.pop %v788
      %v790 = vsel %vm777, %v787, 0.0
      %791 = vadd.xlane.f32.xlu0 %v790
      %v792 = vpop.xlane.xlu0 %791
      %v793 = vsel %vm777, %v789, 0.0
      %794 = vadd.xlane.f32.xlu0 %v793
      %v795 = vpop.xlane.xlu0 %794
      %v796 = vrcp.pop %v792
      %v797 = vrcp.pop %v795
      %v798 = vmul.f32 %v787, %v796
      %v799 = vmul.f32 %v789, %v797
      %v800 = vsel %vm639, %v798, 0.0
      %v801 = vsel %vm640, %v799, 0.0
      %v802 = vsel %vm777, %v800, 0.0
      %803 = vadd.xlane.f32.xlu0 %v802
      %v804 = vpop.xlane.xlu0 %803
      %v805 = vsel %vm777, %v801, 0.0
      %806 = vadd.xlane.f32.xlu0 %v805
      %v807 = vpop.xlane.xlu0 %806
      %v808 = vsel %vm655, %v798, 0.0
      %v809 = vsel %vm656, %v799, 0.0
      %v810 = vsel %vm777, %v808, 0.0
      %811 = vadd.xlane.f32.xlu0 %v810
      %v812 = vpop.xlane.xlu0 %811
      %v813 = vsel %vm777, %v809, 0.0
      %814 = vadd.xlane.f32.xlu0 %v813
      %v815 = vpop.xlane.xlu0 %814
      %v816 = vsel %vm669, %v798, 0.0
      %v817 = vsel %vm670, %v799, 0.0
      %v818 = vsel %vm777, %v816, 0.0
      %819 = vadd.xlane.f32.xlu0 %v818
      %v820 = vpop.xlane.xlu0 %819
      %v821 = vsel %vm777, %v817, 0.0
      %822 = vadd.xlane.f32.xlu0 %v821
      %v823 = vpop.xlane.xlu0 %822
      %v824 = vsel %vm683, %v798, 0.0
      %v825 = vsel %vm684, %v799, 0.0
      %v826 = vsel %vm777, %v824, 0.0
      %827 = vadd.xlane.f32.xlu0 %v826
      %v828 = vpop.xlane.xlu0 %827
      %v829 = vsel %vm777, %v825, 0.0
      %830 = vadd.xlane.f32.xlu0 %v829
      %v831 = vpop.xlane.xlu0 %830
      %v832 = vsel %vm697, %v798, 0.0
      %v833 = vsel %vm698, %v799, 0.0
      %v834 = vsel %vm777, %v832, 0.0
      %835 = vadd.xlane.f32.xlu0 %v834
      %v836 = vpop.xlane.xlu0 %835
      %v837 = vsel %vm777, %v833, 0.0
      %838 = vadd.xlane.f32.xlu0 %v837
      %v839 = vpop.xlane.xlu0 %838
      %v840 = vsel %vm711, %v798, 0.0
      %v841 = vsel %vm712, %v799, 0.0
      %v842 = vsel %vm777, %v840, 0.0
      %843 = vadd.xlane.f32.xlu0 %v842
      %v844 = vpop.xlane.xlu0 %843
      %v845 = vsel %vm777, %v841, 0.0
      %846 = vadd.xlane.f32.xlu0 %v845
      %v847 = vpop.xlane.xlu0 %846
      %v848 = vsel %vm725, %v798, 0.0
      %v849 = vsel %vm726, %v799, 0.0
      %v850 = vsel %vm777, %v848, 0.0
      %851 = vadd.xlane.f32.xlu0 %v850
      %v852 = vpop.xlane.xlu0 %851
      %v853 = vsel %vm777, %v849, 0.0
      %854 = vadd.xlane.f32.xlu0 %v853
      %v855 = vpop.xlane.xlu0 %854
      %v856 = vsel %vm739, %v798, 0.0
      %v857 = vsel %vm740, %v799, 0.0
      %v858 = vsel %vm777, %v856, 0.0
      %859 = vadd.xlane.f32.xlu0 %v858
      %v860 = vpop.xlane.xlu0 %859
      %v861 = vsel %vm777, %v857, 0.0
      %862 = vadd.xlane.f32.xlu0 %v861
      %v863 = vpop.xlane.xlu0 %862
      %v864 = vsel %vm753, %v798, 0.0
      %v865 = vsel %vm754, %v799, 0.0
      %v866 = vsel %vm777, %v864, 0.0
      %867 = vadd.xlane.f32.xlu0 %v866
      %v868 = vpop.xlane.xlu0 %867
      %v869 = vsel %vm777, %v865, 0.0
      %870 = vadd.xlane.f32.xlu0 %v869
      %v871 = vpop.xlane.xlu0 %870
      %vm872 = vcmask 7168
      %v873 = vsel %vm872, %v804, %v812
      %v874 = vsel %vm872, %v807, %v815
      %vm875 = vcmask 15360
      %v876 = vsel %vm875, %v873, %v820
      %v877 = vsel %vm875, %v874, %v823
      %vm878 = vcmask 23552
      %v879 = vsel %vm878, %v876, %v828
      %v880 = vsel %vm878, %v877, %v831
      %v881 = vsel %vm581, %v879, %v836
      %v882 = vsel %vm581, %v880, %v839
      %vm883 = vcmask 39936
      %v884 = vsel %vm883, %v881, %v844
      %v885 = vsel %vm883, %v882, %v847
      %vm886 = vcmask 48128
      %v887 = vsel %vm886, %v884, %v852
      %v888 = vsel %vm886, %v885, %v855
      %vm889 = vcmask 56320
      %v890 = vsel %vm889, %v887, %v860
      %v891 = vsel %vm889, %v888, %v863
      %v892 = vsel %vm514, %v890, %v868
      %v893 = vsel %vm514, %v891, %v871
      %v894 = vpack.c.bf16 %v799, %v798
      %v895 = vpack.c.bf16 %v893, %v892
      %897 = vrot.lane.b32.xlu0 %v895, 16
      %v898 = vpop.permute.xlu0 %897
      %v901 = vsel %vm777, %v894, %v898
      %v902 = vld [vmem:[%s8] sm:$0xf]
      %v903 = vld [vmem:[%s8 + $0x4] sm:$0x1]
      %v906 = vunpack.c.l.b16 %v902
      %v907 = vunpack.c.l.b16 %v903
      %v908 = vpack.c.b16 %v907, %v906
      %909 = vrot.lane.b32.xlu0 %v908, 8
      %v910 = vpop.permute.xlu0 %909
      %911 = vrot.lane.b32.xlu0 %v566, 120
      %v912 = vpop.permute.xlu0 %911
      %913 = vrot.lane.b32.xlu0 %v910, 120
      %v914 = vpop.permute.xlu0 %913
      %vm916 = vcmask 203776
      %v917 = vsel %vm916, %v901, 0
      %vm919 = vcmask 1044480
      %v920 = vsel %vm518, 4294967295, 65535
      %v921 = vsel %vm919, %v920, 0
      %v923 = vand.u32 %v914, %v921
      %925 = vmatprep.subr.bf16.mxu0 0
      %926 = vmatpush1.bf16.msra.mxu0 %v912
      %927 = vmatprep.subr.bf16.mxu0 0
      %928 = vmatpush1.bf16.msra.mxu0 %v923
      %929 = vmatprep.subr.bf16.mxu0 0
      %930 = vmatpush1.bf16.msra.mxu0 0
      %931 = vmatprep.subr.bf16.mxu0 0
      %932 = vmatpush1.bf16.msra.mxu0 0
      %933 = vmatprep.subr.bf16.mxu0 0
      %934 = vmatpush1.bf16.msra.mxu0 0
      %935 = vmatprep.subr.bf16.mxu0 0
      %936 = vmatpush1.bf16.msra.mxu0 0
      %937 = vmatprep.subr.bf16.mxu0 0
      %938 = vmatpush1.bf16.msra.mxu0 0
      %939 = vmatprep.subr.bf16.mxu0 0
      %940 = vmatpush1.bf16.msra.mxu0 0
      %941 = vmatprep.subr.bf16.mxu0 0
      %942 = vmatpush1.bf16.msra.mxu0 0
      %943 = vmatprep.subr.bf16.mxu0 0
      %944 = vmatpush1.bf16.msra.mxu0 0
      %945 = vmatprep.subr.bf16.mxu0 0
      %946 = vmatpush1.bf16.msra.mxu0 0
      %947 = vmatprep.subr.bf16.mxu0 0
      %948 = vmatpush1.bf16.msra.mxu0 0
      %949 = vmatprep.subr.bf16.mxu0 0
      %950 = vmatpush1.bf16.msra.mxu0 0
      %951 = vmatprep.subr.bf16.mxu0 0
      %952 = vmatpush1.bf16.msra.mxu0 0
      %953 = vmatprep.subr.bf16.mxu0 0
      %954 = vmatpush1.bf16.msra.mxu0 0
      %955 = vmatprep.subr.bf16.mxu0 0
      %956 = vmatpush1.bf16.msra.mxu0 0
      %957 = vmatprep.mubr.bf16.mxu0 0
      %958 = vmatmul.mubr.bf16.gmra.mrb[0].mxu0 %v917
      %v959 = vpop.f32.mrb[0].mxu0
      %v960 = vadd.f32 0.0, %v959
      %v961 = vpop.f32.mrb[0].mxu0
      %v962 = vpop.f32.mrb[0].mxu0
      %v963 = vadd.f32 0.0, %v962
      %v964 = vpop.f32.mrb[0].mxu0
      %965 = vdwg.mxu0
      %v966 = vld [vmem:[#allocation2] sm:$0xff]
      %v967 = vld [vmem:[#allocation2 + $0x8] sm:$0xff]
      %v968 = vpack.c.bf16 %v963, %v960
      %v969 = vld [vmem:[%s475] sm:$0x3]
      %v971 = vsel %vm581, %v968, 0
      %vm973 = vcmask 1041408
      %v975 = vsel %vm973, %v969, 0
      %977 = vmatprep.subr.bf16.mxu0 0
      %978 = vmatpush1.bf16.msra.mxu0 %v975
      %979 = vmatprep.subr.bf16.mxu0 0
      %980 = vmatpush1.bf16.msra.mxu0 0
      %981 = vmatprep.subr.bf16.mxu0 0
      %982 = vmatpush1.bf16.msra.mxu0 0
      %983 = vmatprep.subr.bf16.mxu0 0
      %984 = vmatpush1.bf16.msra.mxu0 0
      %985 = vmatprep.subr.bf16.mxu0 0
      %986 = vmatpush1.bf16.msra.mxu0 0
      %987 = vmatprep.subr.bf16.mxu0 0
      %988 = vmatpush1.bf16.msra.mxu0 0
      %989 = vmatprep.subr.bf16.mxu0 0
      %990 = vmatpush1.bf16.msra.mxu0 0
      %991 = vmatprep.subr.bf16.mxu0 0
      %992 = vmatpush1.bf16.msra.mxu0 0
      %993 = vmatprep.subr.bf16.mxu0 0
      %994 = vmatpush1.bf16.msra.mxu0 0
      %995 = vmatprep.subr.bf16.mxu0 0
      %996 = vmatpush1.bf16.msra.mxu0 0
      %997 = vmatprep.subr.bf16.mxu0 0
      %998 = vmatpush1.bf16.msra.mxu0 0
      %999 = vmatprep.subr.bf16.mxu0 0
      %1000 = vmatpush1.bf16.msra.mxu0 0
      %1001 = vmatprep.subr.bf16.mxu0 0
      %1002 = vmatpush1.bf16.msra.mxu0 0
      %1003 = vmatprep.subr.bf16.mxu0 0
      %1004 = vmatpush1.bf16.msra.mxu0 0
      %1005 = vmatprep.subr.bf16.mxu0 0
      %1006 = vmatpush1.bf16.msra.mxu0 0
      %1007 = vmatprep.subr.bf16.mxu0 0
      %1008 = vmatpush1.bf16.msra.mxu0 0
      %1009 = vmatprep.mubr.bf16.mxu0 0
      %1010 = vmatmul.mubr.bf16.gmra.mrb[0].mxu0 %v971
      %v1011 = vpop.f32.mrb[0].mxu0
      %v1012 = vadd.f32 0.0, %v1011
      %v1013 = vpop.f32.mrb[0].mxu0
      %v1014 = vpop.f32.mrb[0].mxu0
      %v1015 = vadd.f32 0.0, %v1014
      %v1016 = vpop.f32.mrb[0].mxu0
      %1017 = vdwg.mxu0
      %v1018 = vadd.f32 %v966, %v1012
      %v1019 = vadd.f32 %v967, %v1015
      %1020 = vst.msk [vmem:[#allocation2] sm:$0xff] %vm514, %v1018
      %1021 = vst.msk [vmem:[#allocation2 + $0x8] sm:$0xff] %vm514, %v1019
      %p1022 = scmp.eq.s32.totalorder %s27, 1
      // Predicated region
      $region69: #{_lambda_.4} parent=63 // pred_check
        %p1023 = pneg %p1022
      $region70: #{_lambda_.4} parent=63 // pred_check_branch
        %1025 = sbr.rel (%p1023) target = $region72
      $region71: #{_lambda_.4} parent=63 // pred_region
        %v1026 = vld [vmem:[#allocation2] sm:$0xff]
        %v1027 = vld [vmem:[#allocation2 + $0x8] sm:$0xff]
        %v1028 = vld [vmem:[%s6] sm:$0x1]
        %v1030 = vlaneseq
        %v1031 = vshrl.u32 %v1030, 7
        %v1032 = vsub.s32 0, %v1031
        %v1033 = vrot.slane %v1028, %v1032
        %v1035 = vadd.f32 %v1026, %v1033
        %v1036 = vadd.f32 %v1027, %v1033
        %v1037 = vadd.f32 %v503, %v1035
        %v1038 = vadd.f32 %v504, %v1036
        %v1039 = vsel %vm514, %v1037, 0.0
        %1040 = vadd.xlane.f32.xlu0 %v1039
        %v1041 = vpop.xlane.xlu0 %1040
        %v1042 = vsel %vm514, %v1038, 0.0
        %1043 = vadd.xlane.f32.xlu0 %v1042
        %v1044 = vpop.xlane.xlu0 %1043
        %v1045 = vrcp.pop 8.0
        %v1046 = vmul.f32 %v1041, %v1045
        %v1047 = vmul.f32 %v1044, %v1045
        %v1048 = vsub.f32 %v1037, %v1046
        %v1049 = vsub.f32 %v1038, %v1047
        %v1050 = vmul.f32 %v1048, %v1048
        %v1051 = vmul.f32 %v1049, %v1049
        %v1052 = vsel %vm514, %v1050, 0.0
        %1053 = vadd.xlane.f32.xlu0 %v1052
        %v1054 = vpop.xlane.xlu0 %1053
        %v1055 = vsel %vm514, %v1051, 0.0
        %1056 = vadd.xlane.f32.xlu0 %v1055
        %v1057 = vpop.xlane.xlu0 %1056
        %v1058 = vmul.f32 %v1054, %v1045
        %v1059 = vmul.f32 %v1057, %v1045
        %v1060 = vadd.f32 %v1058, 0.0001
        %v1061 = vadd.f32 %v1059, 0.0001
        %v1062 = vrsqrt.pop %v1060
        %v1063 = vrsqrt.pop %v1061
        %v1064 = vmul.f32 %v1048, %v1062
        %v1065 = vmul.f32 %v1049, %v1063
        %v1066 = vld [vmem:[%s9] sm:$0x1]
        %v1068 = vlaneseq
        %v1069 = vshrl.u32 %v1068, 7
        %v1070 = vsub.s32 0, %v1069
        %v1071 = vrot.slane %v1066, %v1070
        %v1073 = vmul.f32 %v1064, %v1071
        %v1074 = vmul.f32 %v1065, %v1071
        %v1075 = vld [vmem:[%s10] sm:$0x1]
        %v1077 = vlaneseq
        %v1078 = vshrl.u32 %v1077, 7
        %v1079 = vsub.s32 0, %v1078
        %v1080 = vrot.slane %v1075, %v1079
        %v1082 = vadd.f32 %v1073, %v1080
        %v1083 = vadd.f32 %v1074, %v1080
        %v1084 = vmul.f32 %v1082, %v496
        %v1085 = vmul.f32 %v1083, %v501
        %1086 = vst.msk [vmem:[%s480] sm:$0xff] %vm514, %v1084
        %1087 = vst.msk [vmem:[%s480 + $0x8] sm:$0xff] %vm514, %v1085
      $region72: #{_lambda_.4} parent=63 // pred_fallthru
        _
      %p1088 = scmp.lt.s32.totalorder %s26, 1
      %s1089 = scalar_select %p1088, %s26, 1
      %s1090 = smul.addr %s1089, 2
      %s1091 = smul.addr %s1090, 8
      %s1092 = scalar_lea.vmem %s11, %s1091
      // Predicated region
      $region73: #{_lambda_.4} parent=63 // pred_check
        %p1093 = pneg %p313
      $region74: #{_lambda_.4} parent=63 // pred_check_branch
        %1095 = sbr.rel (%p1093) target = $region76
      $region75: #{_lambda_.4} parent=63 // pred_region
        _
      $region76: #{_lambda_.4} parent=63 // pred_fallthru
        _
    $region64: #{_lambda_.4} parent=5 // pred_fallthru
      _
    %p1096 = scmp.le.s32.totalorder 2, %s17
    // Predicated region
    $region77: #{_lambda_.4} parent=5 // pred_check
      %p1097 = pneg %p1096
    $region78: #{_lambda_.4} parent=5 // pred_check_branch
      %1099 = sbr.rel (%p1097) target = $region80
    $region79: #{_lambda_.4} parent=5 // pred_region
      %s1100 = ssub.s32 %s17, 2
      // Predicated region
      $region81: #{_lambda_.4} parent=79 // pred_check
        %p1101 = pneg %p319
      $region82: #{_lambda_.4} parent=79 // pred_check_branch
        %1103 = sbr.rel (%p1101) target = $region84
      $region83: #{_lambda_.4} parent=79 // pred_region
        %p1104 = scmp.lt.s32.totalorder %s28, 1
        %s1105 = scalar_select %p1104, %s28, 1
        %s1106 = smul.addr %s1105, 2
        %s1107 = smul.addr %s1106, 8
        %s1108 = scalar_lea.vmem %s11, %s1107
      $region84: #{_lambda_.4} parent=79 // pred_fallthru
        _
    $region80: #{_lambda_.4} parent=5 // pred_fallthru
      _
  $region6: #{_lambda_.4} parent=0 // loop_footer
    %s21 = sadd.s32 1, %s17
  $region7: #{_lambda_.4} parent=0 // loop_footer_branch
    %16 = sbr.rel target = $region3
  $region8: #{_lambda_.4} parent=0 // loop_exit
    _

</llo_original>
